<compile_context>
chip_gen: v7x
topology: tpu7x:2x2x1
jax: 0.10.0
libtpu: 0.0.40
codegen_flags: <defaults>
</compile_context>

<pallas_src>
import functools

import jax
import jax.numpy as jnp
from jax.experimental import pallas as pl
from jax.experimental.pallas import tpu as pltpu


def _round_up(x, m):
    return ((x + m - 1) // m) * m


def _pick_time_chunk(T, window, cap):
    """Return (chunk_T, W). chunk_T is a multiple of W and <= cap (unless T itself is tiny),
    chosen to minimise padded timesteps; padded steps are masked in-kernel, so any choice is
    numerically correct. Ties prefer the larger chunk (fewer grid steps)."""
    if T <= window:
        return T, T
    cap = max(window, (cap // window) * window)
    best_c, best_pad = window, (-T) % window
    for c in range(window, cap + 1, window):
        pad = (-T) % c
        if pad < best_pad or (pad == best_pad and c > best_c):
            best_c, best_pad = c, pad
    return best_c, window


def _reorder_pad_gates(w, H, Hp):
    """(K, 4H) in PyTorch gate order [i, f, g, o] -> (K, 4Hp) in [i, f, o, g] order with each gate
    zero-padded to Hp columns (contiguous sigmoid block + lane-aligned slices)."""
    i, f, g, o = w[:, 0:H], w[:, H:2 * H], w[:, 2 * H:3 * H], w[:, 3 * H:4 * H]
    pad = ((0, 0), (0, Hp - H))
    return jnp.concatenate(
        [jnp.pad(i, pad), jnp.pad(f, pad), jnp.pad(o, pad), jnp.pad(g, pad)], axis=1)


def lstm_classifier_kernel(x_ref, wih0_ref, b0_ref, whh0_ref, w1_ref, b1_ref,
                           wfc_ref, bfc_ref, out_ref, h_ref, c_ref,
                           *, compute_dtype, window, t_actual, need_mask):
    tc_idx = pl.program_id(1)                 # time-chunk axis ("arbitrary"; carries h/c state)
    cT, nB, I = x_ref.shape
    Hp = whh0_ref.shape[0]
    cdt = compute_dtype
    W = window
    n_win = cT // W

    @pl.when(tc_idx == 0)
    def _init():
        h_ref[...] = jnp.zeros_like(h_ref)
        c_ref[...] = jnp.zeros_like(c_ref)

    # invariant operands: loaded once per chunk, already in compute dtype (pre-cast in the wrapper)
    wih0 = wih0_ref[...]                                   # (I, 4Hp)
    whh0 = whh0_ref[...]                                   # (Hp, 4Hp)
    w1 = w1_ref[...]                                       # (2Hp, 4Hp) = [W_ih1; W_hh1]
    b0 = b0_ref[...]                                       # (1, 4Hp) f32, folded into projection
    b1b = jnp.broadcast_to(b1_ref[...], (nB, 4 * Hp))      # hoisted broadcast, reused every step

    def cell(gates, c_old):
        # gate layout after wrapper reorder: [i | f | o] (sigmoid, 3Hp) ++ [g] (tanh, Hp)
        s = jax.nn.sigmoid(gates[:, :3 * Hp])
        g = jnp.tanh(gates[:, 3 * Hp:])
        c_new = s[:, Hp:2 * Hp] * c_old + s[:, :Hp] * g
        h_new = s[:, 2 * Hp:] * jnp.tanh(c_new)
        return h_new, c_new

    def step(xp_t, valid):
        # ---- layer 0: precomputed input projection + a single recurrent matmul ----
        h1_old = h_ref[:, :Hp]
        c1_old = c_ref[:, :Hp]
        g0 = xp_t + jnp.dot(h1_old.astype(cdt), whh0, preferred_element_type=jnp.float32)
        h1, c1 = cell(g0, c1_old)
        if valid is not None:                               # masked (padded) timestep: keep state
            h1 = jnp.where(valid, h1, h1_old)
            c1 = jnp.where(valid, c1, c1_old)
        h_ref[:, :Hp] = h1
        c_ref[:, :Hp] = c1

        # ---- layer 1: fused [h1_new | h2_old] matmul straight off the state slab (no concat) ----
        hcat = h_ref[...]                                   # (nB, 2Hp) == [h1_new | h2_old]
        h2_old = hcat[:, Hp:]
        c2_old = c_ref[:, Hp:]
        g1 = jnp.dot(hcat.astype(cdt), w1, preferred_element_type=jnp.float32) + b1b
        h2, c2 = cell(g1, c2_old)
        if valid is not None:
            h2 = jnp.where(valid, h2, h2_old)
            c2 = jnp.where(valid, c2, c2_old)
        h_ref[:, Hp:] = h2
        c_ref[:, Hp:] = c2

    @pl.loop(0, n_win)
    def _window(wi):
        t0 = pl.multiple_of(wi * W, W)
        # time-major layout -> leading-axis window slice (no per-step cross-sublane relayout)
        xw = x_ref[pl.ds(t0, W)]                            # (W, nB, I)
        xp = (jnp.dot(xw.reshape(W * nB, I), wih0, preferred_element_type=jnp.float32)
              + b0).reshape(W, nB, 4 * Hp)                  # bias folded in; f32; bounded live size
        for tl in range(W):                                 # short static unroll inside the window
            valid = (tc_idx * cT + t0 + tl) < t_actual if need_mask else None
            step(xp[tl], valid)

    @pl.when(tc_idx == pl.num_programs(1) - 1)
    def _finalize():
        # fc(output[:, -1, :]) with out_features == 1: VPU multiply + lane reduce, then sigmoid.
        h2 = h_ref[:, Hp:]
        logits = jnp.sum(h2 * wfc_ref[...], axis=-1, keepdims=True) + bfc_ref[...]
        out_ref[...] = jnp.broadcast_to(jax.nn.sigmoid(logits), out_ref.shape)


def lstm_classifier_forward(x, params, *, compute_dtype=jnp.float32,
                            max_block_b=128, time_chunk_cap=32, window=8,
                            vmem_limit_bytes=48 * 1024 * 1024):
    """x: (B, T, I) batch-first f32. Returns (B, 1) sigmoid probabilities (PyTorch eval semantics)."""
    B, T, I = x.shape
    H = params["whh0"].shape[0]
    Hp = _round_up(H, 128)            # pad hidden to a lane multiple -> free gate slices, full MXU
    cdt = jnp.dtype(compute_dtype)
    is_bf16 = cdt == jnp.dtype(jnp.bfloat16)

    # --- batch tiling: sublane-aligned; prefer >=2 blocks when it adds no padding (v7x: 2 TCs) ---
    sub = 16 if is_bf16 else 8
    block_b = min(_round_up(B, sub), max(sub, (max_block_b // sub) * sub))
    if B <= block_b and block_b >= 2 * sub:
        half = _round_up((block_b + 1) // 2, sub)
        if _round_up(B, half) <= _round_up(B, block_b):
            block_b = half
    B_pad = _round_up(B, block_b)

    # --- time tiling: chunk is a multiple of the projection window; awkward T is padded+masked ---
    chunk_T, W = _pick_time_chunk(T, window, time_chunk_cap)
    T_pad = _round_up(T, chunk_T)
    need_mask = T_pad != T
    grid = (B_pad // block_b, T_pad // chunk_T)

    # --- one wrapper-side transpose to time-major; bf16 stream option halves x HBM traffic ---
    x_dtype = jnp.bfloat16 if is_bf16 else jnp.float32
    xt = jnp.transpose(x.astype(x_dtype), (1, 0, 2))                        # (T, B, I)
    xt = jnp.pad(xt, ((0, T_pad - T), (0, B_pad - B), (0, 0)))

    # --- weight prep: gate reorder [i,f,o,g], zero-pad H->Hp, fuse layer-1 weights, pre-cast ---
    f32 = jnp.float32
    wih0 = _reorder_pad_gates(params["wih0"].astype(f32), H, Hp)                     # (I, 4Hp)
    whh0 = jnp.pad(_reorder_pad_gates(params["whh0"].astype(f32), H, Hp),
                   ((0, Hp - H), (0, 0)))                                            # (Hp, 4Hp)
    wih1 = jnp.pad(_reorder_pad_gates(params["wih1"].astype(f32), H, Hp), ((0, Hp - H), (0, 0)))
    whh1 = jnp.pad(_reorder_pad_gates(params["whh1"].astype(f32), H, Hp), ((0, Hp - H), (0, 0)))
    w1cat = jnp.concatenate([wih1, whh1], axis=0)                                    # (2Hp, 4Hp)
    b0 = _reorder_pad_gates(params["b0"].astype(f32), H, Hp)                         # (1, 4Hp)
    b1 = _reorder_pad_gates(params["b1"].astype(f32), H, Hp)                         # (1, 4Hp)
    wfc_row = jnp.pad(params["wfc"].astype(f32).reshape(1, H), ((0, 0), (0, Hp - H)))
    bfc = params["bfc"].astype(f32).reshape(1, 1)

    # MXU operands in compute dtype (no per-chunk casts in the kernel); biases stay f32
    wih0 = wih0.astype(cdt)
    whh0 = whh0.astype(cdt)
    w1cat = w1cat.astype(cdt)

    kernel = functools.partial(lstm_classifier_kernel, compute_dtype=cdt, window=W,
                               t_actual=T, need_mask=need_mask)

    def _wspec(shape):
        # loop-invariant operand: DMA'd once, single-buffered (no wasted second VMEM buffer)
        return pl.BlockSpec(shape, lambda b, t: (0,) * len(shape),
                            pipeline_mode=pl.Buffered(1))

    out = pl.pallas_call(
        kernel,
        out_shape=jax.ShapeDtypeStruct((B_pad, 128), jnp.float32),
        grid_spec=pltpu.PrefetchScalarGridSpec(
            num_scalar_prefetch=0,
            grid=grid,
            in_specs=[
                pl.BlockSpec((chunk_T, block_b, I), lambda b, t: (t, b, 0)),  # x, time-major stream
                _wspec((I, 4 * Hp)),        # W_ih0 (pre-transposed, gate-reordered, padded)
                _wspec((1, 4 * Hp)),        # b0 = b_ih0 + b_hh0
                _wspec((Hp, 4 * Hp)),       # W_hh0
                _wspec((2 * Hp, 4 * Hp)),   # [W_ih1; W_hh1] fused
                _wspec((1, 4 * Hp)),        # b1 = b_ih1 + b_hh1
                _wspec((1, Hp)),            # fc weight row
                _wspec((1, 1)),             # fc bias
            ],
            out_specs=pl.BlockSpec((block_b, 128), lambda b, t: (b, 0)),      # lane-dense out slab
            scratch_shapes=[pltpu.VMEM((block_b, 2 * Hp), jnp.float32),       # [h1 | h2] state slab
                            pltpu.VMEM((block_b, 2 * Hp), jnp.float32)],      # [c1 | c2] state slab
        ),
        compiler_params=pltpu.CompilerParams(
            dimension_semantics=("parallel", "arbitrary"),   # batch across cores, time serial
            vmem_limit_bytes=vmem_limit_bytes,               # v7x-safe, > v5e's 16 MiB default
        ),
    )(xt, wih0, b0, whh0, w1cat, b1, wfc_row, bfc)

    return out[:B, :1]


def init_params(key, input_size, hidden_size):
    """Deterministic init mimicking PyTorch LSTM's U(-1/sqrt(H), 1/sqrt(H)).
    Weights stored transposed: (in_features, 4H) in PyTorch gate order [i,f,g,o];
    biases b_ih+b_hh pre-summed, shape (1, 4H)."""
    H = hidden_size
    bound = 1.0 / (H ** 0.5)
    ks = jax.random.split(key, 12)

    def u(k_, shape):
        return jax.random.uniform(k_, shape, jnp.float32, -bound, bound)

    return {
        "wih0": u(ks[0], (input_size, 4 * H)),
        "whh0": u(ks[1], (H, 4 * H)),
        "b0":   u(ks[2], (1, 4 * H)) + u(ks[3], (1, 4 * H)),
        "wih1": u(ks[4], (H, 4 * H)),
        "whh1": u(ks[5], (H, 4 * H)),
        "b1":   u(ks[6], (1, 4 * H)) + u(ks[7], (1, 4 * H)),
        "wfc":  u(ks[8], (H, 1)),
        "bfc":  u(ks[9], (1, 1)),
    }


def reference_forward(x, params):
    """Pure-JAX reference (same math as the PyTorch module in eval mode)."""
    H = params["whh0"].shape[0]
    B, T, _ = x.shape

    def cell(xt, h, c, wih, whh, b):
        g = xt @ wih + h @ whh + b
        i = jax.nn.sigmoid(g[:, 0 * H:1 * H])
        f = jax.nn.sigmoid(g[:, 1 * H:2 * H])
        gg = jnp.tanh(g[:, 2 * H:3 * H])
        o = jax.nn.sigmoid(g[:, 3 * H:4 * H])
        c = f * c + i * gg
        h = o * jnp.tanh(c)
        return h, c

    h1 = c1 = h2 = c2 = jnp.zeros((B, H), jnp.float32)
    for t in range(T):
        h1, c1 = cell(x[:, t, :], h1, c1, params["wih0"], params["whh0"], params["b0"])
        h2, c2 = cell(h1, h2, c2, params["wih1"], params["whh1"], params["b1"])
    return jax.nn.sigmoid(h2 @ params["wfc"] + params["bfc"])


if __name__ == "__main__":
    key = jax.random.PRNGKey(0)
    kx, kp, kx2 = jax.random.split(key, 3)

    # Primary config: batch=2, seq=8, input_size=16, hidden_size=32
    B, T, I, H = 2, 8, 16, 32
    x = jax.random.normal(kx, (B, T, I), jnp.float32)
    params = init_params(kp, I, H)
    ref = reference_forward(x, params)

    out = jax.block_until_ready(lstm_classifier_forward(x, params))
    assert out.shape == (B, 1)
    assert jnp.allclose(out, ref, atol=1e-4, rtol=1e-4), "Pallas f32 output mismatch vs reference"

    # Awkward sequence length: exercises time padding + in-kernel masking + multi-chunk state carry
    B2, T2 = 3, 43
    x2 = jax.random.normal(kx2, (B2, T2, I), jnp.float32)
    ref2 = reference_forward(x2, params)
    out2 = jax.block_until_ready(lstm_classifier_forward(x2, params))
    assert out2.shape == (B2, 1)
    assert jnp.allclose(out2, ref2, atol=1e-4, rtol=1e-4), "Pallas masked/multi-chunk mismatch"

    # bf16 MXU-operand path (v6e/v7x): weights + x stream pre-cast in the wrapper; gates stay f32.
    out_bf16 = jax.block_until_ready(
        lstm_classifier_forward(x, params, compute_dtype=jnp.bfloat16))
    assert out_bf16.shape == (B, 1)
    assert jnp.allclose(out_bf16, ref, atol=1e-1), "Pallas bf16 output drifted too far"

    print("KERNEL_OK")
</pallas_src>

<mosaic_0001>
module attributes {stable_mosaic.version = 11 : i64} {
  func.func @lstm_classifier_kernel(%arg0: i32, %arg1: i32, %arg2: memref<8x8x16xf32, #tpu.memory_space<vmem>>, %arg3: memref<16x512xf32, #tpu.memory_space<vmem>>, %arg4: memref<1x512xf32, #tpu.memory_space<vmem>>, %arg5: memref<128x512xf32, #tpu.memory_space<vmem>>, %arg6: memref<256x512xf32, #tpu.memory_space<vmem>>, %arg7: memref<1x512xf32, #tpu.memory_space<vmem>>, %arg8: memref<1x128xf32, #tpu.memory_space<vmem>>, %arg9: memref<1x1xf32, #tpu.memory_space<vmem>>, %arg10: memref<8x128xf32, #tpu.memory_space<vmem>>, %arg11: memref<8x256xf32, #tpu.memory_space<vmem>>, %arg12: memref<8x256xf32, #tpu.memory_space<vmem>>) attributes {dimension_semantics = [#tpu.dimension_semantics<parallel>, #tpu.dimension_semantics<arbitrary>], iteration_bounds = array<i64: 1, 1>, scalar_prefetch = 0 : i64, scratch_operands = 2 : i64, tpu.core_type = #tpu.core_type<tc>, window_params = [{transform_indices = @transform_0, window_bounds = array<i64: 8, 8, 16>}, {pipeline_mode = #tpu.pipeline_mode<synchronous>, transform_indices = @transform_1, window_bounds = array<i64: 16, 512>}, {pipeline_mode = #tpu.pipeline_mode<synchronous>, transform_indices = @transform_2, window_bounds = array<i64: 1, 512>}, {pipeline_mode = #tpu.pipeline_mode<synchronous>, transform_indices = @transform_3, window_bounds = array<i64: 128, 512>}, {pipeline_mode = #tpu.pipeline_mode<synchronous>, transform_indices = @transform_4, window_bounds = array<i64: 256, 512>}, {pipeline_mode = #tpu.pipeline_mode<synchronous>, transform_indices = @transform_5, window_bounds = array<i64: 1, 512>}, {pipeline_mode = #tpu.pipeline_mode<synchronous>, transform_indices = @transform_6, window_bounds = array<i64: 1, 128>}, {pipeline_mode = #tpu.pipeline_mode<synchronous>, transform_indices = @transform_7, window_bounds = array<i64: 1, 1>}, {transform_indices = @transform_8, window_bounds = array<i64: 8, 128>}]} {
    %c0_i32 = arith.constant 0 : i32
    %0 = arith.cmpi eq, %arg1, %c0_i32 : i32
    %1 = arith.extui %0 : i1 to i32
    %c0_i32_0 = arith.constant 0 : i32
    %2 = arith.cmpi ne, %1, %c0_i32_0 : i32
    scf.if %2 {
      %cst_176 = arith.constant 0.000000e+00 : f32
      %392 = vector.broadcast %cst_176 : f32 to vector<8x256xf32>
      %c0_177 = arith.constant 0 : index
      %c0_178 = arith.constant 0 : index
      %393 = vector.load %arg11[%c0_177, %c0_178] : memref<8x256xf32, #tpu.memory_space<vmem>>, vector<8x256xf32>
      tpu.vector_store %arg11[%c0_177, %c0_178], %392 {strides = array<i32>} : memref<8x256xf32, #tpu.memory_space<vmem>>, vector<8x256xf32>,
      %cst_179 = arith.constant 0.000000e+00 : f32
      %394 = vector.broadcast %cst_179 : f32 to vector<8x256xf32>
      %c0_180 = arith.constant 0 : index
      %c0_181 = arith.constant 0 : index
      %395 = vector.load %arg12[%c0_180, %c0_181] : memref<8x256xf32, #tpu.memory_space<vmem>>, vector<8x256xf32>
      tpu.vector_store %arg12[%c0_180, %c0_181], %394 {strides = array<i32>} : memref<8x256xf32, #tpu.memory_space<vmem>>, vector<8x256xf32>,
    } else {
    }
    %c0 = arith.constant 0 : index
    %c0_1 = arith.constant 0 : index
    %3 = vector.load %arg3[%c0, %c0_1] : memref<16x512xf32, #tpu.memory_space<vmem>>, vector<16x512xf32>
    %c0_2 = arith.constant 0 : index
    %c0_3 = arith.constant 0 : index
    %4 = vector.load %arg5[%c0_2, %c0_3] : memref<128x512xf32, #tpu.memory_space<vmem>>, vector<128x512xf32>
    %c0_4 = arith.constant 0 : index
    %c0_5 = arith.constant 0 : index
    %5 = vector.load %arg6[%c0_4, %c0_5] : memref<256x512xf32, #tpu.memory_space<vmem>>, vector<256x512xf32>
    %c0_6 = arith.constant 0 : index
    %c0_7 = arith.constant 0 : index
    %6 = vector.load %arg4[%c0_6, %c0_7] : memref<1x512xf32, #tpu.memory_space<vmem>>, vector<1x512xf32>
    %c0_8 = arith.constant 0 : index
    %c0_9 = arith.constant 0 : index
    %7 = vector.load %arg7[%c0_8, %c0_9] : memref<1x512xf32, #tpu.memory_space<vmem>>, vector<1x512xf32>
    %8 = vector.shape_cast %7 : vector<1x512xf32> to vector<1x512xf32>
    %9 = vector.broadcast %8 : vector<1x512xf32> to vector<8x512xf32>
    %c0_i32_10 = arith.constant 0 : i32
    %c1_i32 = arith.constant 1 : i32
    %10 = arith.muli %c0_i32_10, %c1_i32 : i32
    %c0_i32_11 = arith.constant 0 : i32
    %11 = arith.addi %c0_i32_11, %10 : i32
    %c8_i32 = arith.constant 8 : i32
    %12 = arith.muli %11, %c8_i32 : i32
    %13 = tpu.assume_multiple %12, 8 : i32
    %14 = arith.index_cast %13 : i32 to index
    %c0_12 = arith.constant 0 : index
    %c0_13 = arith.constant 0 : index
    %15 = vector.load %arg2[%14, %c0_12, %c0_13] : memref<8x8x16xf32, #tpu.memory_space<vmem>>, vector<8x8x16xf32>
    %16 = vector.shape_cast %15 : vector<8x8x16xf32> to vector<64x16xf32>
    %cst = arith.constant dense<0.000000e+00> : vector<64x512xf32>
    %17 = tpu.matmul %16, %3, %cst {dimension_numbers = #tpu.dot_dimension_numbers<[1], [0], [0], [1], [0, 0, 1, 1], [], []>} : vector<64x16xf32>, vector<16x512xf32>, vector<64x512xf32> -> vector<64x512xf32>
    %18 = vector.broadcast %6 : vector<1x512xf32> to vector<64x512xf32>
    %19 = arith.addf %17, %18 : vector<64x512xf32>
    %20 = vector.shape_cast %19 : vector<64x512xf32> to vector<8x8x512xf32>
    %21 = vector.extract_strided_slice %20 {offsets = [0, 0, 0], sizes = [1, 8, 512], strides = [1, 1, 1]} : vector<8x8x512xf32> to vector<1x8x512xf32>
    %22 = vector.shape_cast %21 : vector<1x8x512xf32> to vector<8x512xf32>
    %c0_14 = arith.constant 0 : index
    %c0_15 = arith.constant 0 : index
    %23 = vector.load %arg11[%c0_14, %c0_15] : memref<8x256xf32, #tpu.memory_space<vmem>>, vector<8x128xf32>
    %c0_16 = arith.constant 0 : index
    %c0_17 = arith.constant 0 : index
    %24 = vector.load %arg12[%c0_16, %c0_17] : memref<8x256xf32, #tpu.memory_space<vmem>>, vector<8x128xf32>
    %cst_18 = arith.constant dense<0.000000e+00> : vector<8x512xf32>
    %25 = tpu.matmul %23, %4, %cst_18 {dimension_numbers = #tpu.dot_dimension_numbers<[1], [0], [0], [1], [0, 0, 1, 1], [], []>} : vector<8x128xf32>, vector<128x512xf32>, vector<8x512xf32> -> vector<8x512xf32>
    %26 = arith.addf %22, %25 : vector<8x512xf32>
    %27 = vector.extract_strided_slice %26 {offsets = [0, 0], sizes = [8, 384], strides = [1, 1]} : vector<8x512xf32> to vector<8x384xf32>
    %28 = arith.negf %27 : vector<8x384xf32>
    %29 = math.exp %28 : vector<8x384xf32>
    %cst_19 = arith.constant 1.000000e+00 : f32
    %30 = vector.broadcast %cst_19 : f32 to vector<8x384xf32>
    %31 = arith.addf %30, %29 : vector<8x384xf32>
    %32 = arith.divf %30, %31 : vector<8x384xf32>
    %33 = vector.extract_strided_slice %26 {offsets = [0, 384], sizes = [8, 128], strides = [1, 1]} : vector<8x512xf32> to vector<8x128xf32>
    %34 = math.tanh %33 : vector<8x128xf32>
    %35 = vector.extract_strided_slice %32 {offsets = [0, 128], sizes = [8, 128], strides = [1, 1]} : vector<8x384xf32> to vector<8x128xf32>
    %36 = arith.mulf %35, %24 : vector<8x128xf32>
    %37 = vector.extract_strided_slice %32 {offsets = [0, 0], sizes = [8, 128], strides = [1, 1]} : vector<8x384xf32> to vector<8x128xf32>
    %38 = arith.mulf %37, %34 : vector<8x128xf32>
    %39 = arith.addf %36, %38 : vector<8x128xf32>
    %40 = vector.extract_strided_slice %32 {offsets = [0, 256], sizes = [8, 128], strides = [1, 1]} : vector<8x384xf32> to vector<8x128xf32>
    %41 = math.tanh %39 : vector<8x128xf32>
    %42 = arith.mulf %40, %41 : vector<8x128xf32>
    %c0_20 = arith.constant 0 : index
    %c0_21 = arith.constant 0 : index
    %43 = vector.load %arg11[%c0_20, %c0_21] : memref<8x256xf32, #tpu.memory_space<vmem>>, vector<8x128xf32>
    tpu.vector_store %arg11[%c0_20, %c0_21], %42 {strides = array<i32>} : memref<8x256xf32, #tpu.memory_space<vmem>>, vector<8x128xf32>,
    %c0_22 = arith.constant 0 : index
    %c0_23 = arith.constant 0 : index
    %44 = vector.load %arg12[%c0_22, %c0_23] : memref<8x256xf32, #tpu.memory_space<vmem>>, vector<8x128xf32>
    tpu.vector_store %arg12[%c0_22, %c0_23], %39 {strides = array<i32>} : memref<8x256xf32, #tpu.memory_space<vmem>>, vector<8x128xf32>,
    %c0_24 = arith.constant 0 : index
    %c0_25 = arith.constant 0 : index
    %45 = vector.load %arg11[%c0_24, %c0_25] : memref<8x256xf32, #tpu.memory_space<vmem>>, vector<8x256xf32>
    %c0_26 = arith.constant 0 : index
    %c128 = arith.constant 128 : index
    %46 = vector.load %arg12[%c0_26, %c128] : memref<8x256xf32, #tpu.memory_space<vmem>>, vector<8x128xf32>
    %cst_27 = arith.constant dense<0.000000e+00> : vector<8x512xf32>
    %47 = tpu.matmul %45, %5, %cst_27 {dimension_numbers = #tpu.dot_dimension_numbers<[1], [0], [0], [1], [0, 0, 1, 1], [], []>} : vector<8x256xf32>, vector<256x512xf32>, vector<8x512xf32> -> vector<8x512xf32>
    %48 = arith.addf %47, %9 : vector<8x512xf32>
    %49 = vector.extract_strided_slice %48 {offsets = [0, 0], sizes = [8, 384], strides = [1, 1]} : vector<8x512xf32> to vector<8x384xf32>
    %50 = arith.negf %49 : vector<8x384xf32>
    %51 = math.exp %50 : vector<8x384xf32>
    %cst_28 = arith.constant 1.000000e+00 : f32
    %52 = vector.broadcast %cst_28 : f32 to vector<8x384xf32>
    %53 = arith.addf %52, %51 : vector<8x384xf32>
    %54 = arith.divf %52, %53 : vector<8x384xf32>
    %55 = vector.extract_strided_slice %48 {offsets = [0, 384], sizes = [8, 128], strides = [1, 1]} : vector<8x512xf32> to vector<8x128xf32>
    %56 = math.tanh %55 : vector<8x128xf32>
    %57 = vector.extract_strided_slice %54 {offsets = [0, 128], sizes = [8, 128], strides = [1, 1]} : vector<8x384xf32> to vector<8x128xf32>
    %58 = arith.mulf %57, %46 : vector<8x128xf32>
    %59 = vector.extract_strided_slice %54 {offsets = [0, 0], sizes = [8, 128], strides = [1, 1]} : vector<8x384xf32> to vector<8x128xf32>
    %60 = arith.mulf %59, %56 : vector<8x128xf32>
    %61 = arith.addf %58, %60 : vector<8x128xf32>
    %62 = vector.extract_strided_slice %54 {offsets = [0, 256], sizes = [8, 128], strides = [1, 1]} : vector<8x384xf32> to vector<8x128xf32>
    %63 = math.tanh %61 : vector<8x128xf32>
    %64 = arith.mulf %62, %63 : vector<8x128xf32>
    %c0_29 = arith.constant 0 : index
    %c128_30 = arith.constant 128 : index
    %65 = vector.load %arg11[%c0_29, %c128_30] : memref<8x256xf32, #tpu.memory_space<vmem>>, vector<8x128xf32>
    tpu.vector_store %arg11[%c0_29, %c128_30], %64 {strides = array<i32>} : memref<8x256xf32, #tpu.memory_space<vmem>>, vector<8x128xf32>,
    %c0_31 = arith.constant 0 : index
    %c128_32 = arith.constant 128 : index
    %66 = vector.load %arg12[%c0_31, %c128_32] : memref<8x256xf32, #tpu.memory_space<vmem>>, vector<8x128xf32>
    tpu.vector_store %arg12[%c0_31, %c128_32], %61 {strides = array<i32>} : memref<8x256xf32, #tpu.memory_space<vmem>>, vector<8x128xf32>,
    %67 = vector.extract_strided_slice %20 {offsets = [1, 0, 0], sizes = [1, 8, 512], strides = [1, 1, 1]} : vector<8x8x512xf32> to vector<1x8x512xf32>
    %68 = vector.shape_cast %67 : vector<1x8x512xf32> to vector<8x512xf32>
    %c0_33 = arith.constant 0 : index
    %c0_34 = arith.constant 0 : index
    %69 = vector.load %arg11[%c0_33, %c0_34] : memref<8x256xf32, #tpu.memory_space<vmem>>, vector<8x128xf32>
    %c0_35 = arith.constant 0 : index
    %c0_36 = arith.constant 0 : index
    %70 = vector.load %arg12[%c0_35, %c0_36] : memref<8x256xf32, #tpu.memory_space<vmem>>, vector<8x128xf32>
    %cst_37 = arith.constant dense<0.000000e+00> : vector<8x512xf32>
    %71 = tpu.matmul %69, %4, %cst_37 {dimension_numbers = #tpu.dot_dimension_numbers<[1], [0], [0], [1], [0, 0, 1, 1], [], []>} : vector<8x128xf32>, vector<128x512xf32>, vector<8x512xf32> -> vector<8x512xf32>
    %72 = arith.addf %68, %71 : vector<8x512xf32>
    %73 = vector.extract_strided_slice %72 {offsets = [0, 0], sizes = [8, 384], strides = [1, 1]} : vector<8x512xf32> to vector<8x384xf32>
    %74 = arith.negf %73 : vector<8x384xf32>
    %75 = math.exp %74 : vector<8x384xf32>
    %cst_38 = arith.constant 1.000000e+00 : f32
    %76 = vector.broadcast %cst_38 : f32 to vector<8x384xf32>
    %77 = arith.addf %76, %75 : vector<8x384xf32>
    %78 = arith.divf %76, %77 : vector<8x384xf32>
    %79 = vector.extract_strided_slice %72 {offsets = [0, 384], sizes = [8, 128], strides = [1, 1]} : vector<8x512xf32> to vector<8x128xf32>
    %80 = math.tanh %79 : vector<8x128xf32>
    %81 = vector.extract_strided_slice %78 {offsets = [0, 128], sizes = [8, 128], strides = [1, 1]} : vector<8x384xf32> to vector<8x128xf32>
    %82 = arith.mulf %81, %70 : vector<8x128xf32>
    %83 = vector.extract_strided_slice %78 {offsets = [0, 0], sizes = [8, 128], strides = [1, 1]} : vector<8x384xf32> to vector<8x128xf32>
    %84 = arith.mulf %83, %80 : vector<8x128xf32>
    %85 = arith.addf %82, %84 : vector<8x128xf32>
    %86 = vector.extract_strided_slice %78 {offsets = [0, 256], sizes = [8, 128], strides = [1, 1]} : vector<8x384xf32> to vector<8x128xf32>
    %87 = math.tanh %85 : vector<8x128xf32>
    %88 = arith.mulf %86, %87 : vector<8x128xf32>
    %c0_39 = arith.constant 0 : index
    %c0_40 = arith.constant 0 : index
    %89 = vector.load %arg11[%c0_39, %c0_40] : memref<8x256xf32, #tpu.memory_space<vmem>>, vector<8x128xf32>
    tpu.vector_store %arg11[%c0_39, %c0_40], %88 {strides = array<i32>} : memref<8x256xf32, #tpu.memory_space<vmem>>, vector<8x128xf32>,
    %c0_41 = arith.constant 0 : index
    %c0_42 = arith.constant 0 : index
    %90 = vector.load %arg12[%c0_41, %c0_42] : memref<8x256xf32, #tpu.memory_space<vmem>>, vector<8x128xf32>
    tpu.vector_store %arg12[%c0_41, %c0_42], %85 {strides = array<i32>} : memref<8x256xf32, #tpu.memory_space<vmem>>, vector<8x128xf32>,
    %c0_43 = arith.constant 0 : index
    %c0_44 = arith.constant 0 : index
    %91 = vector.load %arg11[%c0_43, %c0_44] : memref<8x256xf32, #tpu.memory_space<vmem>>, vector<8x256xf32>
    %c0_45 = arith.constant 0 : index
    %c128_46 = arith.constant 128 : index
    %92 = vector.load %arg12[%c0_45, %c128_46] : memref<8x256xf32, #tpu.memory_space<vmem>>, vector<8x128xf32>
    %cst_47 = arith.constant dense<0.000000e+00> : vector<8x512xf32>
    %93 = tpu.matmul %91, %5, %cst_47 {dimension_numbers = #tpu.dot_dimension_numbers<[1], [0], [0], [1], [0, 0, 1, 1], [], []>} : vector<8x256xf32>, vector<256x512xf32>, vector<8x512xf32> -> vector<8x512xf32>
    %94 = arith.addf %93, %9 : vector<8x512xf32>
    %95 = vector.extract_strided_slice %94 {offsets = [0, 0], sizes = [8, 384], strides = [1, 1]} : vector<8x512xf32> to vector<8x384xf32>
    %96 = arith.negf %95 : vector<8x384xf32>
    %97 = math.exp %96 : vector<8x384xf32>
    %cst_48 = arith.constant 1.000000e+00 : f32
    %98 = vector.broadcast %cst_48 : f32 to vector<8x384xf32>
    %99 = arith.addf %98, %97 : vector<8x384xf32>
    %100 = arith.divf %98, %99 : vector<8x384xf32>
    %101 = vector.extract_strided_slice %94 {offsets = [0, 384], sizes = [8, 128], strides = [1, 1]} : vector<8x512xf32> to vector<8x128xf32>
    %102 = math.tanh %101 : vector<8x128xf32>
    %103 = vector.extract_strided_slice %100 {offsets = [0, 128], sizes = [8, 128], strides = [1, 1]} : vector<8x384xf32> to vector<8x128xf32>
    %104 = arith.mulf %103, %92 : vector<8x128xf32>
    %105 = vector.extract_strided_slice %100 {offsets = [0, 0], sizes = [8, 128], strides = [1, 1]} : vector<8x384xf32> to vector<8x128xf32>
    %106 = arith.mulf %105, %102 : vector<8x128xf32>
    %107 = arith.addf %104, %106 : vector<8x128xf32>
    %108 = vector.extract_strided_slice %100 {offsets = [0, 256], sizes = [8, 128], strides = [1, 1]} : vector<8x384xf32> to vector<8x128xf32>
    %109 = math.tanh %107 : vector<8x128xf32>
    %110 = arith.mulf %108, %109 : vector<8x128xf32>
    %c0_49 = arith.constant 0 : index
    %c128_50 = arith.constant 128 : index
    %111 = vector.load %arg11[%c0_49, %c128_50] : memref<8x256xf32, #tpu.memory_space<vmem>>, vector<8x128xf32>
    tpu.vector_store %arg11[%c0_49, %c128_50], %110 {strides = array<i32>} : memref<8x256xf32, #tpu.memory_space<vmem>>, vector<8x128xf32>,
    %c0_51 = arith.constant 0 : index
    %c128_52 = arith.constant 128 : index
    %112 = vector.load %arg12[%c0_51, %c128_52] : memref<8x256xf32, #tpu.memory_space<vmem>>, vector<8x128xf32>
    tpu.vector_store %arg12[%c0_51, %c128_52], %107 {strides = array<i32>} : memref<8x256xf32, #tpu.memory_space<vmem>>, vector<8x128xf32>,
    %113 = vector.extract_strided_slice %20 {offsets = [2, 0, 0], sizes = [1, 8, 512], strides = [1, 1, 1]} : vector<8x8x512xf32> to vector<1x8x512xf32>
    %114 = vector.shape_cast %113 : vector<1x8x512xf32> to vector<8x512xf32>
    %c0_53 = arith.constant 0 : index
    %c0_54 = arith.constant 0 : index
    %115 = vector.load %arg11[%c0_53, %c0_54] : memref<8x256xf32, #tpu.memory_space<vmem>>, vector<8x128xf32>
    %c0_55 = arith.constant 0 : index
    %c0_56 = arith.constant 0 : index
    %116 = vector.load %arg12[%c0_55, %c0_56] : memref<8x256xf32, #tpu.memory_space<vmem>>, vector<8x128xf32>
    %cst_57 = arith.constant dense<0.000000e+00> : vector<8x512xf32>
    %117 = tpu.matmul %115, %4, %cst_57 {dimension_numbers = #tpu.dot_dimension_numbers<[1], [0], [0], [1], [0, 0, 1, 1], [], []>} : vector<8x128xf32>, vector<128x512xf32>, vector<8x512xf32> -> vector<8x512xf32>
    %118 = arith.addf %114, %117 : vector<8x512xf32>
    %119 = vector.extract_strided_slice %118 {offsets = [0, 0], sizes = [8, 384], strides = [1, 1]} : vector<8x512xf32> to vector<8x384xf32>
    %120 = arith.negf %119 : vector<8x384xf32>
    %121 = math.exp %120 : vector<8x384xf32>
    %cst_58 = arith.constant 1.000000e+00 : f32
    %122 = vector.broadcast %cst_58 : f32 to vector<8x384xf32>
    %123 = arith.addf %122, %121 : vector<8x384xf32>
    %124 = arith.divf %122, %123 : vector<8x384xf32>
    %125 = vector.extract_strided_slice %118 {offsets = [0, 384], sizes = [8, 128], strides = [1, 1]} : vector<8x512xf32> to vector<8x128xf32>
    %126 = math.tanh %125 : vector<8x128xf32>
    %127 = vector.extract_strided_slice %124 {offsets = [0, 128], sizes = [8, 128], strides = [1, 1]} : vector<8x384xf32> to vector<8x128xf32>
    %128 = arith.mulf %127, %116 : vector<8x128xf32>
    %129 = vector.extract_strided_slice %124 {offsets = [0, 0], sizes = [8, 128], strides = [1, 1]} : vector<8x384xf32> to vector<8x128xf32>
    %130 = arith.mulf %129, %126 : vector<8x128xf32>
    %131 = arith.addf %128, %130 : vector<8x128xf32>
    %132 = vector.extract_strided_slice %124 {offsets = [0, 256], sizes = [8, 128], strides = [1, 1]} : vector<8x384xf32> to vector<8x128xf32>
    %133 = math.tanh %131 : vector<8x128xf32>
    %134 = arith.mulf %132, %133 : vector<8x128xf32>
    %c0_59 = arith.constant 0 : index
    %c0_60 = arith.constant 0 : index
    %135 = vector.load %arg11[%c0_59, %c0_60] : memref<8x256xf32, #tpu.memory_space<vmem>>, vector<8x128xf32>
    tpu.vector_store %arg11[%c0_59, %c0_60], %134 {strides = array<i32>} : memref<8x256xf32, #tpu.memory_space<vmem>>, vector<8x128xf32>,
    %c0_61 = arith.constant 0 : index
    %c0_62 = arith.constant 0 : index
    %136 = vector.load %arg12[%c0_61, %c0_62] : memref<8x256xf32, #tpu.memory_space<vmem>>, vector<8x128xf32>
    tpu.vector_store %arg12[%c0_61, %c0_62], %131 {strides = array<i32>} : memref<8x256xf32, #tpu.memory_space<vmem>>, vector<8x128xf32>,
    %c0_63 = arith.constant 0 : index
    %c0_64 = arith.constant 0 : index
    %137 = vector.load %arg11[%c0_63, %c0_64] : memref<8x256xf32, #tpu.memory_space<vmem>>, vector<8x256xf32>
    %c0_65 = arith.constant 0 : index
    %c128_66 = arith.constant 128 : index
    %138 = vector.load %arg12[%c0_65, %c128_66] : memref<8x256xf32, #tpu.memory_space<vmem>>, vector<8x128xf32>
    %cst_67 = arith.constant dense<0.000000e+00> : vector<8x512xf32>
    %139 = tpu.matmul %137, %5, %cst_67 {dimension_numbers = #tpu.dot_dimension_numbers<[1], [0], [0], [1], [0, 0, 1, 1], [], []>} : vector<8x256xf32>, vector<256x512xf32>, vector<8x512xf32> -> vector<8x512xf32>
    %140 = arith.addf %139, %9 : vector<8x512xf32>
    %141 = vector.extract_strided_slice %140 {offsets = [0, 0], sizes = [8, 384], strides = [1, 1]} : vector<8x512xf32> to vector<8x384xf32>
    %142 = arith.negf %141 : vector<8x384xf32>
    %143 = math.exp %142 : vector<8x384xf32>
    %cst_68 = arith.constant 1.000000e+00 : f32
    %144 = vector.broadcast %cst_68 : f32 to vector<8x384xf32>
    %145 = arith.addf %144, %143 : vector<8x384xf32>
    %146 = arith.divf %144, %145 : vector<8x384xf32>
    %147 = vector.extract_strided_slice %140 {offsets = [0, 384], sizes = [8, 128], strides = [1, 1]} : vector<8x512xf32> to vector<8x128xf32>
    %148 = math.tanh %147 : vector<8x128xf32>
    %149 = vector.extract_strided_slice %146 {offsets = [0, 128], sizes = [8, 128], strides = [1, 1]} : vector<8x384xf32> to vector<8x128xf32>
    %150 = arith.mulf %149, %138 : vector<8x128xf32>
    %151 = vector.extract_strided_slice %146 {offsets = [0, 0], sizes = [8, 128], strides = [1, 1]} : vector<8x384xf32> to vector<8x128xf32>
    %152 = arith.mulf %151, %148 : vector<8x128xf32>
    %153 = arith.addf %150, %152 : vector<8x128xf32>
    %154 = vector.extract_strided_slice %146 {offsets = [0, 256], sizes = [8, 128], strides = [1, 1]} : vector<8x384xf32> to vector<8x128xf32>
    %155 = math.tanh %153 : vector<8x128xf32>
    %156 = arith.mulf %154, %155 : vector<8x128xf32>
    %c0_69 = arith.constant 0 : index
    %c128_70 = arith.constant 128 : index
    %157 = vector.load %arg11[%c0_69, %c128_70] : memref<8x256xf32, #tpu.memory_space<vmem>>, vector<8x128xf32>
    tpu.vector_store %arg11[%c0_69, %c128_70], %156 {strides = array<i32>} : memref<8x256xf32, #tpu.memory_space<vmem>>, vector<8x128xf32>,
    %c0_71 = arith.constant 0 : index
    %c128_72 = arith.constant 128 : index
    %158 = vector.load %arg12[%c0_71, %c128_72] : memref<8x256xf32, #tpu.memory_space<vmem>>, vector<8x128xf32>
    tpu.vector_store %arg12[%c0_71, %c128_72], %153 {strides = array<i32>} : memref<8x256xf32, #tpu.memory_space<vmem>>, vector<8x128xf32>,
    %159 = vector.extract_strided_slice %20 {offsets = [3, 0, 0], sizes = [1, 8, 512], strides = [1, 1, 1]} : vector<8x8x512xf32> to vector<1x8x512xf32>
    %160 = vector.shape_cast %159 : vector<1x8x512xf32> to vector<8x512xf32>
    %c0_73 = arith.constant 0 : index
    %c0_74 = arith.constant 0 : index
    %161 = vector.load %arg11[%c0_73, %c0_74] : memref<8x256xf32, #tpu.memory_space<vmem>>, vector<8x128xf32>
    %c0_75 = arith.constant 0 : index
    %c0_76 = arith.constant 0 : index
    %162 = vector.load %arg12[%c0_75, %c0_76] : memref<8x256xf32, #tpu.memory_space<vmem>>, vector<8x128xf32>
    %cst_77 = arith.constant dense<0.000000e+00> : vector<8x512xf32>
    %163 = tpu.matmul %161, %4, %cst_77 {dimension_numbers = #tpu.dot_dimension_numbers<[1], [0], [0], [1], [0, 0, 1, 1], [], []>} : vector<8x128xf32>, vector<128x512xf32>, vector<8x512xf32> -> vector<8x512xf32>
    %164 = arith.addf %160, %163 : vector<8x512xf32>
    %165 = vector.extract_strided_slice %164 {offsets = [0, 0], sizes = [8, 384], strides = [1, 1]} : vector<8x512xf32> to vector<8x384xf32>
    %166 = arith.negf %165 : vector<8x384xf32>
    %167 = math.exp %166 : vector<8x384xf32>
    %cst_78 = arith.constant 1.000000e+00 : f32
    %168 = vector.broadcast %cst_78 : f32 to vector<8x384xf32>
    %169 = arith.addf %168, %167 : vector<8x384xf32>
    %170 = arith.divf %168, %169 : vector<8x384xf32>
    %171 = vector.extract_strided_slice %164 {offsets = [0, 384], sizes = [8, 128], strides = [1, 1]} : vector<8x512xf32> to vector<8x128xf32>
    %172 = math.tanh %171 : vector<8x128xf32>
    %173 = vector.extract_strided_slice %170 {offsets = [0, 128], sizes = [8, 128], strides = [1, 1]} : vector<8x384xf32> to vector<8x128xf32>
    %174 = arith.mulf %173, %162 : vector<8x128xf32>
    %175 = vector.extract_strided_slice %170 {offsets = [0, 0], sizes = [8, 128], strides = [1, 1]} : vector<8x384xf32> to vector<8x128xf32>
    %176 = arith.mulf %175, %172 : vector<8x128xf32>
    %177 = arith.addf %174, %176 : vector<8x128xf32>
    %178 = vector.extract_strided_slice %170 {offsets = [0, 256], sizes = [8, 128], strides = [1, 1]} : vector<8x384xf32> to vector<8x128xf32>
    %179 = math.tanh %177 : vector<8x128xf32>
    %180 = arith.mulf %178, %179 : vector<8x128xf32>
    %c0_79 = arith.constant 0 : index
    %c0_80 = arith.constant 0 : index
    %181 = vector.load %arg11[%c0_79, %c0_80] : memref<8x256xf32, #tpu.memory_space<vmem>>, vector<8x128xf32>
    tpu.vector_store %arg11[%c0_79, %c0_80], %180 {strides = array<i32>} : memref<8x256xf32, #tpu.memory_space<vmem>>, vector<8x128xf32>,
    %c0_81 = arith.constant 0 : index
    %c0_82 = arith.constant 0 : index
    %182 = vector.load %arg12[%c0_81, %c0_82] : memref<8x256xf32, #tpu.memory_space<vmem>>, vector<8x128xf32>
    tpu.vector_store %arg12[%c0_81, %c0_82], %177 {strides = array<i32>} : memref<8x256xf32, #tpu.memory_space<vmem>>, vector<8x128xf32>,
    %c0_83 = arith.constant 0 : index
    %c0_84 = arith.constant 0 : index
    %183 = vector.load %arg11[%c0_83, %c0_84] : memref<8x256xf32, #tpu.memory_space<vmem>>, vector<8x256xf32>
    %c0_85 = arith.constant 0 : index
    %c128_86 = arith.constant 128 : index
    %184 = vector.load %arg12[%c0_85, %c128_86] : memref<8x256xf32, #tpu.memory_space<vmem>>, vector<8x128xf32>
    %cst_87 = arith.constant dense<0.000000e+00> : vector<8x512xf32>
    %185 = tpu.matmul %183, %5, %cst_87 {dimension_numbers = #tpu.dot_dimension_numbers<[1], [0], [0], [1], [0, 0, 1, 1], [], []>} : vector<8x256xf32>, vector<256x512xf32>, vector<8x512xf32> -> vector<8x512xf32>
    %186 = arith.addf %185, %9 : vector<8x512xf32>
    %187 = vector.extract_strided_slice %186 {offsets = [0, 0], sizes = [8, 384], strides = [1, 1]} : vector<8x512xf32> to vector<8x384xf32>
    %188 = arith.negf %187 : vector<8x384xf32>
    %189 = math.exp %188 : vector<8x384xf32>
    %cst_88 = arith.constant 1.000000e+00 : f32
    %190 = vector.broadcast %cst_88 : f32 to vector<8x384xf32>
    %191 = arith.addf %190, %189 : vector<8x384xf32>
    %192 = arith.divf %190, %191 : vector<8x384xf32>
    %193 = vector.extract_strided_slice %186 {offsets = [0, 384], sizes = [8, 128], strides = [1, 1]} : vector<8x512xf32> to vector<8x128xf32>
    %194 = math.tanh %193 : vector<8x128xf32>
    %195 = vector.extract_strided_slice %192 {offsets = [0, 128], sizes = [8, 128], strides = [1, 1]} : vector<8x384xf32> to vector<8x128xf32>
    %196 = arith.mulf %195, %184 : vector<8x128xf32>
    %197 = vector.extract_strided_slice %192 {offsets = [0, 0], sizes = [8, 128], strides = [1, 1]} : vector<8x384xf32> to vector<8x128xf32>
    %198 = arith.mulf %197, %194 : vector<8x128xf32>
    %199 = arith.addf %196, %198 : vector<8x128xf32>
    %200 = vector.extract_strided_slice %192 {offsets = [0, 256], sizes = [8, 128], strides = [1, 1]} : vector<8x384xf32> to vector<8x128xf32>
    %201 = math.tanh %199 : vector<8x128xf32>
    %202 = arith.mulf %200, %201 : vector<8x128xf32>
    %c0_89 = arith.constant 0 : index
    %c128_90 = arith.constant 128 : index
    %203 = vector.load %arg11[%c0_89, %c128_90] : memref<8x256xf32, #tpu.memory_space<vmem>>, vector<8x128xf32>
    tpu.vector_store %arg11[%c0_89, %c128_90], %202 {strides = array<i32>} : memref<8x256xf32, #tpu.memory_space<vmem>>, vector<8x128xf32>,
    %c0_91 = arith.constant 0 : index
    %c128_92 = arith.constant 128 : index
    %204 = vector.load %arg12[%c0_91, %c128_92] : memref<8x256xf32, #tpu.memory_space<vmem>>, vector<8x128xf32>
    tpu.vector_store %arg12[%c0_91, %c128_92], %199 {strides = array<i32>} : memref<8x256xf32, #tpu.memory_space<vmem>>, vector<8x128xf32>,
    %205 = vector.extract_strided_slice %20 {offsets = [4, 0, 0], sizes = [1, 8, 512], strides = [1, 1, 1]} : vector<8x8x512xf32> to vector<1x8x512xf32>
    %206 = vector.shape_cast %205 : vector<1x8x512xf32> to vector<8x512xf32>
    %c0_93 = arith.constant 0 : index
    %c0_94 = arith.constant 0 : index
    %207 = vector.load %arg11[%c0_93, %c0_94] : memref<8x256xf32, #tpu.memory_space<vmem>>, vector<8x128xf32>
    %c0_95 = arith.constant 0 : index
    %c0_96 = arith.constant 0 : index
    %208 = vector.load %arg12[%c0_95, %c0_96] : memref<8x256xf32, #tpu.memory_space<vmem>>, vector<8x128xf32>
    %cst_97 = arith.constant dense<0.000000e+00> : vector<8x512xf32>
    %209 = tpu.matmul %207, %4, %cst_97 {dimension_numbers = #tpu.dot_dimension_numbers<[1], [0], [0], [1], [0, 0, 1, 1], [], []>} : vector<8x128xf32>, vector<128x512xf32>, vector<8x512xf32> -> vector<8x512xf32>
    %210 = arith.addf %206, %209 : vector<8x512xf32>
    %211 = vector.extract_strided_slice %210 {offsets = [0, 0], sizes = [8, 384], strides = [1, 1]} : vector<8x512xf32> to vector<8x384xf32>
    %212 = arith.negf %211 : vector<8x384xf32>
    %213 = math.exp %212 : vector<8x384xf32>
    %cst_98 = arith.constant 1.000000e+00 : f32
    %214 = vector.broadcast %cst_98 : f32 to vector<8x384xf32>
    %215 = arith.addf %214, %213 : vector<8x384xf32>
    %216 = arith.divf %214, %215 : vector<8x384xf32>
    %217 = vector.extract_strided_slice %210 {offsets = [0, 384], sizes = [8, 128], strides = [1, 1]} : vector<8x512xf32> to vector<8x128xf32>
    %218 = math.tanh %217 : vector<8x128xf32>
    %219 = vector.extract_strided_slice %216 {offsets = [0, 128], sizes = [8, 128], strides = [1, 1]} : vector<8x384xf32> to vector<8x128xf32>
    %220 = arith.mulf %219, %208 : vector<8x128xf32>
    %221 = vector.extract_strided_slice %216 {offsets = [0, 0], sizes = [8, 128], strides = [1, 1]} : vector<8x384xf32> to vector<8x128xf32>
    %222 = arith.mulf %221, %218 : vector<8x128xf32>
    %223 = arith.addf %220, %222 : vector<8x128xf32>
    %224 = vector.extract_strided_slice %216 {offsets = [0, 256], sizes = [8, 128], strides = [1, 1]} : vector<8x384xf32> to vector<8x128xf32>
    %225 = math.tanh %223 : vector<8x128xf32>
    %226 = arith.mulf %224, %225 : vector<8x128xf32>
    %c0_99 = arith.constant 0 : index
    %c0_100 = arith.constant 0 : index
    %227 = vector.load %arg11[%c0_99, %c0_100] : memref<8x256xf32, #tpu.memory_space<vmem>>, vector<8x128xf32>
    tpu.vector_store %arg11[%c0_99, %c0_100], %226 {strides = array<i32>} : memref<8x256xf32, #tpu.memory_space<vmem>>, vector<8x128xf32>,
    %c0_101 = arith.constant 0 : index
    %c0_102 = arith.constant 0 : index
    %228 = vector.load %arg12[%c0_101, %c0_102] : memref<8x256xf32, #tpu.memory_space<vmem>>, vector<8x128xf32>
    tpu.vector_store %arg12[%c0_101, %c0_102], %223 {strides = array<i32>} : memref<8x256xf32, #tpu.memory_space<vmem>>, vector<8x128xf32>,
    %c0_103 = arith.constant 0 : index
    %c0_104 = arith.constant 0 : index
    %229 = vector.load %arg11[%c0_103, %c0_104] : memref<8x256xf32, #tpu.memory_space<vmem>>, vector<8x256xf32>
    %c0_105 = arith.constant 0 : index
    %c128_106 = arith.constant 128 : index
    %230 = vector.load %arg12[%c0_105, %c128_106] : memref<8x256xf32, #tpu.memory_space<vmem>>, vector<8x128xf32>
    %cst_107 = arith.constant dense<0.000000e+00> : vector<8x512xf32>
    %231 = tpu.matmul %229, %5, %cst_107 {dimension_numbers = #tpu.dot_dimension_numbers<[1], [0], [0], [1], [0, 0, 1, 1], [], []>} : vector<8x256xf32>, vector<256x512xf32>, vector<8x512xf32> -> vector<8x512xf32>
    %232 = arith.addf %231, %9 : vector<8x512xf32>
    %233 = vector.extract_strided_slice %232 {offsets = [0, 0], sizes = [8, 384], strides = [1, 1]} : vector<8x512xf32> to vector<8x384xf32>
    %234 = arith.negf %233 : vector<8x384xf32>
    %235 = math.exp %234 : vector<8x384xf32>
    %cst_108 = arith.constant 1.000000e+00 : f32
    %236 = vector.broadcast %cst_108 : f32 to vector<8x384xf32>
    %237 = arith.addf %236, %235 : vector<8x384xf32>
    %238 = arith.divf %236, %237 : vector<8x384xf32>
    %239 = vector.extract_strided_slice %232 {offsets = [0, 384], sizes = [8, 128], strides = [1, 1]} : vector<8x512xf32> to vector<8x128xf32>
    %240 = math.tanh %239 : vector<8x128xf32>
    %241 = vector.extract_strided_slice %238 {offsets = [0, 128], sizes = [8, 128], strides = [1, 1]} : vector<8x384xf32> to vector<8x128xf32>
    %242 = arith.mulf %241, %230 : vector<8x128xf32>
    %243 = vector.extract_strided_slice %238 {offsets = [0, 0], sizes = [8, 128], strides = [1, 1]} : vector<8x384xf32> to vector<8x128xf32>
    %244 = arith.mulf %243, %240 : vector<8x128xf32>
    %245 = arith.addf %242, %244 : vector<8x128xf32>
    %246 = vector.extract_strided_slice %238 {offsets = [0, 256], sizes = [8, 128], strides = [1, 1]} : vector<8x384xf32> to vector<8x128xf32>
    %247 = math.tanh %245 : vector<8x128xf32>
    %248 = arith.mulf %246, %247 : vector<8x128xf32>
    %c0_109 = arith.constant 0 : index
    %c128_110 = arith.constant 128 : index
    %249 = vector.load %arg11[%c0_109, %c128_110] : memref<8x256xf32, #tpu.memory_space<vmem>>, vector<8x128xf32>
    tpu.vector_store %arg11[%c0_109, %c128_110], %248 {strides = array<i32>} : memref<8x256xf32, #tpu.memory_space<vmem>>, vector<8x128xf32>,
    %c0_111 = arith.constant 0 : index
    %c128_112 = arith.constant 128 : index
    %250 = vector.load %arg12[%c0_111, %c128_112] : memref<8x256xf32, #tpu.memory_space<vmem>>, vector<8x128xf32>
    tpu.vector_store %arg12[%c0_111, %c128_112], %245 {strides = array<i32>} : memref<8x256xf32, #tpu.memory_space<vmem>>, vector<8x128xf32>,
    %251 = vector.extract_strided_slice %20 {offsets = [5, 0, 0], sizes = [1, 8, 512], strides = [1, 1, 1]} : vector<8x8x512xf32> to vector<1x8x512xf32>
    %252 = vector.shape_cast %251 : vector<1x8x512xf32> to vector<8x512xf32>
    %c0_113 = arith.constant 0 : index
    %c0_114 = arith.constant 0 : index
    %253 = vector.load %arg11[%c0_113, %c0_114] : memref<8x256xf32, #tpu.memory_space<vmem>>, vector<8x128xf32>
    %c0_115 = arith.constant 0 : index
    %c0_116 = arith.constant 0 : index
    %254 = vector.load %arg12[%c0_115, %c0_116] : memref<8x256xf32, #tpu.memory_space<vmem>>, vector<8x128xf32>
    %cst_117 = arith.constant dense<0.000000e+00> : vector<8x512xf32>
    %255 = tpu.matmul %253, %4, %cst_117 {dimension_numbers = #tpu.dot_dimension_numbers<[1], [0], [0], [1], [0, 0, 1, 1], [], []>} : vector<8x128xf32>, vector<128x512xf32>, vector<8x512xf32> -> vector<8x512xf32>
    %256 = arith.addf %252, %255 : vector<8x512xf32>
    %257 = vector.extract_strided_slice %256 {offsets = [0, 0], sizes = [8, 384], strides = [1, 1]} : vector<8x512xf32> to vector<8x384xf32>
    %258 = arith.negf %257 : vector<8x384xf32>
    %259 = math.exp %258 : vector<8x384xf32>
    %cst_118 = arith.constant 1.000000e+00 : f32
    %260 = vector.broadcast %cst_118 : f32 to vector<8x384xf32>
    %261 = arith.addf %260, %259 : vector<8x384xf32>
    %262 = arith.divf %260, %261 : vector<8x384xf32>
    %263 = vector.extract_strided_slice %256 {offsets = [0, 384], sizes = [8, 128], strides = [1, 1]} : vector<8x512xf32> to vector<8x128xf32>
    %264 = math.tanh %263 : vector<8x128xf32>
    %265 = vector.extract_strided_slice %262 {offsets = [0, 128], sizes = [8, 128], strides = [1, 1]} : vector<8x384xf32> to vector<8x128xf32>
    %266 = arith.mulf %265, %254 : vector<8x128xf32>
    %267 = vector.extract_strided_slice %262 {offsets = [0, 0], sizes = [8, 128], strides = [1, 1]} : vector<8x384xf32> to vector<8x128xf32>
    %268 = arith.mulf %267, %264 : vector<8x128xf32>
    %269 = arith.addf %266, %268 : vector<8x128xf32>
    %270 = vector.extract_strided_slice %262 {offsets = [0, 256], sizes = [8, 128], strides = [1, 1]} : vector<8x384xf32> to vector<8x128xf32>
    %271 = math.tanh %269 : vector<8x128xf32>
    %272 = arith.mulf %270, %271 : vector<8x128xf32>
    %c0_119 = arith.constant 0 : index
    %c0_120 = arith.constant 0 : index
    %273 = vector.load %arg11[%c0_119, %c0_120] : memref<8x256xf32, #tpu.memory_space<vmem>>, vector<8x128xf32>
    tpu.vector_store %arg11[%c0_119, %c0_120], %272 {strides = array<i32>} : memref<8x256xf32, #tpu.memory_space<vmem>>, vector<8x128xf32>,
    %c0_121 = arith.constant 0 : index
    %c0_122 = arith.constant 0 : index
    %274 = vector.load %arg12[%c0_121, %c0_122] : memref<8x256xf32, #tpu.memory_space<vmem>>, vector<8x128xf32>
    tpu.vector_store %arg12[%c0_121, %c0_122], %269 {strides = array<i32>} : memref<8x256xf32, #tpu.memory_space<vmem>>, vector<8x128xf32>,
    %c0_123 = arith.constant 0 : index
    %c0_124 = arith.constant 0 : index
    %275 = vector.load %arg11[%c0_123, %c0_124] : memref<8x256xf32, #tpu.memory_space<vmem>>, vector<8x256xf32>
    %c0_125 = arith.constant 0 : index
    %c128_126 = arith.constant 128 : index
    %276 = vector.load %arg12[%c0_125, %c128_126] : memref<8x256xf32, #tpu.memory_space<vmem>>, vector<8x128xf32>
    %cst_127 = arith.constant dense<0.000000e+00> : vector<8x512xf32>
    %277 = tpu.matmul %275, %5, %cst_127 {dimension_numbers = #tpu.dot_dimension_numbers<[1], [0], [0], [1], [0, 0, 1, 1], [], []>} : vector<8x256xf32>, vector<256x512xf32>, vector<8x512xf32> -> vector<8x512xf32>
    %278 = arith.addf %277, %9 : vector<8x512xf32>
    %279 = vector.extract_strided_slice %278 {offsets = [0, 0], sizes = [8, 384], strides = [1, 1]} : vector<8x512xf32> to vector<8x384xf32>
    %280 = arith.negf %279 : vector<8x384xf32>
    %281 = math.exp %280 : vector<8x384xf32>
    %cst_128 = arith.constant 1.000000e+00 : f32
    %282 = vector.broadcast %cst_128 : f32 to vector<8x384xf32>
    %283 = arith.addf %282, %281 : vector<8x384xf32>
    %284 = arith.divf %282, %283 : vector<8x384xf32>
    %285 = vector.extract_strided_slice %278 {offsets = [0, 384], sizes = [8, 128], strides = [1, 1]} : vector<8x512xf32> to vector<8x128xf32>
    %286 = math.tanh %285 : vector<8x128xf32>
    %287 = vector.extract_strided_slice %284 {offsets = [0, 128], sizes = [8, 128], strides = [1, 1]} : vector<8x384xf32> to vector<8x128xf32>
    %288 = arith.mulf %287, %276 : vector<8x128xf32>
    %289 = vector.extract_strided_slice %284 {offsets = [0, 0], sizes = [8, 128], strides = [1, 1]} : vector<8x384xf32> to vector<8x128xf32>
    %290 = arith.mulf %289, %286 : vector<8x128xf32>
    %291 = arith.addf %288, %290 : vector<8x128xf32>
    %292 = vector.extract_strided_slice %284 {offsets = [0, 256], sizes = [8, 128], strides = [1, 1]} : vector<8x384xf32> to vector<8x128xf32>
    %293 = math.tanh %291 : vector<8x128xf32>
    %294 = arith.mulf %292, %293 : vector<8x128xf32>
    %c0_129 = arith.constant 0 : index
    %c128_130 = arith.constant 128 : index
    %295 = vector.load %arg11[%c0_129, %c128_130] : memref<8x256xf32, #tpu.memory_space<vmem>>, vector<8x128xf32>
    tpu.vector_store %arg11[%c0_129, %c128_130], %294 {strides = array<i32>} : memref<8x256xf32, #tpu.memory_space<vmem>>, vector<8x128xf32>,
    %c0_131 = arith.constant 0 : index
    %c128_132 = arith.constant 128 : index
    %296 = vector.load %arg12[%c0_131, %c128_132] : memref<8x256xf32, #tpu.memory_space<vmem>>, vector<8x128xf32>
    tpu.vector_store %arg12[%c0_131, %c128_132], %291 {strides = array<i32>} : memref<8x256xf32, #tpu.memory_space<vmem>>, vector<8x128xf32>,
    %297 = vector.extract_strided_slice %20 {offsets = [6, 0, 0], sizes = [1, 8, 512], strides = [1, 1, 1]} : vector<8x8x512xf32> to vector<1x8x512xf32>
    %298 = vector.shape_cast %297 : vector<1x8x512xf32> to vector<8x512xf32>
    %c0_133 = arith.constant 0 : index
    %c0_134 = arith.constant 0 : index
    %299 = vector.load %arg11[%c0_133, %c0_134] : memref<8x256xf32, #tpu.memory_space<vmem>>, vector<8x128xf32>
    %c0_135 = arith.constant 0 : index
    %c0_136 = arith.constant 0 : index
    %300 = vector.load %arg12[%c0_135, %c0_136] : memref<8x256xf32, #tpu.memory_space<vmem>>, vector<8x128xf32>
    %cst_137 = arith.constant dense<0.000000e+00> : vector<8x512xf32>
    %301 = tpu.matmul %299, %4, %cst_137 {dimension_numbers = #tpu.dot_dimension_numbers<[1], [0], [0], [1], [0, 0, 1, 1], [], []>} : vector<8x128xf32>, vector<128x512xf32>, vector<8x512xf32> -> vector<8x512xf32>
    %302 = arith.addf %298, %301 : vector<8x512xf32>
    %303 = vector.extract_strided_slice %302 {offsets = [0, 0], sizes = [8, 384], strides = [1, 1]} : vector<8x512xf32> to vector<8x384xf32>
    %304 = arith.negf %303 : vector<8x384xf32>
    %305 = math.exp %304 : vector<8x384xf32>
    %cst_138 = arith.constant 1.000000e+00 : f32
    %306 = vector.broadcast %cst_138 : f32 to vector<8x384xf32>
    %307 = arith.addf %306, %305 : vector<8x384xf32>
    %308 = arith.divf %306, %307 : vector<8x384xf32>
    %309 = vector.extract_strided_slice %302 {offsets = [0, 384], sizes = [8, 128], strides = [1, 1]} : vector<8x512xf32> to vector<8x128xf32>
    %310 = math.tanh %309 : vector<8x128xf32>
    %311 = vector.extract_strided_slice %308 {offsets = [0, 128], sizes = [8, 128], strides = [1, 1]} : vector<8x384xf32> to vector<8x128xf32>
    %312 = arith.mulf %311, %300 : vector<8x128xf32>
    %313 = vector.extract_strided_slice %308 {offsets = [0, 0], sizes = [8, 128], strides = [1, 1]} : vector<8x384xf32> to vector<8x128xf32>
    %314 = arith.mulf %313, %310 : vector<8x128xf32>
    %315 = arith.addf %312, %314 : vector<8x128xf32>
    %316 = vector.extract_strided_slice %308 {offsets = [0, 256], sizes = [8, 128], strides = [1, 1]} : vector<8x384xf32> to vector<8x128xf32>
    %317 = math.tanh %315 : vector<8x128xf32>
    %318 = arith.mulf %316, %317 : vector<8x128xf32>
    %c0_139 = arith.constant 0 : index
    %c0_140 = arith.constant 0 : index
    %319 = vector.load %arg11[%c0_139, %c0_140] : memref<8x256xf32, #tpu.memory_space<vmem>>, vector<8x128xf32>
    tpu.vector_store %arg11[%c0_139, %c0_140], %318 {strides = array<i32>} : memref<8x256xf32, #tpu.memory_space<vmem>>, vector<8x128xf32>,
    %c0_141 = arith.constant 0 : index
    %c0_142 = arith.constant 0 : index
    %320 = vector.load %arg12[%c0_141, %c0_142] : memref<8x256xf32, #tpu.memory_space<vmem>>, vector<8x128xf32>
    tpu.vector_store %arg12[%c0_141, %c0_142], %315 {strides = array<i32>} : memref<8x256xf32, #tpu.memory_space<vmem>>, vector<8x128xf32>,
    %c0_143 = arith.constant 0 : index
    %c0_144 = arith.constant 0 : index
    %321 = vector.load %arg11[%c0_143, %c0_144] : memref<8x256xf32, #tpu.memory_space<vmem>>, vector<8x256xf32>
    %c0_145 = arith.constant 0 : index
    %c128_146 = arith.constant 128 : index
    %322 = vector.load %arg12[%c0_145, %c128_146] : memref<8x256xf32, #tpu.memory_space<vmem>>, vector<8x128xf32>
    %cst_147 = arith.constant dense<0.000000e+00> : vector<8x512xf32>
    %323 = tpu.matmul %321, %5, %cst_147 {dimension_numbers = #tpu.dot_dimension_numbers<[1], [0], [0], [1], [0, 0, 1, 1], [], []>} : vector<8x256xf32>, vector<256x512xf32>, vector<8x512xf32> -> vector<8x512xf32>
    %324 = arith.addf %323, %9 : vector<8x512xf32>
    %325 = vector.extract_strided_slice %324 {offsets = [0, 0], sizes = [8, 384], strides = [1, 1]} : vector<8x512xf32> to vector<8x384xf32>
    %326 = arith.negf %325 : vector<8x384xf32>
    %327 = math.exp %326 : vector<8x384xf32>
    %cst_148 = arith.constant 1.000000e+00 : f32
    %328 = vector.broadcast %cst_148 : f32 to vector<8x384xf32>
    %329 = arith.addf %328, %327 : vector<8x384xf32>
    %330 = arith.divf %328, %329 : vector<8x384xf32>
    %331 = vector.extract_strided_slice %324 {offsets = [0, 384], sizes = [8, 128], strides = [1, 1]} : vector<8x512xf32> to vector<8x128xf32>
    %332 = math.tanh %331 : vector<8x128xf32>
    %333 = vector.extract_strided_slice %330 {offsets = [0, 128], sizes = [8, 128], strides = [1, 1]} : vector<8x384xf32> to vector<8x128xf32>
    %334 = arith.mulf %333, %322 : vector<8x128xf32>
    %335 = vector.extract_strided_slice %330 {offsets = [0, 0], sizes = [8, 128], strides = [1, 1]} : vector<8x384xf32> to vector<8x128xf32>
    %336 = arith.mulf %335, %332 : vector<8x128xf32>
    %337 = arith.addf %334, %336 : vector<8x128xf32>
    %338 = vector.extract_strided_slice %330 {offsets = [0, 256], sizes = [8, 128], strides = [1, 1]} : vector<8x384xf32> to vector<8x128xf32>
    %339 = math.tanh %337 : vector<8x128xf32>
    %340 = arith.mulf %338, %339 : vector<8x128xf32>
    %c0_149 = arith.constant 0 : index
    %c128_150 = arith.constant 128 : index
    %341 = vector.load %arg11[%c0_149, %c128_150] : memref<8x256xf32, #tpu.memory_space<vmem>>, vector<8x128xf32>
    tpu.vector_store %arg11[%c0_149, %c128_150], %340 {strides = array<i32>} : memref<8x256xf32, #tpu.memory_space<vmem>>, vector<8x128xf32>,
    %c0_151 = arith.constant 0 : index
    %c128_152 = arith.constant 128 : index
    %342 = vector.load %arg12[%c0_151, %c128_152] : memref<8x256xf32, #tpu.memory_space<vmem>>, vector<8x128xf32>
    tpu.vector_store %arg12[%c0_151, %c128_152], %337 {strides = array<i32>} : memref<8x256xf32, #tpu.memory_space<vmem>>, vector<8x128xf32>,
    %343 = vector.extract_strided_slice %20 {offsets = [7, 0, 0], sizes = [1, 8, 512], strides = [1, 1, 1]} : vector<8x8x512xf32> to vector<1x8x512xf32>
    %344 = vector.shape_cast %343 : vector<1x8x512xf32> to vector<8x512xf32>
    %c0_153 = arith.constant 0 : index
    %c0_154 = arith.constant 0 : index
    %345 = vector.load %arg11[%c0_153, %c0_154] : memref<8x256xf32, #tpu.memory_space<vmem>>, vector<8x128xf32>
    %c0_155 = arith.constant 0 : index
    %c0_156 = arith.constant 0 : index
    %346 = vector.load %arg12[%c0_155, %c0_156] : memref<8x256xf32, #tpu.memory_space<vmem>>, vector<8x128xf32>
    %cst_157 = arith.constant dense<0.000000e+00> : vector<8x512xf32>
    %347 = tpu.matmul %345, %4, %cst_157 {dimension_numbers = #tpu.dot_dimension_numbers<[1], [0], [0], [1], [0, 0, 1, 1], [], []>} : vector<8x128xf32>, vector<128x512xf32>, vector<8x512xf32> -> vector<8x512xf32>
    %348 = arith.addf %344, %347 : vector<8x512xf32>
    %349 = vector.extract_strided_slice %348 {offsets = [0, 0], sizes = [8, 384], strides = [1, 1]} : vector<8x512xf32> to vector<8x384xf32>
    %350 = arith.negf %349 : vector<8x384xf32>
    %351 = math.exp %350 : vector<8x384xf32>
    %cst_158 = arith.constant 1.000000e+00 : f32
    %352 = vector.broadcast %cst_158 : f32 to vector<8x384xf32>
    %353 = arith.addf %352, %351 : vector<8x384xf32>
    %354 = arith.divf %352, %353 : vector<8x384xf32>
    %355 = vector.extract_strided_slice %348 {offsets = [0, 384], sizes = [8, 128], strides = [1, 1]} : vector<8x512xf32> to vector<8x128xf32>
    %356 = math.tanh %355 : vector<8x128xf32>
    %357 = vector.extract_strided_slice %354 {offsets = [0, 128], sizes = [8, 128], strides = [1, 1]} : vector<8x384xf32> to vector<8x128xf32>
    %358 = arith.mulf %357, %346 : vector<8x128xf32>
    %359 = vector.extract_strided_slice %354 {offsets = [0, 0], sizes = [8, 128], strides = [1, 1]} : vector<8x384xf32> to vector<8x128xf32>
    %360 = arith.mulf %359, %356 : vector<8x128xf32>
    %361 = arith.addf %358, %360 : vector<8x128xf32>
    %362 = vector.extract_strided_slice %354 {offsets = [0, 256], sizes = [8, 128], strides = [1, 1]} : vector<8x384xf32> to vector<8x128xf32>
    %363 = math.tanh %361 : vector<8x128xf32>
    %364 = arith.mulf %362, %363 : vector<8x128xf32>
    %c0_159 = arith.constant 0 : index
    %c0_160 = arith.constant 0 : index
    %365 = vector.load %arg11[%c0_159, %c0_160] : memref<8x256xf32, #tpu.memory_space<vmem>>, vector<8x128xf32>
    tpu.vector_store %arg11[%c0_159, %c0_160], %364 {strides = array<i32>} : memref<8x256xf32, #tpu.memory_space<vmem>>, vector<8x128xf32>,
    %c0_161 = arith.constant 0 : index
    %c0_162 = arith.constant 0 : index
    %366 = vector.load %arg12[%c0_161, %c0_162] : memref<8x256xf32, #tpu.memory_space<vmem>>, vector<8x128xf32>
    tpu.vector_store %arg12[%c0_161, %c0_162], %361 {strides = array<i32>} : memref<8x256xf32, #tpu.memory_space<vmem>>, vector<8x128xf32>,
    %c0_163 = arith.constant 0 : index
    %c0_164 = arith.constant 0 : index
    %367 = vector.load %arg11[%c0_163, %c0_164] : memref<8x256xf32, #tpu.memory_space<vmem>>, vector<8x256xf32>
    %c0_165 = arith.constant 0 : index
    %c128_166 = arith.constant 128 : index
    %368 = vector.load %arg12[%c0_165, %c128_166] : memref<8x256xf32, #tpu.memory_space<vmem>>, vector<8x128xf32>
    %cst_167 = arith.constant dense<0.000000e+00> : vector<8x512xf32>
    %369 = tpu.matmul %367, %5, %cst_167 {dimension_numbers = #tpu.dot_dimension_numbers<[1], [0], [0], [1], [0, 0, 1, 1], [], []>} : vector<8x256xf32>, vector<256x512xf32>, vector<8x512xf32> -> vector<8x512xf32>
    %370 = arith.addf %369, %9 : vector<8x512xf32>
    %371 = vector.extract_strided_slice %370 {offsets = [0, 0], sizes = [8, 384], strides = [1, 1]} : vector<8x512xf32> to vector<8x384xf32>
    %372 = arith.negf %371 : vector<8x384xf32>
    %373 = math.exp %372 : vector<8x384xf32>
    %cst_168 = arith.constant 1.000000e+00 : f32
    %374 = vector.broadcast %cst_168 : f32 to vector<8x384xf32>
    %375 = arith.addf %374, %373 : vector<8x384xf32>
    %376 = arith.divf %374, %375 : vector<8x384xf32>
    %377 = vector.extract_strided_slice %370 {offsets = [0, 384], sizes = [8, 128], strides = [1, 1]} : vector<8x512xf32> to vector<8x128xf32>
    %378 = math.tanh %377 : vector<8x128xf32>
    %379 = vector.extract_strided_slice %376 {offsets = [0, 128], sizes = [8, 128], strides = [1, 1]} : vector<8x384xf32> to vector<8x128xf32>
    %380 = arith.mulf %379, %368 : vector<8x128xf32>
    %381 = vector.extract_strided_slice %376 {offsets = [0, 0], sizes = [8, 128], strides = [1, 1]} : vector<8x384xf32> to vector<8x128xf32>
    %382 = arith.mulf %381, %378 : vector<8x128xf32>
    %383 = arith.addf %380, %382 : vector<8x128xf32>
    %384 = vector.extract_strided_slice %376 {offsets = [0, 256], sizes = [8, 128], strides = [1, 1]} : vector<8x384xf32> to vector<8x128xf32>
    %385 = math.tanh %383 : vector<8x128xf32>
    %386 = arith.mulf %384, %385 : vector<8x128xf32>
    %c0_169 = arith.constant 0 : index
    %c128_170 = arith.constant 128 : index
    %387 = vector.load %arg11[%c0_169, %c128_170] : memref<8x256xf32, #tpu.memory_space<vmem>>, vector<8x128xf32>
    tpu.vector_store %arg11[%c0_169, %c128_170], %386 {strides = array<i32>} : memref<8x256xf32, #tpu.memory_space<vmem>>, vector<8x128xf32>,
    %c0_171 = arith.constant 0 : index
    %c128_172 = arith.constant 128 : index
    %388 = vector.load %arg12[%c0_171, %c128_172] : memref<8x256xf32, #tpu.memory_space<vmem>>, vector<8x128xf32>
    tpu.vector_store %arg12[%c0_171, %c128_172], %383 {strides = array<i32>} : memref<8x256xf32, #tpu.memory_space<vmem>>, vector<8x128xf32>,
    %c1_i32_173 = arith.constant 1 : i32
    %c0_i32_174 = arith.constant 0 : i32
    %389 = arith.cmpi eq, %arg1, %c0_i32_174 : i32
    %390 = arith.extui %389 : i1 to i32
    %c0_i32_175 = arith.constant 0 : i32
    %391 = arith.cmpi ne, %390, %c0_i32_175 : i32
    scf.if %391 {
      %c0_176 = arith.constant 0 : index
      %c128_177 = arith.constant 128 : index
      %392 = vector.load %arg11[%c0_176, %c128_177] : memref<8x256xf32, #tpu.memory_space<vmem>>, vector<8x128xf32>
      %c0_178 = arith.constant 0 : index
      %c0_179 = arith.constant 0 : index
      %393 = vector.load %arg8[%c0_178, %c0_179] : memref<1x128xf32, #tpu.memory_space<vmem>>, vector<1x128xf32>
      %394 = vector.broadcast %393 : vector<1x128xf32> to vector<8x128xf32>
      %395 = arith.mulf %392, %394 : vector<8x128xf32>
      %cst_180 = arith.constant dense<0.000000e+00> : vector<8xf32>
      %396 = vector.multi_reduction <add>, %395, %cst_180 [1] : vector<8x128xf32> to vector<8xf32>
      %397 = vector.shape_cast %396 : vector<8xf32> to vector<8x1xf32>
      %c0_181 = arith.constant 0 : index
      %c0_182 = arith.constant 0 : index
      %398 = vector.load %arg9[%c0_181, %c0_182] : memref<1x1xf32, #tpu.memory_space<vmem>>, vector<1x1xf32>
      %399 = vector.broadcast %398 : vector<1x1xf32> to vector<8x1xf32>
      %400 = arith.addf %397, %399 : vector<8x1xf32>
      %401 = arith.negf %400 : vector<8x1xf32>
      %402 = math.exp %401 : vector<8x1xf32>
      %cst_183 = arith.constant 1.000000e+00 : f32
      %403 = vector.broadcast %cst_183 : f32 to vector<8x1xf32>
      %404 = arith.addf %403, %402 : vector<8x1xf32>
      %405 = arith.divf %403, %404 : vector<8x1xf32>
      %406 = vector.shape_cast %405 : vector<8x1xf32> to vector<8x1xf32>
      %407 = vector.broadcast %406 : vector<8x1xf32> to vector<8x128xf32>
      %c0_184 = arith.constant 0 : index
      %c0_185 = arith.constant 0 : index
      %408 = vector.load %arg10[%c0_184, %c0_185] : memref<8x128xf32, #tpu.memory_space<vmem>>, vector<8x128xf32>
      tpu.vector_store %arg10[%c0_184, %c0_185], %407 {strides = array<i32>} : memref<8x128xf32, #tpu.memory_space<vmem>>, vector<8x128xf32>,
    } else {
    }
    return
  }
  func.func @transform_0(%arg0: i32, %arg1: i32) -> (i32, i32, i32) {
    %c0_i32 = arith.constant 0 : i32
    %c0_i32_0 = arith.constant 0 : i32
    return %arg1, %arg0, %c0_i32 : i32, i32, i32
  }
  func.func @transform_1(%arg0: i32, %arg1: i32) -> (i32, i32) {
    %c0_i32 = arith.constant 0 : i32
    %c0_i32_0 = arith.constant 0 : i32
    %c0_i32_1 = arith.constant 0 : i32
    return %c0_i32, %c0_i32_0 : i32, i32
  }
  func.func @transform_2(%arg0: i32, %arg1: i32) -> (i32, i32) {
    %c0_i32 = arith.constant 0 : i32
    %c0_i32_0 = arith.constant 0 : i32
    %c0_i32_1 = arith.constant 0 : i32
    return %c0_i32, %c0_i32_0 : i32, i32
  }
  func.func @transform_3(%arg0: i32, %arg1: i32) -> (i32, i32) {
    %c0_i32 = arith.constant 0 : i32
    %c0_i32_0 = arith.constant 0 : i32
    %c0_i32_1 = arith.constant 0 : i32
    return %c0_i32, %c0_i32_0 : i32, i32
  }
  func.func @transform_4(%arg0: i32, %arg1: i32) -> (i32, i32) {
    %c0_i32 = arith.constant 0 : i32
    %c0_i32_0 = arith.constant 0 : i32
    %c0_i32_1 = arith.constant 0 : i32
    return %c0_i32, %c0_i32_0 : i32, i32
  }
  func.func @transform_5(%arg0: i32, %arg1: i32) -> (i32, i32) {
    %c0_i32 = arith.constant 0 : i32
    %c0_i32_0 = arith.constant 0 : i32
    %c0_i32_1 = arith.constant 0 : i32
    return %c0_i32, %c0_i32_0 : i32, i32
  }
  func.func @transform_6(%arg0: i32, %arg1: i32) -> (i32, i32) {
    %c0_i32 = arith.constant 0 : i32
    %c0_i32_0 = arith.constant 0 : i32
    %c0_i32_1 = arith.constant 0 : i32
    return %c0_i32, %c0_i32_0 : i32, i32
  }
  func.func @transform_7(%arg0: i32, %arg1: i32) -> (i32, i32) {
    %c0_i32 = arith.constant 0 : i32
    %c0_i32_0 = arith.constant 0 : i32
    %c0_i32_1 = arith.constant 0 : i32
    return %c0_i32, %c0_i32_0 : i32, i32
  }
  func.func @transform_8(%arg0: i32, %arg1: i32) -> (i32, i32) {
    %c0_i32 = arith.constant 0 : i32
    %c0_i32_0 = arith.constant 0 : i32
    return %arg0, %c0_i32 : i32, i32
  }
}

</mosaic_0001>

<llo_original>
// kernel: tpu_custom_call.1
$region0: #{tpu_custom_call.1}
  #allocation0 [shape = 'u32[]', space=smem, size = 0x4, offset = 0x4, fixed_abs, tag = 'smem constant byte address 0x4 - core index']
  #allocation1 [shape = 'u32[144,128]{1,0:T(1,128)}', space=vmem, size = 0x12000, scoped, tag = 'internal scratch']
  #allocation2 [shape = 'f32[8,256]{1,0:T(8,128)}', space=vmem, size = 0x2000, scoped, tag = 'scratch operand']
  #allocation3 [shape = 'f32[8,256]{1,0:T(8,128)}', space=vmem, size = 0x2000, scoped, tag = 'scratch operand']
  #allocation4 [shape = 'f32[1,1]{1,0:T(1,128)S(1)}', space=vmem, size = 0x200, scoped, tag = 'scoped memory for tpu_custom_call.1']
  %s0 = inlined_call_operand.hbm [shape: f32[8,8,16], index: 0, kind: input, shape index: {}]
  %s1 = inlined_call_operand.hbm [shape: f32[16,512], index: 1, kind: input, shape index: {}]
  %s2 = inlined_call_operand.vmem [shape: f32[1,512], index: 2, kind: input, shape index: {}]
  %s3 = inlined_call_operand.hbm [shape: f32[128,512], index: 3, kind: input, shape index: {}]
  %s4 = inlined_call_operand.hbm [shape: f32[256,512], index: 4, kind: input, shape index: {}]
  %s5 = inlined_call_operand.vmem [shape: f32[1,512], index: 5, kind: input, shape index: {}]
  %s6 = inlined_call_operand.vmem [shape: f32[1,128], index: 6, kind: input, shape index: {}]
  %s7 = inlined_call_operand.<no memory space> [shape: f32[1,1], index: 7, kind: input, shape index: {}]
  %s8 = inlined_call_operand.hbm [shape: f32[8,128], index: 8, kind: output, shape index: {}]
  %s9 = sld [smem:[#allocation0]]
  $region66: #{tpu_custom_call.1} parent=0
    _
  %s11 = ssub.s32 1, %s9
  %s12 = scalar_select 0, %s11, %s9
  %v13 = vstv %s7
  %14 = vst [vmem:[#allocation4] sm:$0x1] %v13
  $region1: #{tpu_custom_call.1} parent=0
    #allocation5 [shape = 'u8[32768]{0}', space=vmem, size = 0x8000, scoped, tag = 'input window, operand 0, single buffered']
    #allocation6 [shape = 's32[1]{0}', space=sflag, size = 0x4, scoped, tag = 'scoped memory for tpu_custom_call.1']
    #allocation7 [shape = 's32[1]{0}', space=sflag, size = 0x4, scoped, tag = 'scoped memory for tpu_custom_call.1']
    #allocation8 [shape = 'u8[32768]{0}', space=vmem, size = 0x8000, scoped, tag = 'input window, operand 1, single buffered']
    #allocation9 [shape = 's32[1]{0}', space=sflag, size = 0x4, scoped, tag = 'scoped memory for tpu_custom_call.1']
    #allocation10 [shape = 'u8[262144]{0}', space=vmem, size = 0x40000, scoped, tag = 'input window, operand 3, single buffered']
    #allocation11 [shape = 'u8[524288]{0}', space=vmem, size = 0x80000, scoped, tag = 'input window, operand 4, single buffered']
    #allocation12 [shape = 's32[1]{0}', space=sflag, size = 0x4, scoped, tag = 'scoped memory for tpu_custom_call.1']
    #allocation13 [shape = 'u8[4096]{0}', space=vmem, size = 0x1000, scoped, tag = 'output window, operand 0, single buffered']
    %15 = vsyncpa [#allocation6], 0
    %16 = vsyncpa [#allocation9], 0
    %17 = vsyncpa [#allocation12], 0
    %18 = vsyncpa [#allocation7], 0
    // Predicated region
    $region2: #{tpu_custom_call.1} parent=1 // pred_check
      _
    $region3: #{tpu_custom_call.1} parent=1 // pred_check_branch
      %20 = sbr.rel (0) target = $region5
    $region4: #{tpu_custom_call.1} parent=1 // pred_region
      %s22 = ssub.s32 1024, 1024
      %23 = vsyncadd [#allocation6], %s22
      %s24 = sshll.u32 [#allocation5], 4
      %s25 = int_to_ptr.vmem [resolvable:$true] %s24
      %30 = dma.hbm_to_vmem [thread:$0]  %s0, 1024, %s25, [#allocation6], 128, 128, 8
    $region5: #{tpu_custom_call.1} parent=1 // pred_fallthru
      _
    // Predicated region
    $region6: #{tpu_custom_call.1} parent=1 // pred_check
      _
    $region7: #{tpu_custom_call.1} parent=1 // pred_check_branch
      %32 = sbr.rel (0) target = $region9
    $region8: #{tpu_custom_call.1} parent=1 // pred_region
      %s34 = ssub.s32 1024, 1024
      %35 = vsyncadd [#allocation9], %s34
      %s36 = sshll.u32 [#allocation8], 4
      %s37 = int_to_ptr.vmem [resolvable:$true] %s36
      %42 = dma.hbm_to_vmem [thread:$0]  %s1, 1024, %s37, [#allocation9], 512, 512, 32
    $region9: #{tpu_custom_call.1} parent=1 // pred_fallthru
      _
    // Predicated region
    $region10: #{tpu_custom_call.1} parent=1 // pred_check
      _
    $region11: #{tpu_custom_call.1} parent=1 // pred_check_branch
      %44 = sbr.rel (0) target = $region13
    $region12: #{tpu_custom_call.1} parent=1 // pred_region
      _
    $region13: #{tpu_custom_call.1} parent=1 // pred_fallthru
      _
    // Predicated region
    $region14: #{tpu_custom_call.1} parent=1 // pred_check
      _
    $region15: #{tpu_custom_call.1} parent=1 // pred_check_branch
      %46 = sbr.rel (0) target = $region17
    $region16: #{tpu_custom_call.1} parent=1 // pred_region
      %s48 = ssub.s32 8192, 8192
      %49 = vsyncadd [#allocation9], %s48
      %s50 = sshll.u32 [#allocation10], 4
      %s51 = int_to_ptr.vmem [resolvable:$true] %s50
      %56 = dma.hbm_to_vmem [thread:$0]  %s3, 8192, %s51, [#allocation9], 512, 512, 32
    $region17: #{tpu_custom_call.1} parent=1 // pred_fallthru
      _
    // Predicated region
    $region18: #{tpu_custom_call.1} parent=1 // pred_check
      _
    $region19: #{tpu_custom_call.1} parent=1 // pred_check_branch
      %58 = sbr.rel (0) target = $region21
    $region20: #{tpu_custom_call.1} parent=1 // pred_region
      %s60 = ssub.s32 16384, 16384
      %61 = vsyncadd [#allocation12], %s60
      %s62 = sshll.u32 [#allocation11], 4
      %s63 = int_to_ptr.vmem [resolvable:$true] %s62
      %68 = dma.hbm_to_vmem [thread:$0]  %s4, 16384, %s63, [#allocation12], 512, 512, 32
    $region21: #{tpu_custom_call.1} parent=1 // pred_fallthru
      _
    // Predicated region
    $region22: #{tpu_custom_call.1} parent=1 // pred_check
      _
    $region23: #{tpu_custom_call.1} parent=1 // pred_check_branch
      %70 = sbr.rel (0) target = $region25
    $region24: #{tpu_custom_call.1} parent=1 // pred_region
      _
    $region25: #{tpu_custom_call.1} parent=1 // pred_fallthru
      _
    // Predicated region
    $region26: #{tpu_custom_call.1} parent=1 // pred_check
      _
    $region27: #{tpu_custom_call.1} parent=1 // pred_check_branch
      %72 = sbr.rel (0) target = $region29
    $region28: #{tpu_custom_call.1} parent=1 // pred_region
      _
    $region29: #{tpu_custom_call.1} parent=1 // pred_fallthru
      _
    // Predicated region
    $region30: #{tpu_custom_call.1} parent=1 // pred_check
      _
    $region31: #{tpu_custom_call.1} parent=1 // pred_check_branch
      %74 = sbr.rel (0) target = $region33
    $region32: #{tpu_custom_call.1} parent=1 // pred_region
      _
    $region33: #{tpu_custom_call.1} parent=1 // pred_fallthru
      _
    // Predicated region
    $region34: #{tpu_custom_call.1} parent=1 // pred_check
      _
    $region35: #{tpu_custom_call.1} parent=1 // pred_check_branch
      %76 = sbr.rel (0) target = $region37
    $region36: #{tpu_custom_call.1} parent=1 // pred_region
      %77 = dma.done [#allocation6], 1024
    $region37: #{tpu_custom_call.1} parent=1 // pred_fallthru
      _
    // Predicated region
    $region38: #{tpu_custom_call.1} parent=1 // pred_check
      _
    $region39: #{tpu_custom_call.1} parent=1 // pred_check_branch
      %79 = sbr.rel (0) target = $region41
    $region40: #{tpu_custom_call.1} parent=1 // pred_region
      %80 = dma.done [#allocation9], 1024
    $region41: #{tpu_custom_call.1} parent=1 // pred_fallthru
      _
    // Predicated region
    $region42: #{tpu_custom_call.1} parent=1 // pred_check
      _
    $region43: #{tpu_custom_call.1} parent=1 // pred_check_branch
      %82 = sbr.rel (0) target = $region45
    $region44: #{tpu_custom_call.1} parent=1 // pred_region
      %83 = dma.done [#allocation9], 8192
    $region45: #{tpu_custom_call.1} parent=1 // pred_fallthru
      _
    // Predicated region
    $region46: #{tpu_custom_call.1} parent=1 // pred_check
      _
    $region47: #{tpu_custom_call.1} parent=1 // pred_check_branch
      %85 = sbr.rel (0) target = $region49
    $region48: #{tpu_custom_call.1} parent=1 // pred_region
      %86 = dma.done [#allocation12], 16384
    $region49: #{tpu_custom_call.1} parent=1 // pred_fallthru
      _
    %p87 = scmp.eq.s32.totalorder 0, 0
    // Predicated region
    $region50: #{tpu_custom_call.1} parent=1 // pred_check
      %p88 = pneg %p87
    $region51: #{tpu_custom_call.1} parent=1 // pred_check_branch
      %90 = sbr.rel (%p88) target = $region53
    $region52: #{tpu_custom_call.1} parent=1 // pred_region
      %91 = vst [vmem:[#allocation2] sm:$0xff] 0.0
      %92 = vst [vmem:[#allocation2 + $0x8] sm:$0xff] 0.0
      %93 = vst [vmem:[#allocation3] sm:$0xff] 0.0
      %94 = vst [vmem:[#allocation3 + $0x8] sm:$0xff] 0.0
    $region53: #{tpu_custom_call.1} parent=1 // pred_fallthru
      _
    %v95 = vld [vmem:[#allocation8] sm:$0xff]
    %v96 = vld [vmem:[#allocation8 + $0x8] sm:$0xff]
    %v97 = vld [vmem:[#allocation8 + $0x10] sm:$0xff]
    %v98 = vld [vmem:[#allocation8 + $0x18] sm:$0xff]
    %v99 = vld [vmem:[#allocation8 + $0x20] sm:$0xff]
    %v100 = vld [vmem:[#allocation8 + $0x28] sm:$0xff]
    %v101 = vld [vmem:[#allocation8 + $0x30] sm:$0xff]
    %v102 = vld [vmem:[#allocation8 + $0x38] sm:$0xff]
    %v103 = vld [vmem:[#allocation10] sm:$0xff]
    %v104 = vld [vmem:[#allocation10 + $0x8] sm:$0xff]
    %v105 = vld [vmem:[#allocation10 + $0x10] sm:$0xff]
    %v106 = vld [vmem:[#allocation10 + $0x18] sm:$0xff]
    %v107 = vld [vmem:[#allocation10 + $0x20] sm:$0xff]
    %v108 = vld [vmem:[#allocation10 + $0x28] sm:$0xff]
    %v109 = vld [vmem:[#allocation10 + $0x30] sm:$0xff]
    %v110 = vld [vmem:[#allocation10 + $0x38] sm:$0xff]
    %v111 = vld [vmem:[#allocation10 + $0x40] sm:$0xff]
    %v112 = vld [vmem:[#allocation10 + $0x48] sm:$0xff]
    %v113 = vld [vmem:[#allocation10 + $0x50] sm:$0xff]
    %v114 = vld [vmem:[#allocation10 + $0x58] sm:$0xff]
    %v115 = vld [vmem:[#allocation10 + $0x60] sm:$0xff]
    %v116 = vld [vmem:[#allocation10 + $0x68] sm:$0xff]
    %v117 = vld [vmem:[#allocation10 + $0x70] sm:$0xff]
    %v118 = vld [vmem:[#allocation10 + $0x78] sm:$0xff]
    %v119 = vld [vmem:[#allocation10 + $0x80] sm:$0xff]
    %v120 = vld [vmem:[#allocation10 + $0x88] sm:$0xff]
    %v121 = vld [vmem:[#allocation10 + $0x90] sm:$0xff]
    %v122 = vld [vmem:[#allocation10 + $0x98] sm:$0xff]
    %v123 = vld [vmem:[#allocation10 + $0xa0] sm:$0xff]
    %v124 = vld [vmem:[#allocation10 + $0xa8] sm:$0xff]
    %v125 = vld [vmem:[#allocation10 + $0xb0] sm:$0xff]
    %v126 = vld [vmem:[#allocation10 + $0xb8] sm:$0xff]
    %v127 = vld [vmem:[#allocation10 + $0xc0] sm:$0xff]
    %v128 = vld [vmem:[#allocation10 + $0xc8] sm:$0xff]
    %v129 = vld [vmem:[#allocation10 + $0xd0] sm:$0xff]
    %v130 = vld [vmem:[#allocation10 + $0xd8] sm:$0xff]
    %v131 = vld [vmem:[#allocation10 + $0xe0] sm:$0xff]
    %v132 = vld [vmem:[#allocation10 + $0xe8] sm:$0xff]
    %v133 = vld [vmem:[#allocation10 + $0xf0] sm:$0xff]
    %v134 = vld [vmem:[#allocation10 + $0xf8] sm:$0xff]
    %v135 = vld [vmem:[#allocation10 + $0x100] sm:$0xff]
    %v136 = vld [vmem:[#allocation10 + $0x108] sm:$0xff]
    %v137 = vld [vmem:[#allocation10 + $0x110] sm:$0xff]
    %v138 = vld [vmem:[#allocation10 + $0x118] sm:$0xff]
    %v139 = vld [vmem:[#allocation10 + $0x120] sm:$0xff]
    %v140 = vld [vmem:[#allocation10 + $0x128] sm:$0xff]
    %v141 = vld [vmem:[#allocation10 + $0x130] sm:$0xff]
    %v142 = vld [vmem:[#allocation10 + $0x138] sm:$0xff]
    %v143 = vld [vmem:[#allocation10 + $0x140] sm:$0xff]
    %v144 = vld [vmem:[#allocation10 + $0x148] sm:$0xff]
    %v145 = vld [vmem:[#allocation10 + $0x150] sm:$0xff]
    %v146 = vld [vmem:[#allocation10 + $0x158] sm:$0xff]
    %v147 = vld [vmem:[#allocation10 + $0x160] sm:$0xff]
    %v148 = vld [vmem:[#allocation10 + $0x168] sm:$0xff]
    %v149 = vld [vmem:[#allocation10 + $0x170] sm:$0xff]
    %v150 = vld [vmem:[#allocation10 + $0x178] sm:$0xff]
    %v151 = vld [vmem:[#allocation10 + $0x180] sm:$0xff]
    %v152 = vld [vmem:[#allocation10 + $0x188] sm:$0xff]
    %v153 = vld [vmem:[#allocation10 + $0x190] sm:$0xff]
    %v154 = vld [vmem:[#allocation10 + $0x198] sm:$0xff]
    %v155 = vld [vmem:[#allocation10 + $0x1a0] sm:$0xff]
    %v156 = vld [vmem:[#allocation10 + $0x1a8] sm:$0xff]
    %v157 = vld [vmem:[#allocation10 + $0x1b0] sm:$0xff]
    %v158 = vld [vmem:[#allocation10 + $0x1b8] sm:$0xff]
    %v159 = vld [vmem:[#allocation10 + $0x1c0] sm:$0xff]
    %v160 = vld [vmem:[#allocation10 + $0x1c8] sm:$0xff]
    %v161 = vld [vmem:[#allocation10 + $0x1d0] sm:$0xff]
    %v162 = vld [vmem:[#allocation10 + $0x1d8] sm:$0xff]
    %v163 = vld [vmem:[#allocation10 + $0x1e0] sm:$0xff]
    %v164 = vld [vmem:[#allocation10 + $0x1e8] sm:$0xff]
    %v165 = vld [vmem:[#allocation10 + $0x1f0] sm:$0xff]
    %v166 = vld [vmem:[#allocation10 + $0x1f8] sm:$0xff]
    %v167 = vld [vmem:[#allocation11] sm:$0xff]
    %v168 = vld [vmem:[#allocation11 + $0x8] sm:$0xff]
    %v169 = vld [vmem:[#allocation11 + $0x10] sm:$0xff]
    %v170 = vld [vmem:[#allocation11 + $0x18] sm:$0xff]
    %v171 = vld [vmem:[#allocation11 + $0x20] sm:$0xff]
    %v172 = vld [vmem:[#allocation11 + $0x28] sm:$0xff]
    %v173 = vld [vmem:[#allocation11 + $0x30] sm:$0xff]
    %v174 = vld [vmem:[#allocation11 + $0x38] sm:$0xff]
    %v175 = vld [vmem:[#allocation11 + $0x40] sm:$0xff]
    %v176 = vld [vmem:[#allocation11 + $0x48] sm:$0xff]
    %v177 = vld [vmem:[#allocation11 + $0x50] sm:$0xff]
    %v178 = vld [vmem:[#allocation11 + $0x58] sm:$0xff]
    %v179 = vld [vmem:[#allocation11 + $0x60] sm:$0xff]
    %v180 = vld [vmem:[#allocation11 + $0x68] sm:$0xff]
    %v181 = vld [vmem:[#allocation11 + $0x70] sm:$0xff]
    %v182 = vld [vmem:[#allocation11 + $0x78] sm:$0xff]
    %v183 = vld [vmem:[#allocation11 + $0x80] sm:$0xff]
    %v184 = vld [vmem:[#allocation11 + $0x88] sm:$0xff]
    %v185 = vld [vmem:[#allocation11 + $0x90] sm:$0xff]
    %v186 = vld [vmem:[#allocation11 + $0x98] sm:$0xff]
    %v187 = vld [vmem:[#allocation11 + $0xa0] sm:$0xff]
    %v188 = vld [vmem:[#allocation11 + $0xa8] sm:$0xff]
    %v189 = vld [vmem:[#allocation11 + $0xb0] sm:$0xff]
    %v190 = vld [vmem:[#allocation11 + $0xb8] sm:$0xff]
    %v191 = vld [vmem:[#allocation11 + $0xc0] sm:$0xff]
    %v192 = vld [vmem:[#allocation11 + $0xc8] sm:$0xff]
    %v193 = vld [vmem:[#allocation11 + $0xd0] sm:$0xff]
    %v194 = vld [vmem:[#allocation11 + $0xd8] sm:$0xff]
    %v195 = vld [vmem:[#allocation11 + $0xe0] sm:$0xff]
    %v196 = vld [vmem:[#allocation11 + $0xe8] sm:$0xff]
    %v197 = vld [vmem:[#allocation11 + $0xf0] sm:$0xff]
    %v198 = vld [vmem:[#allocation11 + $0xf8] sm:$0xff]
    %v199 = vld [vmem:[#allocation11 + $0x100] sm:$0xff]
    %v200 = vld [vmem:[#allocation11 + $0x108] sm:$0xff]
    %v201 = vld [vmem:[#allocation11 + $0x110] sm:$0xff]
    %v202 = vld [vmem:[#allocation11 + $0x118] sm:$0xff]
    %v203 = vld [vmem:[#allocation11 + $0x120] sm:$0xff]
    %v204 = vld [vmem:[#allocation11 + $0x128] sm:$0xff]
    %v205 = vld [vmem:[#allocation11 + $0x130] sm:$0xff]
    %v206 = vld [vmem:[#allocation11 + $0x138] sm:$0xff]
    %v207 = vld [vmem:[#allocation11 + $0x140] sm:$0xff]
    %v208 = vld [vmem:[#allocation11 + $0x148] sm:$0xff]
    %v209 = vld [vmem:[#allocation11 + $0x150] sm:$0xff]
    %v210 = vld [vmem:[#allocation11 + $0x158] sm:$0xff]
    %v211 = vld [vmem:[#allocation11 + $0x160] sm:$0xff]
    %v212 = vld [vmem:[#allocation11 + $0x168] sm:$0xff]
    %v213 = vld [vmem:[#allocation11 + $0x170] sm:$0xff]
    %v214 = vld [vmem:[#allocation11 + $0x178] sm:$0xff]
    %v215 = vld [vmem:[#allocation11 + $0x180] sm:$0xff]
    %v216 = vld [vmem:[#allocation11 + $0x188] sm:$0xff]
    %v217 = vld [vmem:[#allocation11 + $0x190] sm:$0xff]
    %v218 = vld [vmem:[#allocation11 + $0x198] sm:$0xff]
    %v219 = vld [vmem:[#allocation11 + $0x1a0] sm:$0xff]
    %v220 = vld [vmem:[#allocation11 + $0x1a8] sm:$0xff]
    %v221 = vld [vmem:[#allocation11 + $0x1b0] sm:$0xff]
    %v222 = vld [vmem:[#allocation11 + $0x1b8] sm:$0xff]
    %v223 = vld [vmem:[#allocation11 + $0x1c0] sm:$0xff]
    %v224 = vld [vmem:[#allocation11 + $0x1c8] sm:$0xff]
    %v225 = vld [vmem:[#allocation11 + $0x1d0] sm:$0xff]
    %v226 = vld [vmem:[#allocation11 + $0x1d8] sm:$0xff]
    %v227 = vld [vmem:[#allocation11 + $0x1e0] sm:$0xff]
    %v228 = vld [vmem:[#allocation11 + $0x1e8] sm:$0xff]
    %v229 = vld [vmem:[#allocation11 + $0x1f0] sm:$0xff]
    %v230 = vld [vmem:[#allocation11 + $0x1f8] sm:$0xff]
    %v231 = vld [vmem:[#allocation11 + $0x200] sm:$0xff]
    %v232 = vld [vmem:[#allocation11 + $0x208] sm:$0xff]
    %v233 = vld [vmem:[#allocation11 + $0x210] sm:$0xff]
    %v234 = vld [vmem:[#allocation11 + $0x218] sm:$0xff]
    %v235 = vld [vmem:[#allocation11 + $0x220] sm:$0xff]
    %v236 = vld [vmem:[#allocation11 + $0x228] sm:$0xff]
    %v237 = vld [vmem:[#allocation11 + $0x230] sm:$0xff]
    %v238 = vld [vmem:[#allocation11 + $0x238] sm:$0xff]
    %v239 = vld [vmem:[#allocation11 + $0x240] sm:$0xff]
    %v240 = vld [vmem:[#allocation11 + $0x248] sm:$0xff]
    %v241 = vld [vmem:[#allocation11 + $0x250] sm:$0xff]
    %v242 = vld [vmem:[#allocation11 + $0x258] sm:$0xff]
    %v243 = vld [vmem:[#allocation11 + $0x260] sm:$0xff]
    %v244 = vld [vmem:[#allocation11 + $0x268] sm:$0xff]
    %v245 = vld [vmem:[#allocation11 + $0x270] sm:$0xff]
    %v246 = vld [vmem:[#allocation11 + $0x278] sm:$0xff]
    %v247 = vld [vmem:[#allocation11 + $0x280] sm:$0xff]
    %v248 = vld [vmem:[#allocation11 + $0x288] sm:$0xff]
    %v249 = vld [vmem:[#allocation11 + $0x290] sm:$0xff]
    %v250 = vld [vmem:[#allocation11 + $0x298] sm:$0xff]
    %v251 = vld [vmem:[#allocation11 + $0x2a0] sm:$0xff]
    %v252 = vld [vmem:[#allocation11 + $0x2a8] sm:$0xff]
    %v253 = vld [vmem:[#allocation11 + $0x2b0] sm:$0xff]
    %v254 = vld [vmem:[#allocation11 + $0x2b8] sm:$0xff]
    %v255 = vld [vmem:[#allocation11 + $0x2c0] sm:$0xff]
    %v256 = vld [vmem:[#allocation11 + $0x2c8] sm:$0xff]
    %v257 = vld [vmem:[#allocation11 + $0x2d0] sm:$0xff]
    %v258 = vld [vmem:[#allocation11 + $0x2d8] sm:$0xff]
    %v259 = vld [vmem:[#allocation11 + $0x2e0] sm:$0xff]
    %v260 = vld [vmem:[#allocation11 + $0x2e8] sm:$0xff]
    %v261 = vld [vmem:[#allocation11 + $0x2f0] sm:$0xff]
    %v262 = vld [vmem:[#allocation11 + $0x2f8] sm:$0xff]
    %v263 = vld [vmem:[#allocation11 + $0x300] sm:$0xff]
    %v264 = vld [vmem:[#allocation11 + $0x308] sm:$0xff]
    %v265 = vld [vmem:[#allocation11 + $0x310] sm:$0xff]
    %v266 = vld [vmem:[#allocation11 + $0x318] sm:$0xff]
    %v267 = vld [vmem:[#allocation11 + $0x320] sm:$0xff]
    %v268 = vld [vmem:[#allocation11 + $0x328] sm:$0xff]
    %v269 = vld [vmem:[#allocation11 + $0x330] sm:$0xff]
    %v270 = vld [vmem:[#allocation11 + $0x338] sm:$0xff]
    %v271 = vld [vmem:[#allocation11 + $0x340] sm:$0xff]
    %v272 = vld [vmem:[#allocation11 + $0x348] sm:$0xff]
    %v273 = vld [vmem:[#allocation11 + $0x350] sm:$0xff]
    %v274 = vld [vmem:[#allocation11 + $0x358] sm:$0xff]
    %v275 = vld [vmem:[#allocation11 + $0x360] sm:$0xff]
    %v276 = vld [vmem:[#allocation11 + $0x368] sm:$0xff]
    %v277 = vld [vmem:[#allocation11 + $0x370] sm:$0xff]
    %v278 = vld [vmem:[#allocation11 + $0x378] sm:$0xff]
    %v279 = vld [vmem:[#allocation11 + $0x380] sm:$0xff]
    %v280 = vld [vmem:[#allocation11 + $0x388] sm:$0xff]
    %v281 = vld [vmem:[#allocation11 + $0x390] sm:$0xff]
    %v282 = vld [vmem:[#allocation11 + $0x398] sm:$0xff]
    %v283 = vld [vmem:[#allocation11 + $0x3a0] sm:$0xff]
    %v284 = vld [vmem:[#allocation11 + $0x3a8] sm:$0xff]
    %v285 = vld [vmem:[#allocation11 + $0x3b0] sm:$0xff]
    %v286 = vld [vmem:[#allocation11 + $0x3b8] sm:$0xff]
    %v287 = vld [vmem:[#allocation11 + $0x3c0] sm:$0xff]
    %v288 = vld [vmem:[#allocation11 + $0x3c8] sm:$0xff]
    %v289 = vld [vmem:[#allocation11 + $0x3d0] sm:$0xff]
    %v290 = vld [vmem:[#allocation11 + $0x3d8] sm:$0xff]
    %v291 = vld [vmem:[#allocation11 + $0x3e0] sm:$0xff]
    %v292 = vld [vmem:[#allocation11 + $0x3e8] sm:$0xff]
    %v293 = vld [vmem:[#allocation11 + $0x3f0] sm:$0xff]
    %v294 = vld [vmem:[#allocation11 + $0x3f8] sm:$0xff]
    %v295 = vld [vmem:[%s2] sm:$0xf]
    %v296 = vld [vmem:[%s5] sm:$0xf]
    %v298 = vlaneseq
    %v299 = vshrl.u32 %v298, 7
    %v300 = vsub.s32 0, %v299
    %v301 = vrot.slane %v296, %v300
    %v302 = vlaneseq
    %v303 = vshrl.u32 %v302, 7
    %v304 = vsub.s32 1, %v303
    %v305 = vrot.slane %v296, %v304
    %v306 = vlaneseq
    %v307 = vshrl.u32 %v306, 7
    %v308 = vsub.s32 2, %v307
    %v309 = vrot.slane %v296, %v308
    %v310 = vlaneseq
    %v311 = vshrl.u32 %v310, 7
    %v312 = vsub.s32 3, %v311
    %v313 = vrot.slane %v296, %v312
    %s318 = smul.u32 0, 8
    %s319 = scalar_lea.vmem [#allocation5], %s318
    %v320 = vld [vmem:[%s319] sm:$0xff]
    %v321 = vld [vmem:[%s319 + $0x8] sm:$0xff]
    %v322 = vld [vmem:[%s319 + $0x10] sm:$0xff]
    %v323 = vld [vmem:[%s319 + $0x18] sm:$0xff]
    %v324 = vld [vmem:[%s319 + $0x20] sm:$0xff]
    %v325 = vld [vmem:[%s319 + $0x28] sm:$0xff]
    %v326 = vld [vmem:[%s319 + $0x30] sm:$0xff]
    %v327 = vld [vmem:[%s319 + $0x38] sm:$0xff]
    %v329 = vlaneseq
    %v330 = vshrl.u32 %v329, 7
    %v331 = vsub.s32 0, %v330
    %v332 = vrot.slane %v295, %v331
    %v333 = vlaneseq
    %v334 = vshrl.u32 %v333, 7
    %v335 = vsub.s32 1, %v334
    %v336 = vrot.slane %v295, %v335
    %v337 = vlaneseq
    %v338 = vshrl.u32 %v337, 7
    %v339 = vsub.s32 2, %v338
    %v340 = vrot.slane %v295, %v339
    %v341 = vlaneseq
    %v342 = vshrl.u32 %v341, 7
    %v343 = vsub.s32 3, %v342
    %v344 = vrot.slane %v295, %v343
    %vm349 = vcmask 130048
    %v351 = vsel %vm349, %v320, 0
    %v354 = vsel %vm349, %v321, 0
    %v357 = vsel %vm349, %v322, 0
    %v360 = vsel %vm349, %v323, 0
    %v363 = vsel %vm349, %v324, 0
    %v366 = vsel %vm349, %v325, 0
    %v369 = vsel %vm349, %v326, 0
    %v372 = vsel %vm349, %v327, 0
    %374 = vmatprep.subr.mxu0 %v96
    %375 = vmatpush1.msra.mxu0 %v95
    %376 = vmatprep.subr.mxu0 %v100
    %377 = vmatpush1.msra.mxu0 %v99
    %378 = vmatprep.subr.mxu0 0.0
    %379 = vmatpush1.msra.mxu0 0.0
    %380 = vmatprep.subr.mxu0 0.0
    %381 = vmatpush1.msra.mxu0 0.0
    %382 = vmatprep.subr.mxu0 0.0
    %383 = vmatpush1.msra.mxu0 0.0
    %384 = vmatprep.subr.mxu0 0.0
    %385 = vmatpush1.msra.mxu0 0.0
    %386 = vmatprep.subr.mxu0 0.0
    %387 = vmatpush1.msra.mxu0 0.0
    %388 = vmatprep.subr.mxu0 0.0
    %389 = vmatpush1.msra.mxu0 0.0
    %390 = vmatprep.subr.mxu0 0.0
    %391 = vmatpush1.msra.mxu0 0.0
    %392 = vmatprep.subr.mxu0 0.0
    %393 = vmatpush1.msra.mxu0 0.0
    %394 = vmatprep.subr.mxu0 0.0
    %395 = vmatpush1.msra.mxu0 0.0
    %396 = vmatprep.subr.mxu0 0.0
    %397 = vmatpush1.msra.mxu0 0.0
    %398 = vmatprep.subr.mxu0 0.0
    %399 = vmatpush1.msra.mxu0 0.0
    %400 = vmatprep.subr.mxu0 0.0
    %401 = vmatpush1.msra.mxu0 0.0
    %402 = vmatprep.subr.mxu0 0.0
    %403 = vmatpush1.msra.mxu0 0.0
    %404 = vmatprep.subr.mxu0 0.0
    %405 = vmatpush1.msra.mxu0 0.0
    %406 = vmatprep.subr.mxu0 0.0
    %407 = vmatpush1.msra.mxu0 0.0
    %408 = vmatprep.subr.mxu0 0.0
    %409 = vmatpush1.msra.mxu0 0.0
    %410 = vmatprep.subr.mxu0 0.0
    %411 = vmatpush1.msra.mxu0 0.0
    %412 = vmatprep.subr.mxu0 0.0
    %413 = vmatpush1.msra.mxu0 0.0
    %414 = vmatprep.subr.mxu0 0.0
    %415 = vmatpush1.msra.mxu0 0.0
    %416 = vmatprep.subr.mxu0 0.0
    %417 = vmatpush1.msra.mxu0 0.0
    %418 = vmatprep.subr.mxu0 0.0
    %419 = vmatpush1.msra.mxu0 0.0
    %420 = vmatprep.subr.mxu0 0.0
    %421 = vmatpush1.msra.mxu0 0.0
    %422 = vmatprep.subr.mxu0 0.0
    %423 = vmatpush1.msra.mxu0 0.0
    %424 = vmatprep.subr.mxu0 0.0
    %425 = vmatpush1.msra.mxu0 0.0
    %426 = vmatprep.subr.mxu0 0.0
    %427 = vmatpush1.msra.mxu0 0.0
    %428 = vmatprep.subr.mxu0 0.0
    %429 = vmatpush1.msra.mxu0 0.0
    %430 = vmatprep.subr.mxu0 0.0
    %431 = vmatpush1.msra.mxu0 0.0
    %432 = vmatprep.subr.mxu0 0.0
    %433 = vmatpush1.msra.mxu0 0.0
    %434 = vmatprep.subr.mxu0 0.0
    %435 = vmatpush1.msra.mxu0 0.0
    %436 = vmatprep.subr.mxu0 0.0
    %437 = vmatpush1.msra.mxu0 0.0
    %438 = vmatprep.mubr.f32.mxu0 0.0
    %439 = vmatmul.mubr.f32.gmra.mrb[0].mxu0 %v351
    %v440 = vpop.f32.mrb[0].mxu0
    %v441 = vadd.f32 %v332, %v440
    %v442 = vpop.f32.mrb[0].mxu0
    %v443 = vadd.f32 %v336, %v442
    %444 = vmatprep.mubr.f32.mxu0 0.0
    %445 = vmatmul.mubr.f32.gmra.mrb[0].mxu0 %v354
    %v446 = vpop.f32.mrb[0].mxu0
    %v447 = vadd.f32 %v332, %v446
    %v448 = vpop.f32.mrb[0].mxu0
    %v449 = vadd.f32 %v336, %v448
    %450 = vmatprep.mubr.f32.mxu0 0.0
    %451 = vmatmul.mubr.f32.gmra.mrb[0].mxu0 %v357
    %v452 = vpop.f32.mrb[0].mxu0
    %v453 = vadd.f32 %v332, %v452
    %v454 = vpop.f32.mrb[0].mxu0
    %v455 = vadd.f32 %v336, %v454
    %456 = vmatprep.mubr.f32.mxu0 0.0
    %457 = vmatmul.mubr.f32.gmra.mrb[0].mxu0 %v360
    %v458 = vpop.f32.mrb[0].mxu0
    %v459 = vadd.f32 %v332, %v458
    %v460 = vpop.f32.mrb[0].mxu0
    %v461 = vadd.f32 %v336, %v460
    %462 = vmatprep.mubr.f32.mxu0 0.0
    %463 = vmatmul.mubr.f32.gmra.mrb[0].mxu0 %v363
    %v464 = vpop.f32.mrb[0].mxu0
    %v465 = vadd.f32 %v332, %v464
    %v466 = vpop.f32.mrb[0].mxu0
    %v467 = vadd.f32 %v336, %v466
    %468 = vmatprep.mubr.f32.mxu0 0.0
    %469 = vmatmul.mubr.f32.gmra.mrb[0].mxu0 %v366
    %v470 = vpop.f32.mrb[0].mxu0
    %v471 = vadd.f32 %v332, %v470
    %v472 = vpop.f32.mrb[0].mxu0
    %v473 = vadd.f32 %v336, %v472
    %474 = vmatprep.mubr.f32.mxu0 0.0
    %475 = vmatmul.mubr.f32.gmra.mrb[0].mxu0 %v369
    %v476 = vpop.f32.mrb[0].mxu0
    %v477 = vadd.f32 %v332, %v476
    %v478 = vpop.f32.mrb[0].mxu0
    %v479 = vadd.f32 %v336, %v478
    %480 = vmatprep.mubr.f32.mxu0 0.0
    %481 = vmatmul.mubr.f32.gmra.mrb[0].mxu0 %v372
    %v482 = vpop.f32.mrb[0].mxu0
    %v483 = vadd.f32 %v332, %v482
    %v484 = vpop.f32.mrb[0].mxu0
    %v485 = vadd.f32 %v336, %v484
    %486 = vdwg.mxu0
    %487 = vmatprep.subr.mxu0 %v98
    %488 = vmatpush1.msra.mxu0 %v97
    %489 = vmatprep.subr.mxu0 %v102
    %490 = vmatpush1.msra.mxu0 %v101
    %491 = vmatprep.subr.mxu0 0.0
    %492 = vmatpush1.msra.mxu0 0.0
    %493 = vmatprep.subr.mxu0 0.0
    %494 = vmatpush1.msra.mxu0 0.0
    %495 = vmatprep.subr.mxu0 0.0
    %496 = vmatpush1.msra.mxu0 0.0
    %497 = vmatprep.subr.mxu0 0.0
    %498 = vmatpush1.msra.mxu0 0.0
    %499 = vmatprep.subr.mxu0 0.0
    %500 = vmatpush1.msra.mxu0 0.0
    %501 = vmatprep.subr.mxu0 0.0
    %502 = vmatpush1.msra.mxu0 0.0
    %503 = vmatprep.subr.mxu0 0.0
    %504 = vmatpush1.msra.mxu0 0.0
    %505 = vmatprep.subr.mxu0 0.0
    %506 = vmatpush1.msra.mxu0 0.0
    %507 = vmatprep.subr.mxu0 0.0
    %508 = vmatpush1.msra.mxu0 0.0
    %509 = vmatprep.subr.mxu0 0.0
    %510 = vmatpush1.msra.mxu0 0.0
    %511 = vmatprep.subr.mxu0 0.0
    %512 = vmatpush1.msra.mxu0 0.0
    %513 = vmatprep.subr.mxu0 0.0
    %514 = vmatpush1.msra.mxu0 0.0
    %515 = vmatprep.subr.mxu0 0.0
    %516 = vmatpush1.msra.mxu0 0.0
    %517 = vmatprep.subr.mxu0 0.0
    %518 = vmatpush1.msra.mxu0 0.0
    %519 = vmatprep.subr.mxu0 0.0
    %520 = vmatpush1.msra.mxu0 0.0
    %521 = vmatprep.subr.mxu0 0.0
    %522 = vmatpush1.msra.mxu0 0.0
    %523 = vmatprep.subr.mxu0 0.0
    %524 = vmatpush1.msra.mxu0 0.0
    %525 = vmatprep.subr.mxu0 0.0
    %526 = vmatpush1.msra.mxu0 0.0
    %527 = vmatprep.subr.mxu0 0.0
    %528 = vmatpush1.msra.mxu0 0.0
    %529 = vmatprep.subr.mxu0 0.0
    %530 = vmatpush1.msra.mxu0 0.0
    %531 = vmatprep.subr.mxu0 0.0
    %532 = vmatpush1.msra.mxu0 0.0
    %533 = vmatprep.subr.mxu0 0.0
    %534 = vmatpush1.msra.mxu0 0.0
    %535 = vmatprep.subr.mxu0 0.0
    %536 = vmatpush1.msra.mxu0 0.0
    %537 = vmatprep.subr.mxu0 0.0
    %538 = vmatpush1.msra.mxu0 0.0
    %539 = vmatprep.subr.mxu0 0.0
    %540 = vmatpush1.msra.mxu0 0.0
    %541 = vmatprep.subr.mxu0 0.0
    %542 = vmatpush1.msra.mxu0 0.0
    %543 = vmatprep.subr.mxu0 0.0
    %544 = vmatpush1.msra.mxu0 0.0
    %545 = vmatprep.subr.mxu0 0.0
    %546 = vmatpush1.msra.mxu0 0.0
    %547 = vmatprep.subr.mxu0 0.0
    %548 = vmatpush1.msra.mxu0 0.0
    %549 = vmatprep.subr.mxu0 0.0
    %550 = vmatpush1.msra.mxu0 0.0
    %551 = vmatprep.mubr.f32.mxu0 0.0
    %552 = vmatmul.mubr.f32.gmra.mrb[0].mxu0 %v351
    %v553 = vpop.f32.mrb[0].mxu0
    %v554 = vadd.f32 %v340, %v553
    %v555 = vpop.f32.mrb[0].mxu0
    %v556 = vadd.f32 %v344, %v555
    %557 = vmatprep.mubr.f32.mxu0 0.0
    %558 = vmatmul.mubr.f32.gmra.mrb[0].mxu0 %v354
    %v559 = vpop.f32.mrb[0].mxu0
    %v560 = vadd.f32 %v340, %v559
    %v561 = vpop.f32.mrb[0].mxu0
    %v562 = vadd.f32 %v344, %v561
    %563 = vmatprep.mubr.f32.mxu0 0.0
    %564 = vmatmul.mubr.f32.gmra.mrb[0].mxu0 %v357
    %v565 = vpop.f32.mrb[0].mxu0
    %v566 = vadd.f32 %v340, %v565
    %v567 = vpop.f32.mrb[0].mxu0
    %v568 = vadd.f32 %v344, %v567
    %569 = vmatprep.mubr.f32.mxu0 0.0
    %570 = vmatmul.mubr.f32.gmra.mrb[0].mxu0 %v360
    %v571 = vpop.f32.mrb[0].mxu0
    %v572 = vadd.f32 %v340, %v571
    %v573 = vpop.f32.mrb[0].mxu0
    %v574 = vadd.f32 %v344, %v573
    %575 = vmatprep.mubr.f32.mxu0 0.0
    %576 = vmatmul.mubr.f32.gmra.mrb[0].mxu0 %v363
    %v577 = vpop.f32.mrb[0].mxu0
    %v578 = vadd.f32 %v340, %v577
    %v579 = vpop.f32.mrb[0].mxu0
    %v580 = vadd.f32 %v344, %v579
    %581 = vmatprep.mubr.f32.mxu0 0.0
    %582 = vmatmul.mubr.f32.gmra.mrb[0].mxu0 %v366
    %v583 = vpop.f32.mrb[0].mxu0
    %v584 = vadd.f32 %v340, %v583
    %v585 = vpop.f32.mrb[0].mxu0
    %v586 = vadd.f32 %v344, %v585
    %587 = vmatprep.mubr.f32.mxu0 0.0
    %588 = vmatmul.mubr.f32.gmra.mrb[0].mxu0 %v369
    %v589 = vpop.f32.mrb[0].mxu0
    %v590 = vadd.f32 %v340, %v589
    %v591 = vpop.f32.mrb[0].mxu0
    %v592 = vadd.f32 %v344, %v591
    %593 = vmatprep.mubr.f32.mxu0 0.0
    %594 = vmatmul.mubr.f32.gmra.mrb[0].mxu0 %v372
    %v595 = vpop.f32.mrb[0].mxu0
    %v596 = vadd.f32 %v340, %v595
    %v597 = vpop.f32.mrb[0].mxu0
    %v598 = vadd.f32 %v344, %v597
    %599 = vdwg.mxu0
    %v600 = vld [vmem:[#allocation2] sm:$0xff]
    %v601 = vld [vmem:[#allocation3] sm:$0xff]
    %602 = vmatprep.subr.mxu0 %v104
    %603 = vmatpush1.msra.mxu0 %v103
    %604 = vmatprep.subr.mxu0 %v108
    %605 = vmatpush1.msra.mxu0 %v107
    %606 = vmatprep.subr.mxu0 %v112
    %607 = vmatpush1.msra.mxu0 %v111
    %608 = vmatprep.subr.mxu0 %v116
    %609 = vmatpush1.msra.mxu0 %v115
    %610 = vmatprep.subr.mxu0 %v120
    %611 = vmatpush1.msra.mxu0 %v119
    %612 = vmatprep.subr.mxu0 %v124
    %613 = vmatpush1.msra.mxu0 %v123
    %614 = vmatprep.subr.mxu0 %v128
    %615 = vmatpush1.msra.mxu0 %v127
    %616 = vmatprep.subr.mxu0 %v132
    %617 = vmatpush1.msra.mxu0 %v131
    %618 = vmatprep.subr.mxu0 %v136
    %619 = vmatpush1.msra.mxu0 %v135
    %620 = vmatprep.subr.mxu0 %v140
    %621 = vmatpush1.msra.mxu0 %v139
    %622 = vmatprep.subr.mxu0 %v144
    %623 = vmatpush1.msra.mxu0 %v143
    %624 = vmatprep.subr.mxu0 %v148
    %625 = vmatpush1.msra.mxu0 %v147
    %626 = vmatprep.subr.mxu0 %v152
    %627 = vmatpush1.msra.mxu0 %v151
    %628 = vmatprep.subr.mxu0 %v156
    %629 = vmatpush1.msra.mxu0 %v155
    %630 = vmatprep.subr.mxu0 %v160
    %631 = vmatpush1.msra.mxu0 %v159
    %632 = vmatprep.subr.mxu0 %v164
    %633 = vmatpush1.msra.mxu0 %v163
    %634 = vmatprep.subr.mxu0 0.0
    %635 = vmatpush1.msra.mxu0 0.0
    %636 = vmatprep.subr.mxu0 0.0
    %637 = vmatpush1.msra.mxu0 0.0
    %638 = vmatprep.subr.mxu0 0.0
    %639 = vmatpush1.msra.mxu0 0.0
    %640 = vmatprep.subr.mxu0 0.0
    %641 = vmatpush1.msra.mxu0 0.0
    %642 = vmatprep.subr.mxu0 0.0
    %643 = vmatpush1.msra.mxu0 0.0
    %644 = vmatprep.subr.mxu0 0.0
    %645 = vmatpush1.msra.mxu0 0.0
    %646 = vmatprep.subr.mxu0 0.0
    %647 = vmatpush1.msra.mxu0 0.0
    %648 = vmatprep.subr.mxu0 0.0
    %649 = vmatpush1.msra.mxu0 0.0
    %650 = vmatprep.subr.mxu0 0.0
    %651 = vmatpush1.msra.mxu0 0.0
    %652 = vmatprep.subr.mxu0 0.0
    %653 = vmatpush1.msra.mxu0 0.0
    %654 = vmatprep.subr.mxu0 0.0
    %655 = vmatpush1.msra.mxu0 0.0
    %656 = vmatprep.subr.mxu0 0.0
    %657 = vmatpush1.msra.mxu0 0.0
    %658 = vmatprep.subr.mxu0 0.0
    %659 = vmatpush1.msra.mxu0 0.0
    %660 = vmatprep.subr.mxu0 0.0
    %661 = vmatpush1.msra.mxu0 0.0
    %662 = vmatprep.subr.mxu0 0.0
    %663 = vmatpush1.msra.mxu0 0.0
    %664 = vmatprep.subr.mxu0 0.0
    %665 = vmatpush1.msra.mxu0 0.0
    %666 = vmatprep.mubr.f32.mxu0 0.0
    %667 = vmatmul.mubr.f32.gmra.mrb[0].mxu0 %v600
    %v668 = vpop.f32.mrb[0].mxu0
    %v669 = vadd.f32 0.0, %v668
    %v670 = vpop.f32.mrb[0].mxu0
    %v671 = vadd.f32 0.0, %v670
    %672 = vdwg.mxu0
    %673 = vmatprep.subr.mxu0 %v106
    %674 = vmatpush1.msra.mxu0 %v105
    %675 = vmatprep.subr.mxu0 %v110
    %676 = vmatpush1.msra.mxu0 %v109
    %677 = vmatprep.subr.mxu0 %v114
    %678 = vmatpush1.msra.mxu0 %v113
    %679 = vmatprep.subr.mxu0 %v118
    %680 = vmatpush1.msra.mxu0 %v117
    %681 = vmatprep.subr.mxu0 %v122
    %682 = vmatpush1.msra.mxu0 %v121
    %683 = vmatprep.subr.mxu0 %v126
    %684 = vmatpush1.msra.mxu0 %v125
    %685 = vmatprep.subr.mxu0 %v130
    %686 = vmatpush1.msra.mxu0 %v129
    %687 = vmatprep.subr.mxu0 %v134
    %688 = vmatpush1.msra.mxu0 %v133
    %689 = vmatprep.subr.mxu0 %v138
    %690 = vmatpush1.msra.mxu0 %v137
    %691 = vmatprep.subr.mxu0 %v142
    %692 = vmatpush1.msra.mxu0 %v141
    %693 = vmatprep.subr.mxu0 %v146
    %694 = vmatpush1.msra.mxu0 %v145
    %695 = vmatprep.subr.mxu0 %v150
    %696 = vmatpush1.msra.mxu0 %v149
    %697 = vmatprep.subr.mxu0 %v154
    %698 = vmatpush1.msra.mxu0 %v153
    %699 = vmatprep.subr.mxu0 %v158
    %700 = vmatpush1.msra.mxu0 %v157
    %701 = vmatprep.subr.mxu0 %v162
    %702 = vmatpush1.msra.mxu0 %v161
    %703 = vmatprep.subr.mxu0 %v166
    %704 = vmatpush1.msra.mxu0 %v165
    %705 = vmatprep.subr.mxu0 0.0
    %706 = vmatpush1.msra.mxu0 0.0
    %707 = vmatprep.subr.mxu0 0.0
    %708 = vmatpush1.msra.mxu0 0.0
    %709 = vmatprep.subr.mxu0 0.0
    %710 = vmatpush1.msra.mxu0 0.0
    %711 = vmatprep.subr.mxu0 0.0
    %712 = vmatpush1.msra.mxu0 0.0
    %713 = vmatprep.subr.mxu0 0.0
    %714 = vmatpush1.msra.mxu0 0.0
    %715 = vmatprep.subr.mxu0 0.0
    %716 = vmatpush1.msra.mxu0 0.0
    %717 = vmatprep.subr.mxu0 0.0
    %718 = vmatpush1.msra.mxu0 0.0
    %719 = vmatprep.subr.mxu0 0.0
    %720 = vmatpush1.msra.mxu0 0.0
    %721 = vmatprep.subr.mxu0 0.0
    %722 = vmatpush1.msra.mxu0 0.0
    %723 = vmatprep.subr.mxu0 0.0
    %724 = vmatpush1.msra.mxu0 0.0
    %725 = vmatprep.subr.mxu0 0.0
    %726 = vmatpush1.msra.mxu0 0.0
    %727 = vmatprep.subr.mxu0 0.0
    %728 = vmatpush1.msra.mxu0 0.0
    %729 = vmatprep.subr.mxu0 0.0
    %730 = vmatpush1.msra.mxu0 0.0
    %731 = vmatprep.subr.mxu0 0.0
    %732 = vmatpush1.msra.mxu0 0.0
    %733 = vmatprep.subr.mxu0 0.0
    %734 = vmatpush1.msra.mxu0 0.0
    %735 = vmatprep.subr.mxu0 0.0
    %736 = vmatpush1.msra.mxu0 0.0
    %737 = vmatprep.mubr.f32.mxu0 0.0
    %738 = vmatmul.mubr.f32.gmra.mrb[0].mxu0 %v600
    %v739 = vpop.f32.mrb[0].mxu0
    %v740 = vadd.f32 0.0, %v739
    %v741 = vpop.f32.mrb[0].mxu0
    %v742 = vadd.f32 0.0, %v741
    %743 = vdwg.mxu0
    %v744 = vadd.f32 %v441, %v669
    %v745 = vadd.f32 %v443, %v671
    %v746 = vadd.f32 %v554, %v740
    %v747 = vadd.f32 %v556, %v742
    %v748 = vxor.u32 %v744, 2147483648
    %v749 = vxor.u32 %v745, 2147483648
    %v750 = vxor.u32 %v746, 2147483648
    %v751 = vmul.f32 %v748, 1.442695
    %v752 = vpow.pop %v751
    %v753 = vmul.f32 %v749, 1.442695
    %v754 = vpow.pop %v753
    %v755 = vmul.f32 %v750, 1.442695
    %v756 = vpow.pop %v755
    %v757 = vadd.f32 %v752, 1.0
    %v758 = vadd.f32 %v754, 1.0
    %v759 = vadd.f32 %v756, 1.0
    %v760 = vrcp.pop %v757
    %v761 = vmul.f32 1.0, %v760
    %v762 = vrcp.pop %v758
    %v763 = vmul.f32 1.0, %v762
    %v764 = vrcp.pop %v759
    %v765 = vmul.f32 1.0, %v764
    %v766 = vtanh.pop %v747
    %v767 = vmul.f32 %v763, %v601
    %v768 = vmul.f32 %v761, %v766
    %v769 = vadd.f32 %v767, %v768
    %v770 = vtanh.pop %v769
    %v771 = vmul.f32 %v765, %v770
    %772 = vst [vmem:[#allocation2] sm:$0xff] %v771
    %773 = vst [vmem:[#allocation3] sm:$0xff] %v769
    %v774 = vld [vmem:[#allocation2] sm:$0xff]
    %v775 = vld [vmem:[#allocation2 + $0x8] sm:$0xff]
    %v776 = vld [vmem:[#allocation3 + $0x8] sm:$0xff]
    %777 = vmatprep.subr.mxu0 %v168
    %778 = vmatpush1.msra.mxu0 %v167
    %779 = vmatprep.subr.mxu0 %v172
    %780 = vmatpush1.msra.mxu0 %v171
    %781 = vmatprep.subr.mxu0 %v176
    %782 = vmatpush1.msra.mxu0 %v175
    %783 = vmatprep.subr.mxu0 %v180
    %784 = vmatpush1.msra.mxu0 %v179
    %785 = vmatprep.subr.mxu0 %v184
    %786 = vmatpush1.msra.mxu0 %v183
    %787 = vmatprep.subr.mxu0 %v188
    %788 = vmatpush1.msra.mxu0 %v187
    %789 = vmatprep.subr.mxu0 %v192
    %790 = vmatpush1.msra.mxu0 %v191
    %791 = vmatprep.subr.mxu0 %v196
    %792 = vmatpush1.msra.mxu0 %v195
    %793 = vmatprep.subr.mxu0 %v200
    %794 = vmatpush1.msra.mxu0 %v199
    %795 = vmatprep.subr.mxu0 %v204
    %796 = vmatpush1.msra.mxu0 %v203
    %797 = vmatprep.subr.mxu0 %v208
    %798 = vmatpush1.msra.mxu0 %v207
    %799 = vmatprep.subr.mxu0 %v212
    %800 = vmatpush1.msra.mxu0 %v211
    %801 = vmatprep.subr.mxu0 %v216
    %802 = vmatpush1.msra.mxu0 %v215
    %803 = vmatprep.subr.mxu0 %v220
    %804 = vmatpush1.msra.mxu0 %v219
    %805 = vmatprep.subr.mxu0 %v224
    %806 = vmatpush1.msra.mxu0 %v223
    %807 = vmatprep.subr.mxu0 %v228
    %808 = vmatpush1.msra.mxu0 %v227
    %809 = vmatprep.subr.mxu0 %v232
    %810 = vmatpush1.msra.mxu0 %v231
    %811 = vmatprep.subr.mxu0 %v236
    %812 = vmatpush1.msra.mxu0 %v235
    %813 = vmatprep.subr.mxu0 %v240
    %814 = vmatpush1.msra.mxu0 %v239
    %815 = vmatprep.subr.mxu0 %v244
    %816 = vmatpush1.msra.mxu0 %v243
    %817 = vmatprep.subr.mxu0 %v248
    %818 = vmatpush1.msra.mxu0 %v247
    %819 = vmatprep.subr.mxu0 %v252
    %820 = vmatpush1.msra.mxu0 %v251
    %821 = vmatprep.subr.mxu0 %v256
    %822 = vmatpush1.msra.mxu0 %v255
    %823 = vmatprep.subr.mxu0 %v260
    %824 = vmatpush1.msra.mxu0 %v259
    %825 = vmatprep.subr.mxu0 %v264
    %826 = vmatpush1.msra.mxu0 %v263
    %827 = vmatprep.subr.mxu0 %v268
    %828 = vmatpush1.msra.mxu0 %v267
    %829 = vmatprep.subr.mxu0 %v272
    %830 = vmatpush1.msra.mxu0 %v271
    %831 = vmatprep.subr.mxu0 %v276
    %832 = vmatpush1.msra.mxu0 %v275
    %833 = vmatprep.subr.mxu0 %v280
    %834 = vmatpush1.msra.mxu0 %v279
    %835 = vmatprep.subr.mxu0 %v284
    %836 = vmatpush1.msra.mxu0 %v283
    %837 = vmatprep.subr.mxu0 %v288
    %838 = vmatpush1.msra.mxu0 %v287
    %839 = vmatprep.subr.mxu0 %v292
    %840 = vmatpush1.msra.mxu0 %v291
    %841 = vmatprep.mubr.f32.mxu0 %v775
    %842 = vmatmul.mubr.f32.gmra.mrb[0].mxu0 %v774
    %v843 = vpop.f32.mrb[0].mxu0
    %v844 = vadd.f32 %v301, %v843
    %v845 = vpop.f32.mrb[0].mxu0
    %v846 = vadd.f32 %v305, %v845
    %847 = vdwg.mxu0
    %848 = vmatprep.subr.mxu0 %v170
    %849 = vmatpush1.msra.mxu0 %v169
    %850 = vmatprep.subr.mxu0 %v174
    %851 = vmatpush1.msra.mxu0 %v173
    %852 = vmatprep.subr.mxu0 %v178
    %853 = vmatpush1.msra.mxu0 %v177
    %854 = vmatprep.subr.mxu0 %v182
    %855 = vmatpush1.msra.mxu0 %v181
    %856 = vmatprep.subr.mxu0 %v186
    %857 = vmatpush1.msra.mxu0 %v185
    %858 = vmatprep.subr.mxu0 %v190
    %859 = vmatpush1.msra.mxu0 %v189
    %860 = vmatprep.subr.mxu0 %v194
    %861 = vmatpush1.msra.mxu0 %v193
    %862 = vmatprep.subr.mxu0 %v198
    %863 = vmatpush1.msra.mxu0 %v197
    %864 = vmatprep.subr.mxu0 %v202
    %865 = vmatpush1.msra.mxu0 %v201
    %866 = vmatprep.subr.mxu0 %v206
    %867 = vmatpush1.msra.mxu0 %v205
    %868 = vmatprep.subr.mxu0 %v210
    %869 = vmatpush1.msra.mxu0 %v209
    %870 = vmatprep.subr.mxu0 %v214
    %871 = vmatpush1.msra.mxu0 %v213
    %872 = vmatprep.subr.mxu0 %v218
    %873 = vmatpush1.msra.mxu0 %v217
    %874 = vmatprep.subr.mxu0 %v222
    %875 = vmatpush1.msra.mxu0 %v221
    %876 = vmatprep.subr.mxu0 %v226
    %877 = vmatpush1.msra.mxu0 %v225
    %878 = vmatprep.subr.mxu0 %v230
    %879 = vmatpush1.msra.mxu0 %v229
    %880 = vmatprep.subr.mxu0 %v234
    %881 = vmatpush1.msra.mxu0 %v233
    %882 = vmatprep.subr.mxu0 %v238
    %883 = vmatpush1.msra.mxu0 %v237
    %884 = vmatprep.subr.mxu0 %v242
    %885 = vmatpush1.msra.mxu0 %v241
    %886 = vmatprep.subr.mxu0 %v246
    %887 = vmatpush1.msra.mxu0 %v245
    %888 = vmatprep.subr.mxu0 %v250
    %889 = vmatpush1.msra.mxu0 %v249
    %890 = vmatprep.subr.mxu0 %v254
    %891 = vmatpush1.msra.mxu0 %v253
    %892 = vmatprep.subr.mxu0 %v258
    %893 = vmatpush1.msra.mxu0 %v257
    %894 = vmatprep.subr.mxu0 %v262
    %895 = vmatpush1.msra.mxu0 %v261
    %896 = vmatprep.subr.mxu0 %v266
    %897 = vmatpush1.msra.mxu0 %v265
    %898 = vmatprep.subr.mxu0 %v270
    %899 = vmatpush1.msra.mxu0 %v269
    %900 = vmatprep.subr.mxu0 %v274
    %901 = vmatpush1.msra.mxu0 %v273
    %902 = vmatprep.subr.mxu0 %v278
    %903 = vmatpush1.msra.mxu0 %v277
    %904 = vmatprep.subr.mxu0 %v282
    %905 = vmatpush1.msra.mxu0 %v281
    %906 = vmatprep.subr.mxu0 %v286
    %907 = vmatpush1.msra.mxu0 %v285
    %908 = vmatprep.subr.mxu0 %v290
    %909 = vmatpush1.msra.mxu0 %v289
    %910 = vmatprep.subr.mxu0 %v294
    %911 = vmatpush1.msra.mxu0 %v293
    %912 = vmatprep.mubr.f32.mxu0 %v775
    %913 = vmatmul.mubr.f32.gmra.mrb[0].mxu0 %v774
    %v914 = vpop.f32.mrb[0].mxu0
    %v915 = vadd.f32 %v309, %v914
    %v916 = vpop.f32.mrb[0].mxu0
    %v917 = vadd.f32 %v313, %v916
    %918 = vdwg.mxu0
    %v919 = vxor.u32 %v844, 2147483648
    %v920 = vxor.u32 %v846, 2147483648
    %v921 = vxor.u32 %v915, 2147483648
    %v922 = vmul.f32 %v919, 1.442695
    %v923 = vpow.pop %v922
    %v924 = vmul.f32 %v920, 1.442695
    %v925 = vpow.pop %v924
    %v926 = vmul.f32 %v921, 1.442695
    %v927 = vpow.pop %v926
    %v928 = vadd.f32 %v923, 1.0
    %v929 = vadd.f32 %v925, 1.0
    %v930 = vadd.f32 %v927, 1.0
    %v931 = vrcp.pop %v928
    %v932 = vmul.f32 1.0, %v931
    %v933 = vrcp.pop %v929
    %v934 = vmul.f32 1.0, %v933
    %v935 = vrcp.pop %v930
    %v936 = vmul.f32 1.0, %v935
    %v937 = vtanh.pop %v917
    %v938 = vmul.f32 %v934, %v776
    %v939 = vmul.f32 %v932, %v937
    %v940 = vadd.f32 %v938, %v939
    %v941 = vtanh.pop %v940
    %v942 = vmul.f32 %v936, %v941
    %943 = vst [vmem:[#allocation2 + $0x8] sm:$0xff] %v942
    %944 = vst [vmem:[#allocation3 + $0x8] sm:$0xff] %v940
    %v945 = vld [vmem:[#allocation2] sm:$0xff]
    %v946 = vld [vmem:[#allocation3] sm:$0xff]
    %947 = vmatprep.subr.mxu0 %v104
    %948 = vmatpush1.msra.mxu0 %v103
    %949 = vmatprep.subr.mxu0 %v108
    %950 = vmatpush1.msra.mxu0 %v107
    %951 = vmatprep.subr.mxu0 %v112
    %952 = vmatpush1.msra.mxu0 %v111
    %953 = vmatprep.subr.mxu0 %v116
    %954 = vmatpush1.msra.mxu0 %v115
    %955 = vmatprep.subr.mxu0 %v120
    %956 = vmatpush1.msra.mxu0 %v119
    %957 = vmatprep.subr.mxu0 %v124
    %958 = vmatpush1.msra.mxu0 %v123
    %959 = vmatprep.subr.mxu0 %v128
    %960 = vmatpush1.msra.mxu0 %v127
    %961 = vmatprep.subr.mxu0 %v132
    %962 = vmatpush1.msra.mxu0 %v131
    %963 = vmatprep.subr.mxu0 %v136
    %964 = vmatpush1.msra.mxu0 %v135
    %965 = vmatprep.subr.mxu0 %v140
    %966 = vmatpush1.msra.mxu0 %v139
    %967 = vmatprep.subr.mxu0 %v144
    %968 = vmatpush1.msra.mxu0 %v143
    %969 = vmatprep.subr.mxu0 %v148
    %970 = vmatpush1.msra.mxu0 %v147
    %971 = vmatprep.subr.mxu0 %v152
    %972 = vmatpush1.msra.mxu0 %v151
    %973 = vmatprep.subr.mxu0 %v156
    %974 = vmatpush1.msra.mxu0 %v155
    %975 = vmatprep.subr.mxu0 %v160
    %976 = vmatpush1.msra.mxu0 %v159
    %977 = vmatprep.subr.mxu0 %v164
    %978 = vmatpush1.msra.mxu0 %v163
    %979 = vmatprep.subr.mxu0 0.0
    %980 = vmatpush1.msra.mxu0 0.0
    %981 = vmatprep.subr.mxu0 0.0
    %982 = vmatpush1.msra.mxu0 0.0
    %983 = vmatprep.subr.mxu0 0.0
    %984 = vmatpush1.msra.mxu0 0.0
    %985 = vmatprep.subr.mxu0 0.0
    %986 = vmatpush1.msra.mxu0 0.0
    %987 = vmatprep.subr.mxu0 0.0
    %988 = vmatpush1.msra.mxu0 0.0
    %989 = vmatprep.subr.mxu0 0.0
    %990 = vmatpush1.msra.mxu0 0.0
    %991 = vmatprep.subr.mxu0 0.0
    %992 = vmatpush1.msra.mxu0 0.0
    %993 = vmatprep.subr.mxu0 0.0
    %994 = vmatpush1.msra.mxu0 0.0
    %995 = vmatprep.subr.mxu0 0.0
    %996 = vmatpush1.msra.mxu0 0.0
    %997 = vmatprep.subr.mxu0 0.0
    %998 = vmatpush1.msra.mxu0 0.0
    %999 = vmatprep.subr.mxu0 0.0
    %1000 = vmatpush1.msra.mxu0 0.0
    %1001 = vmatprep.subr.mxu0 0.0
    %1002 = vmatpush1.msra.mxu0 0.0
    %1003 = vmatprep.subr.mxu0 0.0
    %1004 = vmatpush1.msra.mxu0 0.0
    %1005 = vmatprep.subr.mxu0 0.0
    %1006 = vmatpush1.msra.mxu0 0.0
    %1007 = vmatprep.subr.mxu0 0.0
    %1008 = vmatpush1.msra.mxu0 0.0
    %1009 = vmatprep.subr.mxu0 0.0
    %1010 = vmatpush1.msra.mxu0 0.0
    %1011 = vmatprep.mubr.f32.mxu0 0.0
    %1012 = vmatmul.mubr.f32.gmra.mrb[0].mxu0 %v945
    %v1013 = vpop.f32.mrb[0].mxu0
    %v1014 = vadd.f32 0.0, %v1013
    %v1015 = vpop.f32.mrb[0].mxu0
    %v1016 = vadd.f32 0.0, %v1015
    %1017 = vdwg.mxu0
    %1018 = vmatprep.subr.mxu0 %v106
    %1019 = vmatpush1.msra.mxu0 %v105
    %1020 = vmatprep.subr.mxu0 %v110
    %1021 = vmatpush1.msra.mxu0 %v109
    %1022 = vmatprep.subr.mxu0 %v114
    %1023 = vmatpush1.msra.mxu0 %v113
    %1024 = vmatprep.subr.mxu0 %v118
    %1025 = vmatpush1.msra.mxu0 %v117
    %1026 = vmatprep.subr.mxu0 %v122
    %1027 = vmatpush1.msra.mxu0 %v121
    %1028 = vmatprep.subr.mxu0 %v126
    %1029 = vmatpush1.msra.mxu0 %v125
    %1030 = vmatprep.subr.mxu0 %v130
    %1031 = vmatpush1.msra.mxu0 %v129
    %1032 = vmatprep.subr.mxu0 %v134
    %1033 = vmatpush1.msra.mxu0 %v133
    %1034 = vmatprep.subr.mxu0 %v138
    %1035 = vmatpush1.msra.mxu0 %v137
    %1036 = vmatprep.subr.mxu0 %v142
    %1037 = vmatpush1.msra.mxu0 %v141
    %1038 = vmatprep.subr.mxu0 %v146
    %1039 = vmatpush1.msra.mxu0 %v145
    %1040 = vmatprep.subr.mxu0 %v150
    %1041 = vmatpush1.msra.mxu0 %v149
    %1042 = vmatprep.subr.mxu0 %v154
    %1043 = vmatpush1.msra.mxu0 %v153
    %1044 = vmatprep.subr.mxu0 %v158
    %1045 = vmatpush1.msra.mxu0 %v157
    %1046 = vmatprep.subr.mxu0 %v162
    %1047 = vmatpush1.msra.mxu0 %v161
    %1048 = vmatprep.subr.mxu0 %v166
    %1049 = vmatpush1.msra.mxu0 %v165
    %1050 = vmatprep.subr.mxu0 0.0
    %1051 = vmatpush1.msra.mxu0 0.0
    %1052 = vmatprep.subr.mxu0 0.0
    %1053 = vmatpush1.msra.mxu0 0.0
    %1054 = vmatprep.subr.mxu0 0.0
    %1055 = vmatpush1.msra.mxu0 0.0
    %1056 = vmatprep.subr.mxu0 0.0
    %1057 = vmatpush1.msra.mxu0 0.0
    %1058 = vmatprep.subr.mxu0 0.0
    %1059 = vmatpush1.msra.mxu0 0.0
    %1060 = vmatprep.subr.mxu0 0.0
    %1061 = vmatpush1.msra.mxu0 0.0
    %1062 = vmatprep.subr.mxu0 0.0
    %1063 = vmatpush1.msra.mxu0 0.0
    %1064 = vmatprep.subr.mxu0 0.0
    %1065 = vmatpush1.msra.mxu0 0.0
    %1066 = vmatprep.subr.mxu0 0.0
    %1067 = vmatpush1.msra.mxu0 0.0
    %1068 = vmatprep.subr.mxu0 0.0
    %1069 = vmatpush1.msra.mxu0 0.0
    %1070 = vmatprep.subr.mxu0 0.0
    %1071 = vmatpush1.msra.mxu0 0.0
    %1072 = vmatprep.subr.mxu0 0.0
    %1073 = vmatpush1.msra.mxu0 0.0
    %1074 = vmatprep.subr.mxu0 0.0
    %1075 = vmatpush1.msra.mxu0 0.0
    %1076 = vmatprep.subr.mxu0 0.0
    %1077 = vmatpush1.msra.mxu0 0.0
    %1078 = vmatprep.subr.mxu0 0.0
    %1079 = vmatpush1.msra.mxu0 0.0
    %1080 = vmatprep.subr.mxu0 0.0
    %1081 = vmatpush1.msra.mxu0 0.0
    %1082 = vmatprep.mubr.f32.mxu0 0.0
    %1083 = vmatmul.mubr.f32.gmra.mrb[0].mxu0 %v945
    %v1084 = vpop.f32.mrb[0].mxu0
    %v1085 = vadd.f32 0.0, %v1084
    %v1086 = vpop.f32.mrb[0].mxu0
    %v1087 = vadd.f32 0.0, %v1086
    %1088 = vdwg.mxu0
    %v1089 = vadd.f32 %v447, %v1014
    %v1090 = vadd.f32 %v449, %v1016
    %v1091 = vadd.f32 %v560, %v1085
    %v1092 = vadd.f32 %v562, %v1087
    %v1093 = vxor.u32 %v1089, 2147483648
    %v1094 = vxor.u32 %v1090, 2147483648
    %v1095 = vxor.u32 %v1091, 2147483648
    %v1096 = vmul.f32 %v1093, 1.442695
    %v1097 = vpow.pop %v1096
    %v1098 = vmul.f32 %v1094, 1.442695
    %v1099 = vpow.pop %v1098
    %v1100 = vmul.f32 %v1095, 1.442695
    %v1101 = vpow.pop %v1100
    %v1102 = vadd.f32 %v1097, 1.0
    %v1103 = vadd.f32 %v1099, 1.0
    %v1104 = vadd.f32 %v1101, 1.0
    %v1105 = vrcp.pop %v1102
    %v1106 = vmul.f32 1.0, %v1105
    %v1107 = vrcp.pop %v1103
    %v1108 = vmul.f32 1.0, %v1107
    %v1109 = vrcp.pop %v1104
    %v1110 = vmul.f32 1.0, %v1109
    %v1111 = vtanh.pop %v1092
    %v1112 = vmul.f32 %v1108, %v946
    %v1113 = vmul.f32 %v1106, %v1111
    %v1114 = vadd.f32 %v1112, %v1113
    %v1115 = vtanh.pop %v1114
    %v1116 = vmul.f32 %v1110, %v1115
    %1117 = vst [vmem:[#allocation2] sm:$0xff] %v1116
    %1118 = vst [vmem:[#allocation3] sm:$0xff] %v1114
    %v1119 = vld [vmem:[#allocation2] sm:$0xff]
    %v1120 = vld [vmem:[#allocation2 + $0x8] sm:$0xff]
    %v1121 = vld [vmem:[#allocation3 + $0x8] sm:$0xff]
    %1122 = vmatprep.subr.mxu0 %v168
    %1123 = vmatpush1.msra.mxu0 %v167
    %1124 = vmatprep.subr.mxu0 %v172
    %1125 = vmatpush1.msra.mxu0 %v171
    %1126 = vmatprep.subr.mxu0 %v176
    %1127 = vmatpush1.msra.mxu0 %v175
    %1128 = vmatprep.subr.mxu0 %v180
    %1129 = vmatpush1.msra.mxu0 %v179
    %1130 = vmatprep.subr.mxu0 %v184
    %1131 = vmatpush1.msra.mxu0 %v183
    %1132 = vmatprep.subr.mxu0 %v188
    %1133 = vmatpush1.msra.mxu0 %v187
    %1134 = vmatprep.subr.mxu0 %v192
    %1135 = vmatpush1.msra.mxu0 %v191
    %1136 = vmatprep.subr.mxu0 %v196
    %1137 = vmatpush1.msra.mxu0 %v195
    %1138 = vmatprep.subr.mxu0 %v200
    %1139 = vmatpush1.msra.mxu0 %v199
    %1140 = vmatprep.subr.mxu0 %v204
    %1141 = vmatpush1.msra.mxu0 %v203
    %1142 = vmatprep.subr.mxu0 %v208
    %1143 = vmatpush1.msra.mxu0 %v207
    %1144 = vmatprep.subr.mxu0 %v212
    %1145 = vmatpush1.msra.mxu0 %v211
    %1146 = vmatprep.subr.mxu0 %v216
    %1147 = vmatpush1.msra.mxu0 %v215
    %1148 = vmatprep.subr.mxu0 %v220
    %1149 = vmatpush1.msra.mxu0 %v219
    %1150 = vmatprep.subr.mxu0 %v224
    %1151 = vmatpush1.msra.mxu0 %v223
    %1152 = vmatprep.subr.mxu0 %v228
    %1153 = vmatpush1.msra.mxu0 %v227
    %1154 = vmatprep.subr.mxu0 %v232
    %1155 = vmatpush1.msra.mxu0 %v231
    %1156 = vmatprep.subr.mxu0 %v236
    %1157 = vmatpush1.msra.mxu0 %v235
    %1158 = vmatprep.subr.mxu0 %v240
    %1159 = vmatpush1.msra.mxu0 %v239
    %1160 = vmatprep.subr.mxu0 %v244
    %1161 = vmatpush1.msra.mxu0 %v243
    %1162 = vmatprep.subr.mxu0 %v248
    %1163 = vmatpush1.msra.mxu0 %v247
    %1164 = vmatprep.subr.mxu0 %v252
    %1165 = vmatpush1.msra.mxu0 %v251
    %1166 = vmatprep.subr.mxu0 %v256
    %1167 = vmatpush1.msra.mxu0 %v255
    %1168 = vmatprep.subr.mxu0 %v260
    %1169 = vmatpush1.msra.mxu0 %v259
    %1170 = vmatprep.subr.mxu0 %v264
    %1171 = vmatpush1.msra.mxu0 %v263
    %1172 = vmatprep.subr.mxu0 %v268
    %1173 = vmatpush1.msra.mxu0 %v267
    %1174 = vmatprep.subr.mxu0 %v272
    %1175 = vmatpush1.msra.mxu0 %v271
    %1176 = vmatprep.subr.mxu0 %v276
    %1177 = vmatpush1.msra.mxu0 %v275
    %1178 = vmatprep.subr.mxu0 %v280
    %1179 = vmatpush1.msra.mxu0 %v279
    %1180 = vmatprep.subr.mxu0 %v284
    %1181 = vmatpush1.msra.mxu0 %v283
    %1182 = vmatprep.subr.mxu0 %v288
    %1183 = vmatpush1.msra.mxu0 %v287
    %1184 = vmatprep.subr.mxu0 %v292
    %1185 = vmatpush1.msra.mxu0 %v291
    %1186 = vmatprep.mubr.f32.mxu0 %v1120
    %1187 = vmatmul.mubr.f32.gmra.mrb[0].mxu0 %v1119
    %v1188 = vpop.f32.mrb[0].mxu0
    %v1189 = vadd.f32 %v301, %v1188
    %v1190 = vpop.f32.mrb[0].mxu0
    %v1191 = vadd.f32 %v305, %v1190
    %1192 = vdwg.mxu0
    %1193 = vmatprep.subr.mxu0 %v170
    %1194 = vmatpush1.msra.mxu0 %v169
    %1195 = vmatprep.subr.mxu0 %v174
    %1196 = vmatpush1.msra.mxu0 %v173
    %1197 = vmatprep.subr.mxu0 %v178
    %1198 = vmatpush1.msra.mxu0 %v177
    %1199 = vmatprep.subr.mxu0 %v182
    %1200 = vmatpush1.msra.mxu0 %v181
    %1201 = vmatprep.subr.mxu0 %v186
    %1202 = vmatpush1.msra.mxu0 %v185
    %1203 = vmatprep.subr.mxu0 %v190
    %1204 = vmatpush1.msra.mxu0 %v189
    %1205 = vmatprep.subr.mxu0 %v194
    %1206 = vmatpush1.msra.mxu0 %v193
    %1207 = vmatprep.subr.mxu0 %v198
    %1208 = vmatpush1.msra.mxu0 %v197
    %1209 = vmatprep.subr.mxu0 %v202
    %1210 = vmatpush1.msra.mxu0 %v201
    %1211 = vmatprep.subr.mxu0 %v206
    %1212 = vmatpush1.msra.mxu0 %v205
    %1213 = vmatprep.subr.mxu0 %v210
    %1214 = vmatpush1.msra.mxu0 %v209
    %1215 = vmatprep.subr.mxu0 %v214
    %1216 = vmatpush1.msra.mxu0 %v213
    %1217 = vmatprep.subr.mxu0 %v218
    %1218 = vmatpush1.msra.mxu0 %v217
    %1219 = vmatprep.subr.mxu0 %v222
    %1220 = vmatpush1.msra.mxu0 %v221
    %1221 = vmatprep.subr.mxu0 %v226
    %1222 = vmatpush1.msra.mxu0 %v225
    %1223 = vmatprep.subr.mxu0 %v230
    %1224 = vmatpush1.msra.mxu0 %v229
    %1225 = vmatprep.subr.mxu0 %v234
    %1226 = vmatpush1.msra.mxu0 %v233
    %1227 = vmatprep.subr.mxu0 %v238
    %1228 = vmatpush1.msra.mxu0 %v237
    %1229 = vmatprep.subr.mxu0 %v242
    %1230 = vmatpush1.msra.mxu0 %v241
    %1231 = vmatprep.subr.mxu0 %v246
    %1232 = vmatpush1.msra.mxu0 %v245
    %1233 = vmatprep.subr.mxu0 %v250
    %1234 = vmatpush1.msra.mxu0 %v249
    %1235 = vmatprep.subr.mxu0 %v254
    %1236 = vmatpush1.msra.mxu0 %v253
    %1237 = vmatprep.subr.mxu0 %v258
    %1238 = vmatpush1.msra.mxu0 %v257
    %1239 = vmatprep.subr.mxu0 %v262
    %1240 = vmatpush1.msra.mxu0 %v261
    %1241 = vmatprep.subr.mxu0 %v266
    %1242 = vmatpush1.msra.mxu0 %v265
    %1243 = vmatprep.subr.mxu0 %v270
    %1244 = vmatpush1.msra.mxu0 %v269
    %1245 = vmatprep.subr.mxu0 %v274
    %1246 = vmatpush1.msra.mxu0 %v273
    %1247 = vmatprep.subr.mxu0 %v278
    %1248 = vmatpush1.msra.mxu0 %v277
    %1249 = vmatprep.subr.mxu0 %v282
    %1250 = vmatpush1.msra.mxu0 %v281
    %1251 = vmatprep.subr.mxu0 %v286
    %1252 = vmatpush1.msra.mxu0 %v285
    %1253 = vmatprep.subr.mxu0 %v290
    %1254 = vmatpush1.msra.mxu0 %v289
    %1255 = vmatprep.subr.mxu0 %v294
    %1256 = vmatpush1.msra.mxu0 %v293
    %1257 = vmatprep.mubr.f32.mxu0 %v1120
    %1258 = vmatmul.mubr.f32.gmra.mrb[0].mxu0 %v1119
    %v1259 = vpop.f32.mrb[0].mxu0
    %v1260 = vadd.f32 %v309, %v1259
    %v1261 = vpop.f32.mrb[0].mxu0
    %v1262 = vadd.f32 %v313, %v1261
    %1263 = vdwg.mxu0
    %v1264 = vxor.u32 %v1189, 2147483648
    %v1265 = vxor.u32 %v1191, 2147483648
    %v1266 = vxor.u32 %v1260, 2147483648
    %v1267 = vmul.f32 %v1264, 1.442695
    %v1268 = vpow.pop %v1267
    %v1269 = vmul.f32 %v1265, 1.442695
    %v1270 = vpow.pop %v1269
    %v1271 = vmul.f32 %v1266, 1.442695
    %v1272 = vpow.pop %v1271
    %v1273 = vadd.f32 %v1268, 1.0
    %v1274 = vadd.f32 %v1270, 1.0
    %v1275 = vadd.f32 %v1272, 1.0
    %v1276 = vrcp.pop %v1273
    %v1277 = vmul.f32 1.0, %v1276
    %v1278 = vrcp.pop %v1274
    %v1279 = vmul.f32 1.0, %v1278
    %v1280 = vrcp.pop %v1275
    %v1281 = vmul.f32 1.0, %v1280
    %v1282 = vtanh.pop %v1262
    %v1283 = vmul.f32 %v1279, %v1121
    %v1284 = vmul.f32 %v1277, %v1282
    %v1285 = vadd.f32 %v1283, %v1284
    %v1286 = vtanh.pop %v1285
    %v1287 = vmul.f32 %v1281, %v1286
    %1288 = vst [vmem:[#allocation2 + $0x8] sm:$0xff] %v1287
    %1289 = vst [vmem:[#allocation3 + $0x8] sm:$0xff] %v1285
    %v1290 = vld [vmem:[#allocation2] sm:$0xff]
    %v1291 = vld [vmem:[#allocation3] sm:$0xff]
    %1292 = vmatprep.subr.mxu0 %v104
    %1293 = vmatpush1.msra.mxu0 %v103
    %1294 = vmatprep.subr.mxu0 %v108
    %1295 = vmatpush1.msra.mxu0 %v107
    %1296 = vmatprep.subr.mxu0 %v112
    %1297 = vmatpush1.msra.mxu0 %v111
    %1298 = vmatprep.subr.mxu0 %v116
    %1299 = vmatpush1.msra.mxu0 %v115
    %1300 = vmatprep.subr.mxu0 %v120
    %1301 = vmatpush1.msra.mxu0 %v119
    %1302 = vmatprep.subr.mxu0 %v124
    %1303 = vmatpush1.msra.mxu0 %v123
    %1304 = vmatprep.subr.mxu0 %v128
    %1305 = vmatpush1.msra.mxu0 %v127
    %1306 = vmatprep.subr.mxu0 %v132
    %1307 = vmatpush1.msra.mxu0 %v131
    %1308 = vmatprep.subr.mxu0 %v136
    %1309 = vmatpush1.msra.mxu0 %v135
    %1310 = vmatprep.subr.mxu0 %v140
    %1311 = vmatpush1.msra.mxu0 %v139
    %1312 = vmatprep.subr.mxu0 %v144
    %1313 = vmatpush1.msra.mxu0 %v143
    %1314 = vmatprep.subr.mxu0 %v148
    %1315 = vmatpush1.msra.mxu0 %v147
    %1316 = vmatprep.subr.mxu0 %v152
    %1317 = vmatpush1.msra.mxu0 %v151
    %1318 = vmatprep.subr.mxu0 %v156
    %1319 = vmatpush1.msra.mxu0 %v155
    %1320 = vmatprep.subr.mxu0 %v160
    %1321 = vmatpush1.msra.mxu0 %v159
    %1322 = vmatprep.subr.mxu0 %v164
    %1323 = vmatpush1.msra.mxu0 %v163
    %1324 = vmatprep.subr.mxu0 0.0
    %1325 = vmatpush1.msra.mxu0 0.0
    %1326 = vmatprep.subr.mxu0 0.0
    %1327 = vmatpush1.msra.mxu0 0.0
    %1328 = vmatprep.subr.mxu0 0.0
    %1329 = vmatpush1.msra.mxu0 0.0
    %1330 = vmatprep.subr.mxu0 0.0
    %1331 = vmatpush1.msra.mxu0 0.0
    %1332 = vmatprep.subr.mxu0 0.0
    %1333 = vmatpush1.msra.mxu0 0.0
    %1334 = vmatprep.subr.mxu0 0.0
    %1335 = vmatpush1.msra.mxu0 0.0
    %1336 = vmatprep.subr.mxu0 0.0
    %1337 = vmatpush1.msra.mxu0 0.0
    %1338 = vmatprep.subr.mxu0 0.0
    %1339 = vmatpush1.msra.mxu0 0.0
    %1340 = vmatprep.subr.mxu0 0.0
    %1341 = vmatpush1.msra.mxu0 0.0
    %1342 = vmatprep.subr.mxu0 0.0
    %1343 = vmatpush1.msra.mxu0 0.0
    %1344 = vmatprep.subr.mxu0 0.0
    %1345 = vmatpush1.msra.mxu0 0.0
    %1346 = vmatprep.subr.mxu0 0.0
    %1347 = vmatpush1.msra.mxu0 0.0
    %1348 = vmatprep.subr.mxu0 0.0
    %1349 = vmatpush1.msra.mxu0 0.0
    %1350 = vmatprep.subr.mxu0 0.0
    %1351 = vmatpush1.msra.mxu0 0.0
    %1352 = vmatprep.subr.mxu0 0.0
    %1353 = vmatpush1.msra.mxu0 0.0
    %1354 = vmatprep.subr.mxu0 0.0
    %1355 = vmatpush1.msra.mxu0 0.0
    %1356 = vmatprep.mubr.f32.mxu0 0.0
    %1357 = vmatmul.mubr.f32.gmra.mrb[0].mxu0 %v1290
    %v1358 = vpop.f32.mrb[0].mxu0
    %v1359 = vadd.f32 0.0, %v1358
    %v1360 = vpop.f32.mrb[0].mxu0
    %v1361 = vadd.f32 0.0, %v1360
    %1362 = vdwg.mxu0
    %1363 = vmatprep.subr.mxu0 %v106
    %1364 = vmatpush1.msra.mxu0 %v105
    %1365 = vmatprep.subr.mxu0 %v110
    %1366 = vmatpush1.msra.mxu0 %v109
    %1367 = vmatprep.subr.mxu0 %v114
    %1368 = vmatpush1.msra.mxu0 %v113
    %1369 = vmatprep.subr.mxu0 %v118
    %1370 = vmatpush1.msra.mxu0 %v117
    %1371 = vmatprep.subr.mxu0 %v122
    %1372 = vmatpush1.msra.mxu0 %v121
    %1373 = vmatprep.subr.mxu0 %v126
    %1374 = vmatpush1.msra.mxu0 %v125
    %1375 = vmatprep.subr.mxu0 %v130
    %1376 = vmatpush1.msra.mxu0 %v129
    %1377 = vmatprep.subr.mxu0 %v134
    %1378 = vmatpush1.msra.mxu0 %v133
    %1379 = vmatprep.subr.mxu0 %v138
    %1380 = vmatpush1.msra.mxu0 %v137
    %1381 = vmatprep.subr.mxu0 %v142
    %1382 = vmatpush1.msra.mxu0 %v141
    %1383 = vmatprep.subr.mxu0 %v146
    %1384 = vmatpush1.msra.mxu0 %v145
    %1385 = vmatprep.subr.mxu0 %v150
    %1386 = vmatpush1.msra.mxu0 %v149
    %1387 = vmatprep.subr.mxu0 %v154
    %1388 = vmatpush1.msra.mxu0 %v153
    %1389 = vmatprep.subr.mxu0 %v158
    %1390 = vmatpush1.msra.mxu0 %v157
    %1391 = vmatprep.subr.mxu0 %v162
    %1392 = vmatpush1.msra.mxu0 %v161
    %1393 = vmatprep.subr.mxu0 %v166
    %1394 = vmatpush1.msra.mxu0 %v165
    %1395 = vmatprep.subr.mxu0 0.0
    %1396 = vmatpush1.msra.mxu0 0.0
    %1397 = vmatprep.subr.mxu0 0.0
    %1398 = vmatpush1.msra.mxu0 0.0
    %1399 = vmatprep.subr.mxu0 0.0
    %1400 = vmatpush1.msra.mxu0 0.0
    %1401 = vmatprep.subr.mxu0 0.0
    %1402 = vmatpush1.msra.mxu0 0.0
    %1403 = vmatprep.subr.mxu0 0.0
    %1404 = vmatpush1.msra.mxu0 0.0
    %1405 = vmatprep.subr.mxu0 0.0
    %1406 = vmatpush1.msra.mxu0 0.0
    %1407 = vmatprep.subr.mxu0 0.0
    %1408 = vmatpush1.msra.mxu0 0.0
    %1409 = vmatprep.subr.mxu0 0.0
    %1410 = vmatpush1.msra.mxu0 0.0
    %1411 = vmatprep.subr.mxu0 0.0
    %1412 = vmatpush1.msra.mxu0 0.0
    %1413 = vmatprep.subr.mxu0 0.0
    %1414 = vmatpush1.msra.mxu0 0.0
    %1415 = vmatprep.subr.mxu0 0.0
    %1416 = vmatpush1.msra.mxu0 0.0
    %1417 = vmatprep.subr.mxu0 0.0
    %1418 = vmatpush1.msra.mxu0 0.0
    %1419 = vmatprep.subr.mxu0 0.0
    %1420 = vmatpush1.msra.mxu0 0.0
    %1421 = vmatprep.subr.mxu0 0.0
    %1422 = vmatpush1.msra.mxu0 0.0
    %1423 = vmatprep.subr.mxu0 0.0
    %1424 = vmatpush1.msra.mxu0 0.0
    %1425 = vmatprep.subr.mxu0 0.0
    %1426 = vmatpush1.msra.mxu0 0.0
    %1427 = vmatprep.mubr.f32.mxu0 0.0
    %1428 = vmatmul.mubr.f32.gmra.mrb[0].mxu0 %v1290
    %v1429 = vpop.f32.mrb[0].mxu0
    %v1430 = vadd.f32 0.0, %v1429
    %v1431 = vpop.f32.mrb[0].mxu0
    %v1432 = vadd.f32 0.0, %v1431
    %1433 = vdwg.mxu0
    %v1434 = vadd.f32 %v453, %v1359
    %v1435 = vadd.f32 %v455, %v1361
    %v1436 = vadd.f32 %v566, %v1430
    %v1437 = vadd.f32 %v568, %v1432
    %v1438 = vxor.u32 %v1434, 2147483648
    %v1439 = vxor.u32 %v1435, 2147483648
    %v1440 = vxor.u32 %v1436, 2147483648
    %v1441 = vmul.f32 %v1438, 1.442695
    %v1442 = vpow.pop %v1441
    %v1443 = vmul.f32 %v1439, 1.442695
    %v1444 = vpow.pop %v1443
    %v1445 = vmul.f32 %v1440, 1.442695
    %v1446 = vpow.pop %v1445
    %v1447 = vadd.f32 %v1442, 1.0
    %v1448 = vadd.f32 %v1444, 1.0
    %v1449 = vadd.f32 %v1446, 1.0
    %v1450 = vrcp.pop %v1447
    %v1451 = vmul.f32 1.0, %v1450
    %v1452 = vrcp.pop %v1448
    %v1453 = vmul.f32 1.0, %v1452
    %v1454 = vrcp.pop %v1449
    %v1455 = vmul.f32 1.0, %v1454
    %v1456 = vtanh.pop %v1437
    %v1457 = vmul.f32 %v1453, %v1291
    %v1458 = vmul.f32 %v1451, %v1456
    %v1459 = vadd.f32 %v1457, %v1458
    %v1460 = vtanh.pop %v1459
    %v1461 = vmul.f32 %v1455, %v1460
    %1462 = vst [vmem:[#allocation2] sm:$0xff] %v1461
    %1463 = vst [vmem:[#allocation3] sm:$0xff] %v1459
    %v1464 = vld [vmem:[#allocation2] sm:$0xff]
    %v1465 = vld [vmem:[#allocation2 + $0x8] sm:$0xff]
    %v1466 = vld [vmem:[#allocation3 + $0x8] sm:$0xff]
    %1467 = vmatprep.subr.mxu0 %v168
    %1468 = vmatpush1.msra.mxu0 %v167
    %1469 = vmatprep.subr.mxu0 %v172
    %1470 = vmatpush1.msra.mxu0 %v171
    %1471 = vmatprep.subr.mxu0 %v176
    %1472 = vmatpush1.msra.mxu0 %v175
    %1473 = vmatprep.subr.mxu0 %v180
    %1474 = vmatpush1.msra.mxu0 %v179
    %1475 = vmatprep.subr.mxu0 %v184
    %1476 = vmatpush1.msra.mxu0 %v183
    %1477 = vmatprep.subr.mxu0 %v188
    %1478 = vmatpush1.msra.mxu0 %v187
    %1479 = vmatprep.subr.mxu0 %v192
    %1480 = vmatpush1.msra.mxu0 %v191
    %1481 = vmatprep.subr.mxu0 %v196
    %1482 = vmatpush1.msra.mxu0 %v195
    %1483 = vmatprep.subr.mxu0 %v200
    %1484 = vmatpush1.msra.mxu0 %v199
    %1485 = vmatprep.subr.mxu0 %v204
    %1486 = vmatpush1.msra.mxu0 %v203
    %1487 = vmatprep.subr.mxu0 %v208
    %1488 = vmatpush1.msra.mxu0 %v207
    %1489 = vmatprep.subr.mxu0 %v212
    %1490 = vmatpush1.msra.mxu0 %v211
    %1491 = vmatprep.subr.mxu0 %v216
    %1492 = vmatpush1.msra.mxu0 %v215
    %1493 = vmatprep.subr.mxu0 %v220
    %1494 = vmatpush1.msra.mxu0 %v219
    %1495 = vmatprep.subr.mxu0 %v224
    %1496 = vmatpush1.msra.mxu0 %v223
    %1497 = vmatprep.subr.mxu0 %v228
    %1498 = vmatpush1.msra.mxu0 %v227
    %1499 = vmatprep.subr.mxu0 %v232
    %1500 = vmatpush1.msra.mxu0 %v231
    %1501 = vmatprep.subr.mxu0 %v236
    %1502 = vmatpush1.msra.mxu0 %v235
    %1503 = vmatprep.subr.mxu0 %v240
    %1504 = vmatpush1.msra.mxu0 %v239
    %1505 = vmatprep.subr.mxu0 %v244
    %1506 = vmatpush1.msra.mxu0 %v243
    %1507 = vmatprep.subr.mxu0 %v248
    %1508 = vmatpush1.msra.mxu0 %v247
    %1509 = vmatprep.subr.mxu0 %v252
    %1510 = vmatpush1.msra.mxu0 %v251
    %1511 = vmatprep.subr.mxu0 %v256
    %1512 = vmatpush1.msra.mxu0 %v255
    %1513 = vmatprep.subr.mxu0 %v260
    %1514 = vmatpush1.msra.mxu0 %v259
    %1515 = vmatprep.subr.mxu0 %v264
    %1516 = vmatpush1.msra.mxu0 %v263
    %1517 = vmatprep.subr.mxu0 %v268
    %1518 = vmatpush1.msra.mxu0 %v267
    %1519 = vmatprep.subr.mxu0 %v272
    %1520 = vmatpush1.msra.mxu0 %v271
    %1521 = vmatprep.subr.mxu0 %v276
    %1522 = vmatpush1.msra.mxu0 %v275
    %1523 = vmatprep.subr.mxu0 %v280
    %1524 = vmatpush1.msra.mxu0 %v279
    %1525 = vmatprep.subr.mxu0 %v284
    %1526 = vmatpush1.msra.mxu0 %v283
    %1527 = vmatprep.subr.mxu0 %v288
    %1528 = vmatpush1.msra.mxu0 %v287
    %1529 = vmatprep.subr.mxu0 %v292
    %1530 = vmatpush1.msra.mxu0 %v291
    %1531 = vmatprep.mubr.f32.mxu0 %v1465
    %1532 = vmatmul.mubr.f32.gmra.mrb[0].mxu0 %v1464
    %v1533 = vpop.f32.mrb[0].mxu0
    %v1534 = vadd.f32 %v301, %v1533
    %v1535 = vpop.f32.mrb[0].mxu0
    %v1536 = vadd.f32 %v305, %v1535
    %1537 = vdwg.mxu0
    %1538 = vmatprep.subr.mxu0 %v170
    %1539 = vmatpush1.msra.mxu0 %v169
    %1540 = vmatprep.subr.mxu0 %v174
    %1541 = vmatpush1.msra.mxu0 %v173
    %1542 = vmatprep.subr.mxu0 %v178
    %1543 = vmatpush1.msra.mxu0 %v177
    %1544 = vmatprep.subr.mxu0 %v182
    %1545 = vmatpush1.msra.mxu0 %v181
    %1546 = vmatprep.subr.mxu0 %v186
    %1547 = vmatpush1.msra.mxu0 %v185
    %1548 = vmatprep.subr.mxu0 %v190
    %1549 = vmatpush1.msra.mxu0 %v189
    %1550 = vmatprep.subr.mxu0 %v194
    %1551 = vmatpush1.msra.mxu0 %v193
    %1552 = vmatprep.subr.mxu0 %v198
    %1553 = vmatpush1.msra.mxu0 %v197
    %1554 = vmatprep.subr.mxu0 %v202
    %1555 = vmatpush1.msra.mxu0 %v201
    %1556 = vmatprep.subr.mxu0 %v206
    %1557 = vmatpush1.msra.mxu0 %v205
    %1558 = vmatprep.subr.mxu0 %v210
    %1559 = vmatpush1.msra.mxu0 %v209
    %1560 = vmatprep.subr.mxu0 %v214
    %1561 = vmatpush1.msra.mxu0 %v213
    %1562 = vmatprep.subr.mxu0 %v218
    %1563 = vmatpush1.msra.mxu0 %v217
    %1564 = vmatprep.subr.mxu0 %v222
    %1565 = vmatpush1.msra.mxu0 %v221
    %1566 = vmatprep.subr.mxu0 %v226
    %1567 = vmatpush1.msra.mxu0 %v225
    %1568 = vmatprep.subr.mxu0 %v230
    %1569 = vmatpush1.msra.mxu0 %v229
    %1570 = vmatprep.subr.mxu0 %v234
    %1571 = vmatpush1.msra.mxu0 %v233
    %1572 = vmatprep.subr.mxu0 %v238
    %1573 = vmatpush1.msra.mxu0 %v237
    %1574 = vmatprep.subr.mxu0 %v242
    %1575 = vmatpush1.msra.mxu0 %v241
    %1576 = vmatprep.subr.mxu0 %v246
    %1577 = vmatpush1.msra.mxu0 %v245
    %1578 = vmatprep.subr.mxu0 %v250
    %1579 = vmatpush1.msra.mxu0 %v249
    %1580 = vmatprep.subr.mxu0 %v254
    %1581 = vmatpush1.msra.mxu0 %v253
    %1582 = vmatprep.subr.mxu0 %v258
    %1583 = vmatpush1.msra.mxu0 %v257
    %1584 = vmatprep.subr.mxu0 %v262
    %1585 = vmatpush1.msra.mxu0 %v261
    %1586 = vmatprep.subr.mxu0 %v266
    %1587 = vmatpush1.msra.mxu0 %v265
    %1588 = vmatprep.subr.mxu0 %v270
    %1589 = vmatpush1.msra.mxu0 %v269
    %1590 = vmatprep.subr.mxu0 %v274
    %1591 = vmatpush1.msra.mxu0 %v273
    %1592 = vmatprep.subr.mxu0 %v278
    %1593 = vmatpush1.msra.mxu0 %v277
    %1594 = vmatprep.subr.mxu0 %v282
    %1595 = vmatpush1.msra.mxu0 %v281
    %1596 = vmatprep.subr.mxu0 %v286
    %1597 = vmatpush1.msra.mxu0 %v285
    %1598 = vmatprep.subr.mxu0 %v290
    %1599 = vmatpush1.msra.mxu0 %v289
    %1600 = vmatprep.subr.mxu0 %v294
    %1601 = vmatpush1.msra.mxu0 %v293
    %1602 = vmatprep.mubr.f32.mxu0 %v1465
    %1603 = vmatmul.mubr.f32.gmra.mrb[0].mxu0 %v1464
    %v1604 = vpop.f32.mrb[0].mxu0
    %v1605 = vadd.f32 %v309, %v1604
    %v1606 = vpop.f32.mrb[0].mxu0
    %v1607 = vadd.f32 %v313, %v1606
    %1608 = vdwg.mxu0
    %v1609 = vxor.u32 %v1534, 2147483648
    %v1610 = vxor.u32 %v1536, 2147483648
    %v1611 = vxor.u32 %v1605, 2147483648
    %v1612 = vmul.f32 %v1609, 1.442695
    %v1613 = vpow.pop %v1612
    %v1614 = vmul.f32 %v1610, 1.442695
    %v1615 = vpow.pop %v1614
    %v1616 = vmul.f32 %v1611, 1.442695
    %v1617 = vpow.pop %v1616
    %v1618 = vadd.f32 %v1613, 1.0
    %v1619 = vadd.f32 %v1615, 1.0
    %v1620 = vadd.f32 %v1617, 1.0
    %v1621 = vrcp.pop %v1618
    %v1622 = vmul.f32 1.0, %v1621
    %v1623 = vrcp.pop %v1619
    %v1624 = vmul.f32 1.0, %v1623
    %v1625 = vrcp.pop %v1620
    %v1626 = vmul.f32 1.0, %v1625
    %v1627 = vtanh.pop %v1607
    %v1628 = vmul.f32 %v1624, %v1466
    %v1629 = vmul.f32 %v1622, %v1627
    %v1630 = vadd.f32 %v1628, %v1629
    %v1631 = vtanh.pop %v1630
    %v1632 = vmul.f32 %v1626, %v1631
    %1633 = vst [vmem:[#allocation2 + $0x8] sm:$0xff] %v1632
    %1634 = vst [vmem:[#allocation3 + $0x8] sm:$0xff] %v1630
    %v1635 = vld [vmem:[#allocation2] sm:$0xff]
    %v1636 = vld [vmem:[#allocation3] sm:$0xff]
    %1637 = vmatprep.subr.mxu0 %v104
    %1638 = vmatpush1.msra.mxu0 %v103
    %1639 = vmatprep.subr.mxu0 %v108
    %1640 = vmatpush1.msra.mxu0 %v107
    %1641 = vmatprep.subr.mxu0 %v112
    %1642 = vmatpush1.msra.mxu0 %v111
    %1643 = vmatprep.subr.mxu0 %v116
    %1644 = vmatpush1.msra.mxu0 %v115
    %1645 = vmatprep.subr.mxu0 %v120
    %1646 = vmatpush1.msra.mxu0 %v119
    %1647 = vmatprep.subr.mxu0 %v124
    %1648 = vmatpush1.msra.mxu0 %v123
    %1649 = vmatprep.subr.mxu0 %v128
    %1650 = vmatpush1.msra.mxu0 %v127
    %1651 = vmatprep.subr.mxu0 %v132
    %1652 = vmatpush1.msra.mxu0 %v131
    %1653 = vmatprep.subr.mxu0 %v136
    %1654 = vmatpush1.msra.mxu0 %v135
    %1655 = vmatprep.subr.mxu0 %v140
    %1656 = vmatpush1.msra.mxu0 %v139
    %1657 = vmatprep.subr.mxu0 %v144
    %1658 = vmatpush1.msra.mxu0 %v143
    %1659 = vmatprep.subr.mxu0 %v148
    %1660 = vmatpush1.msra.mxu0 %v147
    %1661 = vmatprep.subr.mxu0 %v152
    %1662 = vmatpush1.msra.mxu0 %v151
    %1663 = vmatprep.subr.mxu0 %v156
    %1664 = vmatpush1.msra.mxu0 %v155
    %1665 = vmatprep.subr.mxu0 %v160
    %1666 = vmatpush1.msra.mxu0 %v159
    %1667 = vmatprep.subr.mxu0 %v164
    %1668 = vmatpush1.msra.mxu0 %v163
    %1669 = vmatprep.subr.mxu0 0.0
    %1670 = vmatpush1.msra.mxu0 0.0
    %1671 = vmatprep.subr.mxu0 0.0
    %1672 = vmatpush1.msra.mxu0 0.0
    %1673 = vmatprep.subr.mxu0 0.0
    %1674 = vmatpush1.msra.mxu0 0.0
    %1675 = vmatprep.subr.mxu0 0.0
    %1676 = vmatpush1.msra.mxu0 0.0
    %1677 = vmatprep.subr.mxu0 0.0
    %1678 = vmatpush1.msra.mxu0 0.0
    %1679 = vmatprep.subr.mxu0 0.0
    %1680 = vmatpush1.msra.mxu0 0.0
    %1681 = vmatprep.subr.mxu0 0.0
    %1682 = vmatpush1.msra.mxu0 0.0
    %1683 = vmatprep.subr.mxu0 0.0
    %1684 = vmatpush1.msra.mxu0 0.0
    %1685 = vmatprep.subr.mxu0 0.0
    %1686 = vmatpush1.msra.mxu0 0.0
    %1687 = vmatprep.subr.mxu0 0.0
    %1688 = vmatpush1.msra.mxu0 0.0
    %1689 = vmatprep.subr.mxu0 0.0
    %1690 = vmatpush1.msra.mxu0 0.0
    %1691 = vmatprep.subr.mxu0 0.0
    %1692 = vmatpush1.msra.mxu0 0.0
    %1693 = vmatprep.subr.mxu0 0.0
    %1694 = vmatpush1.msra.mxu0 0.0
    %1695 = vmatprep.subr.mxu0 0.0
    %1696 = vmatpush1.msra.mxu0 0.0
    %1697 = vmatprep.subr.mxu0 0.0
    %1698 = vmatpush1.msra.mxu0 0.0
    %1699 = vmatprep.subr.mxu0 0.0
    %1700 = vmatpush1.msra.mxu0 0.0
    %1701 = vmatprep.mubr.f32.mxu0 0.0
    %1702 = vmatmul.mubr.f32.gmra.mrb[0].mxu0 %v1635
    %v1703 = vpop.f32.mrb[0].mxu0
    %v1704 = vadd.f32 0.0, %v1703
    %v1705 = vpop.f32.mrb[0].mxu0
    %v1706 = vadd.f32 0.0, %v1705
    %1707 = vdwg.mxu0
    %1708 = vmatprep.subr.mxu0 %v106
    %1709 = vmatpush1.msra.mxu0 %v105
    %1710 = vmatprep.subr.mxu0 %v110
    %1711 = vmatpush1.msra.mxu0 %v109
    %1712 = vmatprep.subr.mxu0 %v114
    %1713 = vmatpush1.msra.mxu0 %v113
    %1714 = vmatprep.subr.mxu0 %v118
    %1715 = vmatpush1.msra.mxu0 %v117
    %1716 = vmatprep.subr.mxu0 %v122
    %1717 = vmatpush1.msra.mxu0 %v121
    %1718 = vmatprep.subr.mxu0 %v126
    %1719 = vmatpush1.msra.mxu0 %v125
    %1720 = vmatprep.subr.mxu0 %v130
    %1721 = vmatpush1.msra.mxu0 %v129
    %1722 = vmatprep.subr.mxu0 %v134
    %1723 = vmatpush1.msra.mxu0 %v133
    %1724 = vmatprep.subr.mxu0 %v138
    %1725 = vmatpush1.msra.mxu0 %v137
    %1726 = vmatprep.subr.mxu0 %v142
    %1727 = vmatpush1.msra.mxu0 %v141
    %1728 = vmatprep.subr.mxu0 %v146
    %1729 = vmatpush1.msra.mxu0 %v145
    %1730 = vmatprep.subr.mxu0 %v150
    %1731 = vmatpush1.msra.mxu0 %v149
    %1732 = vmatprep.subr.mxu0 %v154
    %1733 = vmatpush1.msra.mxu0 %v153
    %1734 = vmatprep.subr.mxu0 %v158
    %1735 = vmatpush1.msra.mxu0 %v157
    %1736 = vmatprep.subr.mxu0 %v162
    %1737 = vmatpush1.msra.mxu0 %v161
    %1738 = vmatprep.subr.mxu0 %v166
    %1739 = vmatpush1.msra.mxu0 %v165
    %1740 = vmatprep.subr.mxu0 0.0
    %1741 = vmatpush1.msra.mxu0 0.0
    %1742 = vmatprep.subr.mxu0 0.0
    %1743 = vmatpush1.msra.mxu0 0.0
    %1744 = vmatprep.subr.mxu0 0.0
    %1745 = vmatpush1.msra.mxu0 0.0
    %1746 = vmatprep.subr.mxu0 0.0
    %1747 = vmatpush1.msra.mxu0 0.0
    %1748 = vmatprep.subr.mxu0 0.0
    %1749 = vmatpush1.msra.mxu0 0.0
    %1750 = vmatprep.subr.mxu0 0.0
    %1751 = vmatpush1.msra.mxu0 0.0
    %1752 = vmatprep.subr.mxu0 0.0
    %1753 = vmatpush1.msra.mxu0 0.0
    %1754 = vmatprep.subr.mxu0 0.0
    %1755 = vmatpush1.msra.mxu0 0.0
    %1756 = vmatprep.subr.mxu0 0.0
    %1757 = vmatpush1.msra.mxu0 0.0
    %1758 = vmatprep.subr.mxu0 0.0
    %1759 = vmatpush1.msra.mxu0 0.0
    %1760 = vmatprep.subr.mxu0 0.0
    %1761 = vmatpush1.msra.mxu0 0.0
    %1762 = vmatprep.subr.mxu0 0.0
    %1763 = vmatpush1.msra.mxu0 0.0
    %1764 = vmatprep.subr.mxu0 0.0
    %1765 = vmatpush1.msra.mxu0 0.0
    %1766 = vmatprep.subr.mxu0 0.0
    %1767 = vmatpush1.msra.mxu0 0.0
    %1768 = vmatprep.subr.mxu0 0.0
    %1769 = vmatpush1.msra.mxu0 0.0
    %1770 = vmatprep.subr.mxu0 0.0
    %1771 = vmatpush1.msra.mxu0 0.0
    %1772 = vmatprep.mubr.f32.mxu0 0.0
    %1773 = vmatmul.mubr.f32.gmra.mrb[0].mxu0 %v1635
    %v1774 = vpop.f32.mrb[0].mxu0
    %v1775 = vadd.f32 0.0, %v1774
    %v1776 = vpop.f32.mrb[0].mxu0
    %v1777 = vadd.f32 0.0, %v1776
    %1778 = vdwg.mxu0
    %v1779 = vadd.f32 %v459, %v1704
    %v1780 = vadd.f32 %v461, %v1706
    %v1781 = vadd.f32 %v572, %v1775
    %v1782 = vadd.f32 %v574, %v1777
    %v1783 = vxor.u32 %v1779, 2147483648
    %v1784 = vxor.u32 %v1780, 2147483648
    %v1785 = vxor.u32 %v1781, 2147483648
    %v1786 = vmul.f32 %v1783, 1.442695
    %v1787 = vpow.pop %v1786
    %v1788 = vmul.f32 %v1784, 1.442695
    %v1789 = vpow.pop %v1788
    %v1790 = vmul.f32 %v1785, 1.442695
    %v1791 = vpow.pop %v1790
    %v1792 = vadd.f32 %v1787, 1.0
    %v1793 = vadd.f32 %v1789, 1.0
    %v1794 = vadd.f32 %v1791, 1.0
    %v1795 = vrcp.pop %v1792
    %v1796 = vmul.f32 1.0, %v1795
    %v1797 = vrcp.pop %v1793
    %v1798 = vmul.f32 1.0, %v1797
    %v1799 = vrcp.pop %v1794
    %v1800 = vmul.f32 1.0, %v1799
    %v1801 = vtanh.pop %v1782
    %v1802 = vmul.f32 %v1798, %v1636
    %v1803 = vmul.f32 %v1796, %v1801
    %v1804 = vadd.f32 %v1802, %v1803
    %v1805 = vtanh.pop %v1804
    %v1806 = vmul.f32 %v1800, %v1805
    %1807 = vst [vmem:[#allocation2] sm:$0xff] %v1806
    %1808 = vst [vmem:[#allocation3] sm:$0xff] %v1804
    %v1809 = vld [vmem:[#allocation2] sm:$0xff]
    %v1810 = vld [vmem:[#allocation2 + $0x8] sm:$0xff]
    %v1811 = vld [vmem:[#allocation3 + $0x8] sm:$0xff]
    %1812 = vmatprep.subr.mxu0 %v168
    %1813 = vmatpush1.msra.mxu0 %v167
    %1814 = vmatprep.subr.mxu0 %v172
    %1815 = vmatpush1.msra.mxu0 %v171
    %1816 = vmatprep.subr.mxu0 %v176
    %1817 = vmatpush1.msra.mxu0 %v175
    %1818 = vmatprep.subr.mxu0 %v180
    %1819 = vmatpush1.msra.mxu0 %v179
    %1820 = vmatprep.subr.mxu0 %v184
    %1821 = vmatpush1.msra.mxu0 %v183
    %1822 = vmatprep.subr.mxu0 %v188
    %1823 = vmatpush1.msra.mxu0 %v187
    %1824 = vmatprep.subr.mxu0 %v192
    %1825 = vmatpush1.msra.mxu0 %v191
    %1826 = vmatprep.subr.mxu0 %v196
    %1827 = vmatpush1.msra.mxu0 %v195
    %1828 = vmatprep.subr.mxu0 %v200
    %1829 = vmatpush1.msra.mxu0 %v199
    %1830 = vmatprep.subr.mxu0 %v204
    %1831 = vmatpush1.msra.mxu0 %v203
    %1832 = vmatprep.subr.mxu0 %v208
    %1833 = vmatpush1.msra.mxu0 %v207
    %1834 = vmatprep.subr.mxu0 %v212
    %1835 = vmatpush1.msra.mxu0 %v211
    %1836 = vmatprep.subr.mxu0 %v216
    %1837 = vmatpush1.msra.mxu0 %v215
    %1838 = vmatprep.subr.mxu0 %v220
    %1839 = vmatpush1.msra.mxu0 %v219
    %1840 = vmatprep.subr.mxu0 %v224
    %1841 = vmatpush1.msra.mxu0 %v223
    %1842 = vmatprep.subr.mxu0 %v228
    %1843 = vmatpush1.msra.mxu0 %v227
    %1844 = vmatprep.subr.mxu0 %v232
    %1845 = vmatpush1.msra.mxu0 %v231
    %1846 = vmatprep.subr.mxu0 %v236
    %1847 = vmatpush1.msra.mxu0 %v235
    %1848 = vmatprep.subr.mxu0 %v240
    %1849 = vmatpush1.msra.mxu0 %v239
    %1850 = vmatprep.subr.mxu0 %v244
    %1851 = vmatpush1.msra.mxu0 %v243
    %1852 = vmatprep.subr.mxu0 %v248
    %1853 = vmatpush1.msra.mxu0 %v247
    %1854 = vmatprep.subr.mxu0 %v252
    %1855 = vmatpush1.msra.mxu0 %v251
    %1856 = vmatprep.subr.mxu0 %v256
    %1857 = vmatpush1.msra.mxu0 %v255
    %1858 = vmatprep.subr.mxu0 %v260
    %1859 = vmatpush1.msra.mxu0 %v259
    %1860 = vmatprep.subr.mxu0 %v264
    %1861 = vmatpush1.msra.mxu0 %v263
    %1862 = vmatprep.subr.mxu0 %v268
    %1863 = vmatpush1.msra.mxu0 %v267
    %1864 = vmatprep.subr.mxu0 %v272
    %1865 = vmatpush1.msra.mxu0 %v271
    %1866 = vmatprep.subr.mxu0 %v276
    %1867 = vmatpush1.msra.mxu0 %v275
    %1868 = vmatprep.subr.mxu0 %v280
    %1869 = vmatpush1.msra.mxu0 %v279
    %1870 = vmatprep.subr.mxu0 %v284
    %1871 = vmatpush1.msra.mxu0 %v283
    %1872 = vmatprep.subr.mxu0 %v288
    %1873 = vmatpush1.msra.mxu0 %v287
    %1874 = vmatprep.subr.mxu0 %v292
    %1875 = vmatpush1.msra.mxu0 %v291
    %1876 = vmatprep.mubr.f32.mxu0 %v1810
    %1877 = vmatmul.mubr.f32.gmra.mrb[0].mxu0 %v1809
    %v1878 = vpop.f32.mrb[0].mxu0
    %v1879 = vadd.f32 %v301, %v1878
    %v1880 = vpop.f32.mrb[0].mxu0
    %v1881 = vadd.f32 %v305, %v1880
    %1882 = vdwg.mxu0
    %1883 = vmatprep.subr.mxu0 %v170
    %1884 = vmatpush1.msra.mxu0 %v169
    %1885 = vmatprep.subr.mxu0 %v174
    %1886 = vmatpush1.msra.mxu0 %v173
    %1887 = vmatprep.subr.mxu0 %v178
    %1888 = vmatpush1.msra.mxu0 %v177
    %1889 = vmatprep.subr.mxu0 %v182
    %1890 = vmatpush1.msra.mxu0 %v181
    %1891 = vmatprep.subr.mxu0 %v186
    %1892 = vmatpush1.msra.mxu0 %v185
    %1893 = vmatprep.subr.mxu0 %v190
    %1894 = vmatpush1.msra.mxu0 %v189
    %1895 = vmatprep.subr.mxu0 %v194
    %1896 = vmatpush1.msra.mxu0 %v193
    %1897 = vmatprep.subr.mxu0 %v198
    %1898 = vmatpush1.msra.mxu0 %v197
    %1899 = vmatprep.subr.mxu0 %v202
    %1900 = vmatpush1.msra.mxu0 %v201
    %1901 = vmatprep.subr.mxu0 %v206
    %1902 = vmatpush1.msra.mxu0 %v205
    %1903 = vmatprep.subr.mxu0 %v210
    %1904 = vmatpush1.msra.mxu0 %v209
    %1905 = vmatprep.subr.mxu0 %v214
    %1906 = vmatpush1.msra.mxu0 %v213
    %1907 = vmatprep.subr.mxu0 %v218
    %1908 = vmatpush1.msra.mxu0 %v217
    %1909 = vmatprep.subr.mxu0 %v222
    %1910 = vmatpush1.msra.mxu0 %v221
    %1911 = vmatprep.subr.mxu0 %v226
    %1912 = vmatpush1.msra.mxu0 %v225
    %1913 = vmatprep.subr.mxu0 %v230
    %1914 = vmatpush1.msra.mxu0 %v229
    %1915 = vmatprep.subr.mxu0 %v234
    %1916 = vmatpush1.msra.mxu0 %v233
    %1917 = vmatprep.subr.mxu0 %v238
    %1918 = vmatpush1.msra.mxu0 %v237
    %1919 = vmatprep.subr.mxu0 %v242
    %1920 = vmatpush1.msra.mxu0 %v241
    %1921 = vmatprep.subr.mxu0 %v246
    %1922 = vmatpush1.msra.mxu0 %v245
    %1923 = vmatprep.subr.mxu0 %v250
    %1924 = vmatpush1.msra.mxu0 %v249
    %1925 = vmatprep.subr.mxu0 %v254
    %1926 = vmatpush1.msra.mxu0 %v253
    %1927 = vmatprep.subr.mxu0 %v258
    %1928 = vmatpush1.msra.mxu0 %v257
    %1929 = vmatprep.subr.mxu0 %v262
    %1930 = vmatpush1.msra.mxu0 %v261
    %1931 = vmatprep.subr.mxu0 %v266
    %1932 = vmatpush1.msra.mxu0 %v265
    %1933 = vmatprep.subr.mxu0 %v270
    %1934 = vmatpush1.msra.mxu0 %v269
    %1935 = vmatprep.subr.mxu0 %v274
    %1936 = vmatpush1.msra.mxu0 %v273
    %1937 = vmatprep.subr.mxu0 %v278
    %1938 = vmatpush1.msra.mxu0 %v277
    %1939 = vmatprep.subr.mxu0 %v282
    %1940 = vmatpush1.msra.mxu0 %v281
    %1941 = vmatprep.subr.mxu0 %v286
    %1942 = vmatpush1.msra.mxu0 %v285
    %1943 = vmatprep.subr.mxu0 %v290
    %1944 = vmatpush1.msra.mxu0 %v289
    %1945 = vmatprep.subr.mxu0 %v294
    %1946 = vmatpush1.msra.mxu0 %v293
    %1947 = vmatprep.mubr.f32.mxu0 %v1810
    %1948 = vmatmul.mubr.f32.gmra.mrb[0].mxu0 %v1809
    %v1949 = vpop.f32.mrb[0].mxu0
    %v1950 = vadd.f32 %v309, %v1949
    %v1951 = vpop.f32.mrb[0].mxu0
    %v1952 = vadd.f32 %v313, %v1951
    %1953 = vdwg.mxu0
    %v1954 = vxor.u32 %v1879, 2147483648
    %v1955 = vxor.u32 %v1881, 2147483648
    %v1956 = vxor.u32 %v1950, 2147483648
    %v1957 = vmul.f32 %v1954, 1.442695
    %v1958 = vpow.pop %v1957
    %v1959 = vmul.f32 %v1955, 1.442695
    %v1960 = vpow.pop %v1959
    %v1961 = vmul.f32 %v1956, 1.442695
    %v1962 = vpow.pop %v1961
    %v1963 = vadd.f32 %v1958, 1.0
    %v1964 = vadd.f32 %v1960, 1.0
    %v1965 = vadd.f32 %v1962, 1.0
    %v1966 = vrcp.pop %v1963
    %v1967 = vmul.f32 1.0, %v1966
    %v1968 = vrcp.pop %v1964
    %v1969 = vmul.f32 1.0, %v1968
    %v1970 = vrcp.pop %v1965
    %v1971 = vmul.f32 1.0, %v1970
    %v1972 = vtanh.pop %v1952
    %v1973 = vmul.f32 %v1969, %v1811
    %v1974 = vmul.f32 %v1967, %v1972
    %v1975 = vadd.f32 %v1973, %v1974
    %v1976 = vtanh.pop %v1975
    %v1977 = vmul.f32 %v1971, %v1976
    %1978 = vst [vmem:[#allocation2 + $0x8] sm:$0xff] %v1977
    %1979 = vst [vmem:[#allocation3 + $0x8] sm:$0xff] %v1975
    %v1980 = vld [vmem:[#allocation2] sm:$0xff]
    %v1981 = vld [vmem:[#allocation3] sm:$0xff]
    %1982 = vmatprep.subr.mxu0 %v104
    %1983 = vmatpush1.msra.mxu0 %v103
    %1984 = vmatprep.subr.mxu0 %v108
    %1985 = vmatpush1.msra.mxu0 %v107
    %1986 = vmatprep.subr.mxu0 %v112
    %1987 = vmatpush1.msra.mxu0 %v111
    %1988 = vmatprep.subr.mxu0 %v116
    %1989 = vmatpush1.msra.mxu0 %v115
    %1990 = vmatprep.subr.mxu0 %v120
    %1991 = vmatpush1.msra.mxu0 %v119
    %1992 = vmatprep.subr.mxu0 %v124
    %1993 = vmatpush1.msra.mxu0 %v123
    %1994 = vmatprep.subr.mxu0 %v128
    %1995 = vmatpush1.msra.mxu0 %v127
    %1996 = vmatprep.subr.mxu0 %v132
    %1997 = vmatpush1.msra.mxu0 %v131
    %1998 = vmatprep.subr.mxu0 %v136
    %1999 = vmatpush1.msra.mxu0 %v135
    %2000 = vmatprep.subr.mxu0 %v140
    %2001 = vmatpush1.msra.mxu0 %v139
    %2002 = vmatprep.subr.mxu0 %v144
    %2003 = vmatpush1.msra.mxu0 %v143
    %2004 = vmatprep.subr.mxu0 %v148
    %2005 = vmatpush1.msra.mxu0 %v147
    %2006 = vmatprep.subr.mxu0 %v152
    %2007 = vmatpush1.msra.mxu0 %v151
    %2008 = vmatprep.subr.mxu0 %v156
    %2009 = vmatpush1.msra.mxu0 %v155
    %2010 = vmatprep.subr.mxu0 %v160
    %2011 = vmatpush1.msra.mxu0 %v159
    %2012 = vmatprep.subr.mxu0 %v164
    %2013 = vmatpush1.msra.mxu0 %v163
    %2014 = vmatprep.subr.mxu0 0.0
    %2015 = vmatpush1.msra.mxu0 0.0
    %2016 = vmatprep.subr.mxu0 0.0
    %2017 = vmatpush1.msra.mxu0 0.0
    %2018 = vmatprep.subr.mxu0 0.0
    %2019 = vmatpush1.msra.mxu0 0.0
    %2020 = vmatprep.subr.mxu0 0.0
    %2021 = vmatpush1.msra.mxu0 0.0
    %2022 = vmatprep.subr.mxu0 0.0
    %2023 = vmatpush1.msra.mxu0 0.0
    %2024 = vmatprep.subr.mxu0 0.0
    %2025 = vmatpush1.msra.mxu0 0.0
    %2026 = vmatprep.subr.mxu0 0.0
    %2027 = vmatpush1.msra.mxu0 0.0
    %2028 = vmatprep.subr.mxu0 0.0
    %2029 = vmatpush1.msra.mxu0 0.0
    %2030 = vmatprep.subr.mxu0 0.0
    %2031 = vmatpush1.msra.mxu0 0.0
    %2032 = vmatprep.subr.mxu0 0.0
    %2033 = vmatpush1.msra.mxu0 0.0
    %2034 = vmatprep.subr.mxu0 0.0
    %2035 = vmatpush1.msra.mxu0 0.0
    %2036 = vmatprep.subr.mxu0 0.0
    %2037 = vmatpush1.msra.mxu0 0.0
    %2038 = vmatprep.subr.mxu0 0.0
    %2039 = vmatpush1.msra.mxu0 0.0
    %2040 = vmatprep.subr.mxu0 0.0
    %2041 = vmatpush1.msra.mxu0 0.0
    %2042 = vmatprep.subr.mxu0 0.0
    %2043 = vmatpush1.msra.mxu0 0.0
    %2044 = vmatprep.subr.mxu0 0.0
    %2045 = vmatpush1.msra.mxu0 0.0
    %2046 = vmatprep.mubr.f32.mxu0 0.0
    %2047 = vmatmul.mubr.f32.gmra.mrb[0].mxu0 %v1980
    %v2048 = vpop.f32.mrb[0].mxu0
    %v2049 = vadd.f32 0.0, %v2048
    %v2050 = vpop.f32.mrb[0].mxu0
    %v2051 = vadd.f32 0.0, %v2050
    %2052 = vdwg.mxu0
    %2053 = vmatprep.subr.mxu0 %v106
    %2054 = vmatpush1.msra.mxu0 %v105
    %2055 = vmatprep.subr.mxu0 %v110
    %2056 = vmatpush1.msra.mxu0 %v109
    %2057 = vmatprep.subr.mxu0 %v114
    %2058 = vmatpush1.msra.mxu0 %v113
    %2059 = vmatprep.subr.mxu0 %v118
    %2060 = vmatpush1.msra.mxu0 %v117
    %2061 = vmatprep.subr.mxu0 %v122
    %2062 = vmatpush1.msra.mxu0 %v121
    %2063 = vmatprep.subr.mxu0 %v126
    %2064 = vmatpush1.msra.mxu0 %v125
    %2065 = vmatprep.subr.mxu0 %v130
    %2066 = vmatpush1.msra.mxu0 %v129
    %2067 = vmatprep.subr.mxu0 %v134
    %2068 = vmatpush1.msra.mxu0 %v133
    %2069 = vmatprep.subr.mxu0 %v138
    %2070 = vmatpush1.msra.mxu0 %v137
    %2071 = vmatprep.subr.mxu0 %v142
    %2072 = vmatpush1.msra.mxu0 %v141
    %2073 = vmatprep.subr.mxu0 %v146
    %2074 = vmatpush1.msra.mxu0 %v145
    %2075 = vmatprep.subr.mxu0 %v150
    %2076 = vmatpush1.msra.mxu0 %v149
    %2077 = vmatprep.subr.mxu0 %v154
    %2078 = vmatpush1.msra.mxu0 %v153
    %2079 = vmatprep.subr.mxu0 %v158
    %2080 = vmatpush1.msra.mxu0 %v157
    %2081 = vmatprep.subr.mxu0 %v162
    %2082 = vmatpush1.msra.mxu0 %v161
    %2083 = vmatprep.subr.mxu0 %v166
    %2084 = vmatpush1.msra.mxu0 %v165
    %2085 = vmatprep.subr.mxu0 0.0
    %2086 = vmatpush1.msra.mxu0 0.0
    %2087 = vmatprep.subr.mxu0 0.0
    %2088 = vmatpush1.msra.mxu0 0.0
    %2089 = vmatprep.subr.mxu0 0.0
    %2090 = vmatpush1.msra.mxu0 0.0
    %2091 = vmatprep.subr.mxu0 0.0
    %2092 = vmatpush1.msra.mxu0 0.0
    %2093 = vmatprep.subr.mxu0 0.0
    %2094 = vmatpush1.msra.mxu0 0.0
    %2095 = vmatprep.subr.mxu0 0.0
    %2096 = vmatpush1.msra.mxu0 0.0
    %2097 = vmatprep.subr.mxu0 0.0
    %2098 = vmatpush1.msra.mxu0 0.0
    %2099 = vmatprep.subr.mxu0 0.0
    %2100 = vmatpush1.msra.mxu0 0.0
    %2101 = vmatprep.subr.mxu0 0.0
    %2102 = vmatpush1.msra.mxu0 0.0
    %2103 = vmatprep.subr.mxu0 0.0
    %2104 = vmatpush1.msra.mxu0 0.0
    %2105 = vmatprep.subr.mxu0 0.0
    %2106 = vmatpush1.msra.mxu0 0.0
    %2107 = vmatprep.subr.mxu0 0.0
    %2108 = vmatpush1.msra.mxu0 0.0
    %2109 = vmatprep.subr.mxu0 0.0
    %2110 = vmatpush1.msra.mxu0 0.0
    %2111 = vmatprep.subr.mxu0 0.0
    %2112 = vmatpush1.msra.mxu0 0.0
    %2113 = vmatprep.subr.mxu0 0.0
    %2114 = vmatpush1.msra.mxu0 0.0
    %2115 = vmatprep.subr.mxu0 0.0
    %2116 = vmatpush1.msra.mxu0 0.0
    %2117 = vmatprep.mubr.f32.mxu0 0.0
    %2118 = vmatmul.mubr.f32.gmra.mrb[0].mxu0 %v1980
    %v2119 = vpop.f32.mrb[0].mxu0
    %v2120 = vadd.f32 0.0, %v2119
    %v2121 = vpop.f32.mrb[0].mxu0
    %v2122 = vadd.f32 0.0, %v2121
    %2123 = vdwg.mxu0
    %v2124 = vadd.f32 %v465, %v2049
    %v2125 = vadd.f32 %v467, %v2051
    %v2126 = vadd.f32 %v578, %v2120
    %v2127 = vadd.f32 %v580, %v2122
    %v2128 = vxor.u32 %v2124, 2147483648
    %v2129 = vxor.u32 %v2125, 2147483648
    %v2130 = vxor.u32 %v2126, 2147483648
    %v2131 = vmul.f32 %v2128, 1.442695
    %v2132 = vpow.pop %v2131
    %v2133 = vmul.f32 %v2129, 1.442695
    %v2134 = vpow.pop %v2133
    %v2135 = vmul.f32 %v2130, 1.442695
    %v2136 = vpow.pop %v2135
    %v2137 = vadd.f32 %v2132, 1.0
    %v2138 = vadd.f32 %v2134, 1.0
    %v2139 = vadd.f32 %v2136, 1.0
    %v2140 = vrcp.pop %v2137
    %v2141 = vmul.f32 1.0, %v2140
    %v2142 = vrcp.pop %v2138
    %v2143 = vmul.f32 1.0, %v2142
    %v2144 = vrcp.pop %v2139
    %v2145 = vmul.f32 1.0, %v2144
    %v2146 = vtanh.pop %v2127
    %v2147 = vmul.f32 %v2143, %v1981
    %v2148 = vmul.f32 %v2141, %v2146
    %v2149 = vadd.f32 %v2147, %v2148
    %v2150 = vtanh.pop %v2149
    %v2151 = vmul.f32 %v2145, %v2150
    %2152 = vst [vmem:[#allocation2] sm:$0xff] %v2151
    %2153 = vst [vmem:[#allocation3] sm:$0xff] %v2149
    %v2154 = vld [vmem:[#allocation2] sm:$0xff]
    %v2155 = vld [vmem:[#allocation2 + $0x8] sm:$0xff]
    %v2156 = vld [vmem:[#allocation3 + $0x8] sm:$0xff]
    %2157 = vmatprep.subr.mxu0 %v168
    %2158 = vmatpush1.msra.mxu0 %v167
    %2159 = vmatprep.subr.mxu0 %v172
    %2160 = vmatpush1.msra.mxu0 %v171
    %2161 = vmatprep.subr.mxu0 %v176
    %2162 = vmatpush1.msra.mxu0 %v175
    %2163 = vmatprep.subr.mxu0 %v180
    %2164 = vmatpush1.msra.mxu0 %v179
    %2165 = vmatprep.subr.mxu0 %v184
    %2166 = vmatpush1.msra.mxu0 %v183
    %2167 = vmatprep.subr.mxu0 %v188
    %2168 = vmatpush1.msra.mxu0 %v187
    %2169 = vmatprep.subr.mxu0 %v192
    %2170 = vmatpush1.msra.mxu0 %v191
    %2171 = vmatprep.subr.mxu0 %v196
    %2172 = vmatpush1.msra.mxu0 %v195
    %2173 = vmatprep.subr.mxu0 %v200
    %2174 = vmatpush1.msra.mxu0 %v199
    %2175 = vmatprep.subr.mxu0 %v204
    %2176 = vmatpush1.msra.mxu0 %v203
    %2177 = vmatprep.subr.mxu0 %v208
    %2178 = vmatpush1.msra.mxu0 %v207
    %2179 = vmatprep.subr.mxu0 %v212
    %2180 = vmatpush1.msra.mxu0 %v211
    %2181 = vmatprep.subr.mxu0 %v216
    %2182 = vmatpush1.msra.mxu0 %v215
    %2183 = vmatprep.subr.mxu0 %v220
    %2184 = vmatpush1.msra.mxu0 %v219
    %2185 = vmatprep.subr.mxu0 %v224
    %2186 = vmatpush1.msra.mxu0 %v223
    %2187 = vmatprep.subr.mxu0 %v228
    %2188 = vmatpush1.msra.mxu0 %v227
    %2189 = vmatprep.subr.mxu0 %v232
    %2190 = vmatpush1.msra.mxu0 %v231
    %2191 = vmatprep.subr.mxu0 %v236
    %2192 = vmatpush1.msra.mxu0 %v235
    %2193 = vmatprep.subr.mxu0 %v240
    %2194 = vmatpush1.msra.mxu0 %v239
    %2195 = vmatprep.subr.mxu0 %v244
    %2196 = vmatpush1.msra.mxu0 %v243
    %2197 = vmatprep.subr.mxu0 %v248
    %2198 = vmatpush1.msra.mxu0 %v247
    %2199 = vmatprep.subr.mxu0 %v252
    %2200 = vmatpush1.msra.mxu0 %v251
    %2201 = vmatprep.subr.mxu0 %v256
    %2202 = vmatpush1.msra.mxu0 %v255
    %2203 = vmatprep.subr.mxu0 %v260
    %2204 = vmatpush1.msra.mxu0 %v259
    %2205 = vmatprep.subr.mxu0 %v264
    %2206 = vmatpush1.msra.mxu0 %v263
    %2207 = vmatprep.subr.mxu0 %v268
    %2208 = vmatpush1.msra.mxu0 %v267
    %2209 = vmatprep.subr.mxu0 %v272
    %2210 = vmatpush1.msra.mxu0 %v271
    %2211 = vmatprep.subr.mxu0 %v276
    %2212 = vmatpush1.msra.mxu0 %v275
    %2213 = vmatprep.subr.mxu0 %v280
    %2214 = vmatpush1.msra.mxu0 %v279
    %2215 = vmatprep.subr.mxu0 %v284
    %2216 = vmatpush1.msra.mxu0 %v283
    %2217 = vmatprep.subr.mxu0 %v288
    %2218 = vmatpush1.msra.mxu0 %v287
    %2219 = vmatprep.subr.mxu0 %v292
    %2220 = vmatpush1.msra.mxu0 %v291
    %2221 = vmatprep.mubr.f32.mxu0 %v2155
    %2222 = vmatmul.mubr.f32.gmra.mrb[0].mxu0 %v2154
    %v2223 = vpop.f32.mrb[0].mxu0
    %v2224 = vadd.f32 %v301, %v2223
    %v2225 = vpop.f32.mrb[0].mxu0
    %v2226 = vadd.f32 %v305, %v2225
    %2227 = vdwg.mxu0
    %2228 = vmatprep.subr.mxu0 %v170
    %2229 = vmatpush1.msra.mxu0 %v169
    %2230 = vmatprep.subr.mxu0 %v174
    %2231 = vmatpush1.msra.mxu0 %v173
    %2232 = vmatprep.subr.mxu0 %v178
    %2233 = vmatpush1.msra.mxu0 %v177
    %2234 = vmatprep.subr.mxu0 %v182
    %2235 = vmatpush1.msra.mxu0 %v181
    %2236 = vmatprep.subr.mxu0 %v186
    %2237 = vmatpush1.msra.mxu0 %v185
    %2238 = vmatprep.subr.mxu0 %v190
    %2239 = vmatpush1.msra.mxu0 %v189
    %2240 = vmatprep.subr.mxu0 %v194
    %2241 = vmatpush1.msra.mxu0 %v193
    %2242 = vmatprep.subr.mxu0 %v198
    %2243 = vmatpush1.msra.mxu0 %v197
    %2244 = vmatprep.subr.mxu0 %v202
    %2245 = vmatpush1.msra.mxu0 %v201
    %2246 = vmatprep.subr.mxu0 %v206
    %2247 = vmatpush1.msra.mxu0 %v205
    %2248 = vmatprep.subr.mxu0 %v210
    %2249 = vmatpush1.msra.mxu0 %v209
    %2250 = vmatprep.subr.mxu0 %v214
    %2251 = vmatpush1.msra.mxu0 %v213
    %2252 = vmatprep.subr.mxu0 %v218
    %2253 = vmatpush1.msra.mxu0 %v217
    %2254 = vmatprep.subr.mxu0 %v222
    %2255 = vmatpush1.msra.mxu0 %v221
    %2256 = vmatprep.subr.mxu0 %v226
    %2257 = vmatpush1.msra.mxu0 %v225
    %2258 = vmatprep.subr.mxu0 %v230
    %2259 = vmatpush1.msra.mxu0 %v229
    %2260 = vmatprep.subr.mxu0 %v234
    %2261 = vmatpush1.msra.mxu0 %v233
    %2262 = vmatprep.subr.mxu0 %v238
    %2263 = vmatpush1.msra.mxu0 %v237
    %2264 = vmatprep.subr.mxu0 %v242
    %2265 = vmatpush1.msra.mxu0 %v241
    %2266 = vmatprep.subr.mxu0 %v246
    %2267 = vmatpush1.msra.mxu0 %v245
    %2268 = vmatprep.subr.mxu0 %v250
    %2269 = vmatpush1.msra.mxu0 %v249
    %2270 = vmatprep.subr.mxu0 %v254
    %2271 = vmatpush1.msra.mxu0 %v253
    %2272 = vmatprep.subr.mxu0 %v258
    %2273 = vmatpush1.msra.mxu0 %v257
    %2274 = vmatprep.subr.mxu0 %v262
    %2275 = vmatpush1.msra.mxu0 %v261
    %2276 = vmatprep.subr.mxu0 %v266
    %2277 = vmatpush1.msra.mxu0 %v265
    %2278 = vmatprep.subr.mxu0 %v270
    %2279 = vmatpush1.msra.mxu0 %v269
    %2280 = vmatprep.subr.mxu0 %v274
    %2281 = vmatpush1.msra.mxu0 %v273
    %2282 = vmatprep.subr.mxu0 %v278
    %2283 = vmatpush1.msra.mxu0 %v277
    %2284 = vmatprep.subr.mxu0 %v282
    %2285 = vmatpush1.msra.mxu0 %v281
    %2286 = vmatprep.subr.mxu0 %v286
    %2287 = vmatpush1.msra.mxu0 %v285
    %2288 = vmatprep.subr.mxu0 %v290
    %2289 = vmatpush1.msra.mxu0 %v289
    %2290 = vmatprep.subr.mxu0 %v294
    %2291 = vmatpush1.msra.mxu0 %v293
    %2292 = vmatprep.mubr.f32.mxu0 %v2155
    %2293 = vmatmul.mubr.f32.gmra.mrb[0].mxu0 %v2154
    %v2294 = vpop.f32.mrb[0].mxu0
    %v2295 = vadd.f32 %v309, %v2294
    %v2296 = vpop.f32.mrb[0].mxu0
    %v2297 = vadd.f32 %v313, %v2296
    %2298 = vdwg.mxu0
    %v2299 = vxor.u32 %v2224, 2147483648
    %v2300 = vxor.u32 %v2226, 2147483648
    %v2301 = vxor.u32 %v2295, 2147483648
    %v2302 = vmul.f32 %v2299, 1.442695
    %v2303 = vpow.pop %v2302
    %v2304 = vmul.f32 %v2300, 1.442695
    %v2305 = vpow.pop %v2304
    %v2306 = vmul.f32 %v2301, 1.442695
    %v2307 = vpow.pop %v2306
    %v2308 = vadd.f32 %v2303, 1.0
    %v2309 = vadd.f32 %v2305, 1.0
    %v2310 = vadd.f32 %v2307, 1.0
    %v2311 = vrcp.pop %v2308
    %v2312 = vmul.f32 1.0, %v2311
    %v2313 = vrcp.pop %v2309
    %v2314 = vmul.f32 1.0, %v2313
    %v2315 = vrcp.pop %v2310
    %v2316 = vmul.f32 1.0, %v2315
    %v2317 = vtanh.pop %v2297
    %v2318 = vmul.f32 %v2314, %v2156
    %v2319 = vmul.f32 %v2312, %v2317
    %v2320 = vadd.f32 %v2318, %v2319
    %v2321 = vtanh.pop %v2320
    %v2322 = vmul.f32 %v2316, %v2321
    %2323 = vst [vmem:[#allocation2 + $0x8] sm:$0xff] %v2322
    %2324 = vst [vmem:[#allocation3 + $0x8] sm:$0xff] %v2320
    %v2325 = vld [vmem:[#allocation2] sm:$0xff]
    %v2326 = vld [vmem:[#allocation3] sm:$0xff]
    %2327 = vmatprep.subr.mxu0 %v104
    %2328 = vmatpush1.msra.mxu0 %v103
    %2329 = vmatprep.subr.mxu0 %v108
    %2330 = vmatpush1.msra.mxu0 %v107
    %2331 = vmatprep.subr.mxu0 %v112
    %2332 = vmatpush1.msra.mxu0 %v111
    %2333 = vmatprep.subr.mxu0 %v116
    %2334 = vmatpush1.msra.mxu0 %v115
    %2335 = vmatprep.subr.mxu0 %v120
    %2336 = vmatpush1.msra.mxu0 %v119
    %2337 = vmatprep.subr.mxu0 %v124
    %2338 = vmatpush1.msra.mxu0 %v123
    %2339 = vmatprep.subr.mxu0 %v128
    %2340 = vmatpush1.msra.mxu0 %v127
    %2341 = vmatprep.subr.mxu0 %v132
    %2342 = vmatpush1.msra.mxu0 %v131
    %2343 = vmatprep.subr.mxu0 %v136
    %2344 = vmatpush1.msra.mxu0 %v135
    %2345 = vmatprep.subr.mxu0 %v140
    %2346 = vmatpush1.msra.mxu0 %v139
    %2347 = vmatprep.subr.mxu0 %v144
    %2348 = vmatpush1.msra.mxu0 %v143
    %2349 = vmatprep.subr.mxu0 %v148
    %2350 = vmatpush1.msra.mxu0 %v147
    %2351 = vmatprep.subr.mxu0 %v152
    %2352 = vmatpush1.msra.mxu0 %v151
    %2353 = vmatprep.subr.mxu0 %v156
    %2354 = vmatpush1.msra.mxu0 %v155
    %2355 = vmatprep.subr.mxu0 %v160
    %2356 = vmatpush1.msra.mxu0 %v159
    %2357 = vmatprep.subr.mxu0 %v164
    %2358 = vmatpush1.msra.mxu0 %v163
    %2359 = vmatprep.subr.mxu0 0.0
    %2360 = vmatpush1.msra.mxu0 0.0
    %2361 = vmatprep.subr.mxu0 0.0
    %2362 = vmatpush1.msra.mxu0 0.0
    %2363 = vmatprep.subr.mxu0 0.0
    %2364 = vmatpush1.msra.mxu0 0.0
    %2365 = vmatprep.subr.mxu0 0.0
    %2366 = vmatpush1.msra.mxu0 0.0
    %2367 = vmatprep.subr.mxu0 0.0
    %2368 = vmatpush1.msra.mxu0 0.0
    %2369 = vmatprep.subr.mxu0 0.0
    %2370 = vmatpush1.msra.mxu0 0.0
    %2371 = vmatprep.subr.mxu0 0.0
    %2372 = vmatpush1.msra.mxu0 0.0
    %2373 = vmatprep.subr.mxu0 0.0
    %2374 = vmatpush1.msra.mxu0 0.0
    %2375 = vmatprep.subr.mxu0 0.0
    %2376 = vmatpush1.msra.mxu0 0.0
    %2377 = vmatprep.subr.mxu0 0.0
    %2378 = vmatpush1.msra.mxu0 0.0
    %2379 = vmatprep.subr.mxu0 0.0
    %2380 = vmatpush1.msra.mxu0 0.0
    %2381 = vmatprep.subr.mxu0 0.0
    %2382 = vmatpush1.msra.mxu0 0.0
    %2383 = vmatprep.subr.mxu0 0.0
    %2384 = vmatpush1.msra.mxu0 0.0
    %2385 = vmatprep.subr.mxu0 0.0
    %2386 = vmatpush1.msra.mxu0 0.0
    %2387 = vmatprep.subr.mxu0 0.0
    %2388 = vmatpush1.msra.mxu0 0.0
    %2389 = vmatprep.subr.mxu0 0.0
    %2390 = vmatpush1.msra.mxu0 0.0
    %2391 = vmatprep.mubr.f32.mxu0 0.0
    %2392 = vmatmul.mubr.f32.gmra.mrb[0].mxu0 %v2325
    %v2393 = vpop.f32.mrb[0].mxu0
    %v2394 = vadd.f32 0.0, %v2393
    %v2395 = vpop.f32.mrb[0].mxu0
    %v2396 = vadd.f32 0.0, %v2395
    %2397 = vdwg.mxu0
    %2398 = vmatprep.subr.mxu0 %v106
    %2399 = vmatpush1.msra.mxu0 %v105
    %2400 = vmatprep.subr.mxu0 %v110
    %2401 = vmatpush1.msra.mxu0 %v109
    %2402 = vmatprep.subr.mxu0 %v114
    %2403 = vmatpush1.msra.mxu0 %v113
    %2404 = vmatprep.subr.mxu0 %v118
    %2405 = vmatpush1.msra.mxu0 %v117
    %2406 = vmatprep.subr.mxu0 %v122
    %2407 = vmatpush1.msra.mxu0 %v121
    %2408 = vmatprep.subr.mxu0 %v126
    %2409 = vmatpush1.msra.mxu0 %v125
    %2410 = vmatprep.subr.mxu0 %v130
    %2411 = vmatpush1.msra.mxu0 %v129
    %2412 = vmatprep.subr.mxu0 %v134
    %2413 = vmatpush1.msra.mxu0 %v133
    %2414 = vmatprep.subr.mxu0 %v138
    %2415 = vmatpush1.msra.mxu0 %v137
    %2416 = vmatprep.subr.mxu0 %v142
    %2417 = vmatpush1.msra.mxu0 %v141
    %2418 = vmatprep.subr.mxu0 %v146
    %2419 = vmatpush1.msra.mxu0 %v145
    %2420 = vmatprep.subr.mxu0 %v150
    %2421 = vmatpush1.msra.mxu0 %v149
    %2422 = vmatprep.subr.mxu0 %v154
    %2423 = vmatpush1.msra.mxu0 %v153
    %2424 = vmatprep.subr.mxu0 %v158
    %2425 = vmatpush1.msra.mxu0 %v157
    %2426 = vmatprep.subr.mxu0 %v162
    %2427 = vmatpush1.msra.mxu0 %v161
    %2428 = vmatprep.subr.mxu0 %v166
    %2429 = vmatpush1.msra.mxu0 %v165
    %2430 = vmatprep.subr.mxu0 0.0
    %2431 = vmatpush1.msra.mxu0 0.0
    %2432 = vmatprep.subr.mxu0 0.0
    %2433 = vmatpush1.msra.mxu0 0.0
    %2434 = vmatprep.subr.mxu0 0.0
    %2435 = vmatpush1.msra.mxu0 0.0
    %2436 = vmatprep.subr.mxu0 0.0
    %2437 = vmatpush1.msra.mxu0 0.0
    %2438 = vmatprep.subr.mxu0 0.0
    %2439 = vmatpush1.msra.mxu0 0.0
    %2440 = vmatprep.subr.mxu0 0.0
    %2441 = vmatpush1.msra.mxu0 0.0
    %2442 = vmatprep.subr.mxu0 0.0
    %2443 = vmatpush1.msra.mxu0 0.0
    %2444 = vmatprep.subr.mxu0 0.0
    %2445 = vmatpush1.msra.mxu0 0.0
    %2446 = vmatprep.subr.mxu0 0.0
    %2447 = vmatpush1.msra.mxu0 0.0
    %2448 = vmatprep.subr.mxu0 0.0
    %2449 = vmatpush1.msra.mxu0 0.0
    %2450 = vmatprep.subr.mxu0 0.0
    %2451 = vmatpush1.msra.mxu0 0.0
    %2452 = vmatprep.subr.mxu0 0.0
    %2453 = vmatpush1.msra.mxu0 0.0
    %2454 = vmatprep.subr.mxu0 0.0
    %2455 = vmatpush1.msra.mxu0 0.0
    %2456 = vmatprep.subr.mxu0 0.0
    %2457 = vmatpush1.msra.mxu0 0.0
    %2458 = vmatprep.subr.mxu0 0.0
    %2459 = vmatpush1.msra.mxu0 0.0
    %2460 = vmatprep.subr.mxu0 0.0
    %2461 = vmatpush1.msra.mxu0 0.0
    %2462 = vmatprep.mubr.f32.mxu0 0.0
    %2463 = vmatmul.mubr.f32.gmra.mrb[0].mxu0 %v2325
    %v2464 = vpop.f32.mrb[0].mxu0
    %v2465 = vadd.f32 0.0, %v2464
    %v2466 = vpop.f32.mrb[0].mxu0
    %v2467 = vadd.f32 0.0, %v2466
    %2468 = vdwg.mxu0
    %v2469 = vadd.f32 %v471, %v2394
    %v2470 = vadd.f32 %v473, %v2396
    %v2471 = vadd.f32 %v584, %v2465
    %v2472 = vadd.f32 %v586, %v2467
    %v2473 = vxor.u32 %v2469, 2147483648
    %v2474 = vxor.u32 %v2470, 2147483648
    %v2475 = vxor.u32 %v2471, 2147483648
    %v2476 = vmul.f32 %v2473, 1.442695
    %v2477 = vpow.pop %v2476
    %v2478 = vmul.f32 %v2474, 1.442695
    %v2479 = vpow.pop %v2478
    %v2480 = vmul.f32 %v2475, 1.442695
    %v2481 = vpow.pop %v2480
    %v2482 = vadd.f32 %v2477, 1.0
    %v2483 = vadd.f32 %v2479, 1.0
    %v2484 = vadd.f32 %v2481, 1.0
    %v2485 = vrcp.pop %v2482
    %v2486 = vmul.f32 1.0, %v2485
    %v2487 = vrcp.pop %v2483
    %v2488 = vmul.f32 1.0, %v2487
    %v2489 = vrcp.pop %v2484
    %v2490 = vmul.f32 1.0, %v2489
    %v2491 = vtanh.pop %v2472
    %v2492 = vmul.f32 %v2488, %v2326
    %v2493 = vmul.f32 %v2486, %v2491
    %v2494 = vadd.f32 %v2492, %v2493
    %v2495 = vtanh.pop %v2494
    %v2496 = vmul.f32 %v2490, %v2495
    %2497 = vst [vmem:[#allocation2] sm:$0xff] %v2496
    %2498 = vst [vmem:[#allocation3] sm:$0xff] %v2494
    %v2499 = vld [vmem:[#allocation2] sm:$0xff]
    %v2500 = vld [vmem:[#allocation2 + $0x8] sm:$0xff]
    %v2501 = vld [vmem:[#allocation3 + $0x8] sm:$0xff]
    %2502 = vmatprep.subr.mxu0 %v168
    %2503 = vmatpush1.msra.mxu0 %v167
    %2504 = vmatprep.subr.mxu0 %v172
    %2505 = vmatpush1.msra.mxu0 %v171
    %2506 = vmatprep.subr.mxu0 %v176
    %2507 = vmatpush1.msra.mxu0 %v175
    %2508 = vmatprep.subr.mxu0 %v180
    %2509 = vmatpush1.msra.mxu0 %v179
    %2510 = vmatprep.subr.mxu0 %v184
    %2511 = vmatpush1.msra.mxu0 %v183
    %2512 = vmatprep.subr.mxu0 %v188
    %2513 = vmatpush1.msra.mxu0 %v187
    %2514 = vmatprep.subr.mxu0 %v192
    %2515 = vmatpush1.msra.mxu0 %v191
    %2516 = vmatprep.subr.mxu0 %v196
    %2517 = vmatpush1.msra.mxu0 %v195
    %2518 = vmatprep.subr.mxu0 %v200
    %2519 = vmatpush1.msra.mxu0 %v199
    %2520 = vmatprep.subr.mxu0 %v204
    %2521 = vmatpush1.msra.mxu0 %v203
    %2522 = vmatprep.subr.mxu0 %v208
    %2523 = vmatpush1.msra.mxu0 %v207
    %2524 = vmatprep.subr.mxu0 %v212
    %2525 = vmatpush1.msra.mxu0 %v211
    %2526 = vmatprep.subr.mxu0 %v216
    %2527 = vmatpush1.msra.mxu0 %v215
    %2528 = vmatprep.subr.mxu0 %v220
    %2529 = vmatpush1.msra.mxu0 %v219
    %2530 = vmatprep.subr.mxu0 %v224
    %2531 = vmatpush1.msra.mxu0 %v223
    %2532 = vmatprep.subr.mxu0 %v228
    %2533 = vmatpush1.msra.mxu0 %v227
    %2534 = vmatprep.subr.mxu0 %v232
    %2535 = vmatpush1.msra.mxu0 %v231
    %2536 = vmatprep.subr.mxu0 %v236
    %2537 = vmatpush1.msra.mxu0 %v235
    %2538 = vmatprep.subr.mxu0 %v240
    %2539 = vmatpush1.msra.mxu0 %v239
    %2540 = vmatprep.subr.mxu0 %v244
    %2541 = vmatpush1.msra.mxu0 %v243
    %2542 = vmatprep.subr.mxu0 %v248
    %2543 = vmatpush1.msra.mxu0 %v247
    %2544 = vmatprep.subr.mxu0 %v252
    %2545 = vmatpush1.msra.mxu0 %v251
    %2546 = vmatprep.subr.mxu0 %v256
    %2547 = vmatpush1.msra.mxu0 %v255
    %2548 = vmatprep.subr.mxu0 %v260
    %2549 = vmatpush1.msra.mxu0 %v259
    %2550 = vmatprep.subr.mxu0 %v264
    %2551 = vmatpush1.msra.mxu0 %v263
    %2552 = vmatprep.subr.mxu0 %v268
    %2553 = vmatpush1.msra.mxu0 %v267
    %2554 = vmatprep.subr.mxu0 %v272
    %2555 = vmatpush1.msra.mxu0 %v271
    %2556 = vmatprep.subr.mxu0 %v276
    %2557 = vmatpush1.msra.mxu0 %v275
    %2558 = vmatprep.subr.mxu0 %v280
    %2559 = vmatpush1.msra.mxu0 %v279
    %2560 = vmatprep.subr.mxu0 %v284
    %2561 = vmatpush1.msra.mxu0 %v283
    %2562 = vmatprep.subr.mxu0 %v288
    %2563 = vmatpush1.msra.mxu0 %v287
    %2564 = vmatprep.subr.mxu0 %v292
    %2565 = vmatpush1.msra.mxu0 %v291
    %2566 = vmatprep.mubr.f32.mxu0 %v2500
    %2567 = vmatmul.mubr.f32.gmra.mrb[0].mxu0 %v2499
    %v2568 = vpop.f32.mrb[0].mxu0
    %v2569 = vadd.f32 %v301, %v2568
    %v2570 = vpop.f32.mrb[0].mxu0
    %v2571 = vadd.f32 %v305, %v2570
    %2572 = vdwg.mxu0
    %2573 = vmatprep.subr.mxu0 %v170
    %2574 = vmatpush1.msra.mxu0 %v169
    %2575 = vmatprep.subr.mxu0 %v174
    %2576 = vmatpush1.msra.mxu0 %v173
    %2577 = vmatprep.subr.mxu0 %v178
    %2578 = vmatpush1.msra.mxu0 %v177
    %2579 = vmatprep.subr.mxu0 %v182
    %2580 = vmatpush1.msra.mxu0 %v181
    %2581 = vmatprep.subr.mxu0 %v186
    %2582 = vmatpush1.msra.mxu0 %v185
    %2583 = vmatprep.subr.mxu0 %v190
    %2584 = vmatpush1.msra.mxu0 %v189
    %2585 = vmatprep.subr.mxu0 %v194
    %2586 = vmatpush1.msra.mxu0 %v193
    %2587 = vmatprep.subr.mxu0 %v198
    %2588 = vmatpush1.msra.mxu0 %v197
    %2589 = vmatprep.subr.mxu0 %v202
    %2590 = vmatpush1.msra.mxu0 %v201
    %2591 = vmatprep.subr.mxu0 %v206
    %2592 = vmatpush1.msra.mxu0 %v205
    %2593 = vmatprep.subr.mxu0 %v210
    %2594 = vmatpush1.msra.mxu0 %v209
    %2595 = vmatprep.subr.mxu0 %v214
    %2596 = vmatpush1.msra.mxu0 %v213
    %2597 = vmatprep.subr.mxu0 %v218
    %2598 = vmatpush1.msra.mxu0 %v217
    %2599 = vmatprep.subr.mxu0 %v222
    %2600 = vmatpush1.msra.mxu0 %v221
    %2601 = vmatprep.subr.mxu0 %v226
    %2602 = vmatpush1.msra.mxu0 %v225
    %2603 = vmatprep.subr.mxu0 %v230
    %2604 = vmatpush1.msra.mxu0 %v229
    %2605 = vmatprep.subr.mxu0 %v234
    %2606 = vmatpush1.msra.mxu0 %v233
    %2607 = vmatprep.subr.mxu0 %v238
    %2608 = vmatpush1.msra.mxu0 %v237
    %2609 = vmatprep.subr.mxu0 %v242
    %2610 = vmatpush1.msra.mxu0 %v241
    %2611 = vmatprep.subr.mxu0 %v246
    %2612 = vmatpush1.msra.mxu0 %v245
    %2613 = vmatprep.subr.mxu0 %v250
    %2614 = vmatpush1.msra.mxu0 %v249
    %2615 = vmatprep.subr.mxu0 %v254
    %2616 = vmatpush1.msra.mxu0 %v253
    %2617 = vmatprep.subr.mxu0 %v258
    %2618 = vmatpush1.msra.mxu0 %v257
    %2619 = vmatprep.subr.mxu0 %v262
    %2620 = vmatpush1.msra.mxu0 %v261
    %2621 = vmatprep.subr.mxu0 %v266
    %2622 = vmatpush1.msra.mxu0 %v265
    %2623 = vmatprep.subr.mxu0 %v270
    %2624 = vmatpush1.msra.mxu0 %v269
    %2625 = vmatprep.subr.mxu0 %v274
    %2626 = vmatpush1.msra.mxu0 %v273
    %2627 = vmatprep.subr.mxu0 %v278
    %2628 = vmatpush1.msra.mxu0 %v277
    %2629 = vmatprep.subr.mxu0 %v282
    %2630 = vmatpush1.msra.mxu0 %v281
    %2631 = vmatprep.subr.mxu0 %v286
    %2632 = vmatpush1.msra.mxu0 %v285
    %2633 = vmatprep.subr.mxu0 %v290
    %2634 = vmatpush1.msra.mxu0 %v289
    %2635 = vmatprep.subr.mxu0 %v294
    %2636 = vmatpush1.msra.mxu0 %v293
    %2637 = vmatprep.mubr.f32.mxu0 %v2500
    %2638 = vmatmul.mubr.f32.gmra.mrb[0].mxu0 %v2499
    %v2639 = vpop.f32.mrb[0].mxu0
    %v2640 = vadd.f32 %v309, %v2639
    %v2641 = vpop.f32.mrb[0].mxu0
    %v2642 = vadd.f32 %v313, %v2641
    %2643 = vdwg.mxu0
    %v2644 = vxor.u32 %v2569, 2147483648
    %v2645 = vxor.u32 %v2571, 2147483648
    %v2646 = vxor.u32 %v2640, 2147483648
    %v2647 = vmul.f32 %v2644, 1.442695
    %v2648 = vpow.pop %v2647
    %v2649 = vmul.f32 %v2645, 1.442695
    %v2650 = vpow.pop %v2649
    %v2651 = vmul.f32 %v2646, 1.442695
    %v2652 = vpow.pop %v2651
    %v2653 = vadd.f32 %v2648, 1.0
    %v2654 = vadd.f32 %v2650, 1.0
    %v2655 = vadd.f32 %v2652, 1.0
    %v2656 = vrcp.pop %v2653
    %v2657 = vmul.f32 1.0, %v2656
    %v2658 = vrcp.pop %v2654
    %v2659 = vmul.f32 1.0, %v2658
    %v2660 = vrcp.pop %v2655
    %v2661 = vmul.f32 1.0, %v2660
    %v2662 = vtanh.pop %v2642
    %v2663 = vmul.f32 %v2659, %v2501
    %v2664 = vmul.f32 %v2657, %v2662
    %v2665 = vadd.f32 %v2663, %v2664
    %v2666 = vtanh.pop %v2665
    %v2667 = vmul.f32 %v2661, %v2666
    %2668 = vst [vmem:[#allocation2 + $0x8] sm:$0xff] %v2667
    %2669 = vst [vmem:[#allocation3 + $0x8] sm:$0xff] %v2665
    %v2670 = vld [vmem:[#allocation2] sm:$0xff]
    %v2671 = vld [vmem:[#allocation3] sm:$0xff]
    %2672 = vmatprep.subr.mxu0 %v104
    %2673 = vmatpush1.msra.mxu0 %v103
    %2674 = vmatprep.subr.mxu0 %v108
    %2675 = vmatpush1.msra.mxu0 %v107
    %2676 = vmatprep.subr.mxu0 %v112
    %2677 = vmatpush1.msra.mxu0 %v111
    %2678 = vmatprep.subr.mxu0 %v116
    %2679 = vmatpush1.msra.mxu0 %v115
    %2680 = vmatprep.subr.mxu0 %v120
    %2681 = vmatpush1.msra.mxu0 %v119
    %2682 = vmatprep.subr.mxu0 %v124
    %2683 = vmatpush1.msra.mxu0 %v123
    %2684 = vmatprep.subr.mxu0 %v128
    %2685 = vmatpush1.msra.mxu0 %v127
    %2686 = vmatprep.subr.mxu0 %v132
    %2687 = vmatpush1.msra.mxu0 %v131
    %2688 = vmatprep.subr.mxu0 %v136
    %2689 = vmatpush1.msra.mxu0 %v135
    %2690 = vmatprep.subr.mxu0 %v140
    %2691 = vmatpush1.msra.mxu0 %v139
    %2692 = vmatprep.subr.mxu0 %v144
    %2693 = vmatpush1.msra.mxu0 %v143
    %2694 = vmatprep.subr.mxu0 %v148
    %2695 = vmatpush1.msra.mxu0 %v147
    %2696 = vmatprep.subr.mxu0 %v152
    %2697 = vmatpush1.msra.mxu0 %v151
    %2698 = vmatprep.subr.mxu0 %v156
    %2699 = vmatpush1.msra.mxu0 %v155
    %2700 = vmatprep.subr.mxu0 %v160
    %2701 = vmatpush1.msra.mxu0 %v159
    %2702 = vmatprep.subr.mxu0 %v164
    %2703 = vmatpush1.msra.mxu0 %v163
    %2704 = vmatprep.subr.mxu0 0.0
    %2705 = vmatpush1.msra.mxu0 0.0
    %2706 = vmatprep.subr.mxu0 0.0
    %2707 = vmatpush1.msra.mxu0 0.0
    %2708 = vmatprep.subr.mxu0 0.0
    %2709 = vmatpush1.msra.mxu0 0.0
    %2710 = vmatprep.subr.mxu0 0.0
    %2711 = vmatpush1.msra.mxu0 0.0
    %2712 = vmatprep.subr.mxu0 0.0
    %2713 = vmatpush1.msra.mxu0 0.0
    %2714 = vmatprep.subr.mxu0 0.0
    %2715 = vmatpush1.msra.mxu0 0.0
    %2716 = vmatprep.subr.mxu0 0.0
    %2717 = vmatpush1.msra.mxu0 0.0
    %2718 = vmatprep.subr.mxu0 0.0
    %2719 = vmatpush1.msra.mxu0 0.0
    %2720 = vmatprep.subr.mxu0 0.0
    %2721 = vmatpush1.msra.mxu0 0.0
    %2722 = vmatprep.subr.mxu0 0.0
    %2723 = vmatpush1.msra.mxu0 0.0
    %2724 = vmatprep.subr.mxu0 0.0
    %2725 = vmatpush1.msra.mxu0 0.0
    %2726 = vmatprep.subr.mxu0 0.0
    %2727 = vmatpush1.msra.mxu0 0.0
    %2728 = vmatprep.subr.mxu0 0.0
    %2729 = vmatpush1.msra.mxu0 0.0
    %2730 = vmatprep.subr.mxu0 0.0
    %2731 = vmatpush1.msra.mxu0 0.0
    %2732 = vmatprep.subr.mxu0 0.0
    %2733 = vmatpush1.msra.mxu0 0.0
    %2734 = vmatprep.subr.mxu0 0.0
    %2735 = vmatpush1.msra.mxu0 0.0
    %2736 = vmatprep.mubr.f32.mxu0 0.0
    %2737 = vmatmul.mubr.f32.gmra.mrb[0].mxu0 %v2670
    %v2738 = vpop.f32.mrb[0].mxu0
    %v2739 = vadd.f32 0.0, %v2738
    %v2740 = vpop.f32.mrb[0].mxu0
    %v2741 = vadd.f32 0.0, %v2740
    %2742 = vdwg.mxu0
    %2743 = vmatprep.subr.mxu0 %v106
    %2744 = vmatpush1.msra.mxu0 %v105
    %2745 = vmatprep.subr.mxu0 %v110
    %2746 = vmatpush1.msra.mxu0 %v109
    %2747 = vmatprep.subr.mxu0 %v114
    %2748 = vmatpush1.msra.mxu0 %v113
    %2749 = vmatprep.subr.mxu0 %v118
    %2750 = vmatpush1.msra.mxu0 %v117
    %2751 = vmatprep.subr.mxu0 %v122
    %2752 = vmatpush1.msra.mxu0 %v121
    %2753 = vmatprep.subr.mxu0 %v126
    %2754 = vmatpush1.msra.mxu0 %v125
    %2755 = vmatprep.subr.mxu0 %v130
    %2756 = vmatpush1.msra.mxu0 %v129
    %2757 = vmatprep.subr.mxu0 %v134
    %2758 = vmatpush1.msra.mxu0 %v133
    %2759 = vmatprep.subr.mxu0 %v138
    %2760 = vmatpush1.msra.mxu0 %v137
    %2761 = vmatprep.subr.mxu0 %v142
    %2762 = vmatpush1.msra.mxu0 %v141
    %2763 = vmatprep.subr.mxu0 %v146
    %2764 = vmatpush1.msra.mxu0 %v145
    %2765 = vmatprep.subr.mxu0 %v150
    %2766 = vmatpush1.msra.mxu0 %v149
    %2767 = vmatprep.subr.mxu0 %v154
    %2768 = vmatpush1.msra.mxu0 %v153
    %2769 = vmatprep.subr.mxu0 %v158
    %2770 = vmatpush1.msra.mxu0 %v157
    %2771 = vmatprep.subr.mxu0 %v162
    %2772 = vmatpush1.msra.mxu0 %v161
    %2773 = vmatprep.subr.mxu0 %v166
    %2774 = vmatpush1.msra.mxu0 %v165
    %2775 = vmatprep.subr.mxu0 0.0
    %2776 = vmatpush1.msra.mxu0 0.0
    %2777 = vmatprep.subr.mxu0 0.0
    %2778 = vmatpush1.msra.mxu0 0.0
    %2779 = vmatprep.subr.mxu0 0.0
    %2780 = vmatpush1.msra.mxu0 0.0
    %2781 = vmatprep.subr.mxu0 0.0
    %2782 = vmatpush1.msra.mxu0 0.0
    %2783 = vmatprep.subr.mxu0 0.0
    %2784 = vmatpush1.msra.mxu0 0.0
    %2785 = vmatprep.subr.mxu0 0.0
    %2786 = vmatpush1.msra.mxu0 0.0
    %2787 = vmatprep.subr.mxu0 0.0
    %2788 = vmatpush1.msra.mxu0 0.0
    %2789 = vmatprep.subr.mxu0 0.0
    %2790 = vmatpush1.msra.mxu0 0.0
    %2791 = vmatprep.subr.mxu0 0.0
    %2792 = vmatpush1.msra.mxu0 0.0
    %2793 = vmatprep.subr.mxu0 0.0
    %2794 = vmatpush1.msra.mxu0 0.0
    %2795 = vmatprep.subr.mxu0 0.0
    %2796 = vmatpush1.msra.mxu0 0.0
    %2797 = vmatprep.subr.mxu0 0.0
    %2798 = vmatpush1.msra.mxu0 0.0
    %2799 = vmatprep.subr.mxu0 0.0
    %2800 = vmatpush1.msra.mxu0 0.0
    %2801 = vmatprep.subr.mxu0 0.0
    %2802 = vmatpush1.msra.mxu0 0.0
    %2803 = vmatprep.subr.mxu0 0.0
    %2804 = vmatpush1.msra.mxu0 0.0
    %2805 = vmatprep.subr.mxu0 0.0
    %2806 = vmatpush1.msra.mxu0 0.0
    %2807 = vmatprep.mubr.f32.mxu0 0.0
    %2808 = vmatmul.mubr.f32.gmra.mrb[0].mxu0 %v2670
    %v2809 = vpop.f32.mrb[0].mxu0
    %v2810 = vadd.f32 0.0, %v2809
    %v2811 = vpop.f32.mrb[0].mxu0
    %v2812 = vadd.f32 0.0, %v2811
    %2813 = vdwg.mxu0
    %v2814 = vadd.f32 %v477, %v2739
    %v2815 = vadd.f32 %v479, %v2741
    %v2816 = vadd.f32 %v590, %v2810
    %v2817 = vadd.f32 %v592, %v2812
    %v2818 = vxor.u32 %v2814, 2147483648
    %v2819 = vxor.u32 %v2815, 2147483648
    %v2820 = vxor.u32 %v2816, 2147483648
    %v2821 = vmul.f32 %v2818, 1.442695
    %v2822 = vpow.pop %v2821
    %v2823 = vmul.f32 %v2819, 1.442695
    %v2824 = vpow.pop %v2823
    %v2825 = vmul.f32 %v2820, 1.442695
    %v2826 = vpow.pop %v2825
    %v2827 = vadd.f32 %v2822, 1.0
    %v2828 = vadd.f32 %v2824, 1.0
    %v2829 = vadd.f32 %v2826, 1.0
    %v2830 = vrcp.pop %v2827
    %v2831 = vmul.f32 1.0, %v2830
    %v2832 = vrcp.pop %v2828
    %v2833 = vmul.f32 1.0, %v2832
    %v2834 = vrcp.pop %v2829
    %v2835 = vmul.f32 1.0, %v2834
    %v2836 = vtanh.pop %v2817
    %v2837 = vmul.f32 %v2833, %v2671
    %v2838 = vmul.f32 %v2831, %v2836
    %v2839 = vadd.f32 %v2837, %v2838
    %v2840 = vtanh.pop %v2839
    %v2841 = vmul.f32 %v2835, %v2840
    %2842 = vst [vmem:[#allocation2] sm:$0xff] %v2841
    %2843 = vst [vmem:[#allocation3] sm:$0xff] %v2839
    %v2844 = vld [vmem:[#allocation2] sm:$0xff]
    %v2845 = vld [vmem:[#allocation2 + $0x8] sm:$0xff]
    %v2846 = vld [vmem:[#allocation3 + $0x8] sm:$0xff]
    %2847 = vmatprep.subr.mxu0 %v168
    %2848 = vmatpush1.msra.mxu0 %v167
    %2849 = vmatprep.subr.mxu0 %v172
    %2850 = vmatpush1.msra.mxu0 %v171
    %2851 = vmatprep.subr.mxu0 %v176
    %2852 = vmatpush1.msra.mxu0 %v175
    %2853 = vmatprep.subr.mxu0 %v180
    %2854 = vmatpush1.msra.mxu0 %v179
    %2855 = vmatprep.subr.mxu0 %v184
    %2856 = vmatpush1.msra.mxu0 %v183
    %2857 = vmatprep.subr.mxu0 %v188
    %2858 = vmatpush1.msra.mxu0 %v187
    %2859 = vmatprep.subr.mxu0 %v192
    %2860 = vmatpush1.msra.mxu0 %v191
    %2861 = vmatprep.subr.mxu0 %v196
    %2862 = vmatpush1.msra.mxu0 %v195
    %2863 = vmatprep.subr.mxu0 %v200
    %2864 = vmatpush1.msra.mxu0 %v199
    %2865 = vmatprep.subr.mxu0 %v204
    %2866 = vmatpush1.msra.mxu0 %v203
    %2867 = vmatprep.subr.mxu0 %v208
    %2868 = vmatpush1.msra.mxu0 %v207
    %2869 = vmatprep.subr.mxu0 %v212
    %2870 = vmatpush1.msra.mxu0 %v211
    %2871 = vmatprep.subr.mxu0 %v216
    %2872 = vmatpush1.msra.mxu0 %v215
    %2873 = vmatprep.subr.mxu0 %v220
    %2874 = vmatpush1.msra.mxu0 %v219
    %2875 = vmatprep.subr.mxu0 %v224
    %2876 = vmatpush1.msra.mxu0 %v223
    %2877 = vmatprep.subr.mxu0 %v228
    %2878 = vmatpush1.msra.mxu0 %v227
    %2879 = vmatprep.subr.mxu0 %v232
    %2880 = vmatpush1.msra.mxu0 %v231
    %2881 = vmatprep.subr.mxu0 %v236
    %2882 = vmatpush1.msra.mxu0 %v235
    %2883 = vmatprep.subr.mxu0 %v240
    %2884 = vmatpush1.msra.mxu0 %v239
    %2885 = vmatprep.subr.mxu0 %v244
    %2886 = vmatpush1.msra.mxu0 %v243
    %2887 = vmatprep.subr.mxu0 %v248
    %2888 = vmatpush1.msra.mxu0 %v247
    %2889 = vmatprep.subr.mxu0 %v252
    %2890 = vmatpush1.msra.mxu0 %v251
    %2891 = vmatprep.subr.mxu0 %v256
    %2892 = vmatpush1.msra.mxu0 %v255
    %2893 = vmatprep.subr.mxu0 %v260
    %2894 = vmatpush1.msra.mxu0 %v259
    %2895 = vmatprep.subr.mxu0 %v264
    %2896 = vmatpush1.msra.mxu0 %v263
    %2897 = vmatprep.subr.mxu0 %v268
    %2898 = vmatpush1.msra.mxu0 %v267
    %2899 = vmatprep.subr.mxu0 %v272
    %2900 = vmatpush1.msra.mxu0 %v271
    %2901 = vmatprep.subr.mxu0 %v276
    %2902 = vmatpush1.msra.mxu0 %v275
    %2903 = vmatprep.subr.mxu0 %v280
    %2904 = vmatpush1.msra.mxu0 %v279
    %2905 = vmatprep.subr.mxu0 %v284
    %2906 = vmatpush1.msra.mxu0 %v283
    %2907 = vmatprep.subr.mxu0 %v288
    %2908 = vmatpush1.msra.mxu0 %v287
    %2909 = vmatprep.subr.mxu0 %v292
    %2910 = vmatpush1.msra.mxu0 %v291
    %2911 = vmatprep.mubr.f32.mxu0 %v2845
    %2912 = vmatmul.mubr.f32.gmra.mrb[0].mxu0 %v2844
    %v2913 = vpop.f32.mrb[0].mxu0
    %v2914 = vadd.f32 %v301, %v2913
    %v2915 = vpop.f32.mrb[0].mxu0
    %v2916 = vadd.f32 %v305, %v2915
    %2917 = vdwg.mxu0
    %2918 = vmatprep.subr.mxu0 %v170
    %2919 = vmatpush1.msra.mxu0 %v169
    %2920 = vmatprep.subr.mxu0 %v174
    %2921 = vmatpush1.msra.mxu0 %v173
    %2922 = vmatprep.subr.mxu0 %v178
    %2923 = vmatpush1.msra.mxu0 %v177
    %2924 = vmatprep.subr.mxu0 %v182
    %2925 = vmatpush1.msra.mxu0 %v181
    %2926 = vmatprep.subr.mxu0 %v186
    %2927 = vmatpush1.msra.mxu0 %v185
    %2928 = vmatprep.subr.mxu0 %v190
    %2929 = vmatpush1.msra.mxu0 %v189
    %2930 = vmatprep.subr.mxu0 %v194
    %2931 = vmatpush1.msra.mxu0 %v193
    %2932 = vmatprep.subr.mxu0 %v198
    %2933 = vmatpush1.msra.mxu0 %v197
    %2934 = vmatprep.subr.mxu0 %v202
    %2935 = vmatpush1.msra.mxu0 %v201
    %2936 = vmatprep.subr.mxu0 %v206
    %2937 = vmatpush1.msra.mxu0 %v205
    %2938 = vmatprep.subr.mxu0 %v210
    %2939 = vmatpush1.msra.mxu0 %v209
    %2940 = vmatprep.subr.mxu0 %v214
    %2941 = vmatpush1.msra.mxu0 %v213
    %2942 = vmatprep.subr.mxu0 %v218
    %2943 = vmatpush1.msra.mxu0 %v217
    %2944 = vmatprep.subr.mxu0 %v222
    %2945 = vmatpush1.msra.mxu0 %v221
    %2946 = vmatprep.subr.mxu0 %v226
    %2947 = vmatpush1.msra.mxu0 %v225
    %2948 = vmatprep.subr.mxu0 %v230
    %2949 = vmatpush1.msra.mxu0 %v229
    %2950 = vmatprep.subr.mxu0 %v234
    %2951 = vmatpush1.msra.mxu0 %v233
    %2952 = vmatprep.subr.mxu0 %v238
    %2953 = vmatpush1.msra.mxu0 %v237
    %2954 = vmatprep.subr.mxu0 %v242
    %2955 = vmatpush1.msra.mxu0 %v241
    %2956 = vmatprep.subr.mxu0 %v246
    %2957 = vmatpush1.msra.mxu0 %v245
    %2958 = vmatprep.subr.mxu0 %v250
    %2959 = vmatpush1.msra.mxu0 %v249
    %2960 = vmatprep.subr.mxu0 %v254
    %2961 = vmatpush1.msra.mxu0 %v253
    %2962 = vmatprep.subr.mxu0 %v258
    %2963 = vmatpush1.msra.mxu0 %v257
    %2964 = vmatprep.subr.mxu0 %v262
    %2965 = vmatpush1.msra.mxu0 %v261
    %2966 = vmatprep.subr.mxu0 %v266
    %2967 = vmatpush1.msra.mxu0 %v265
    %2968 = vmatprep.subr.mxu0 %v270
    %2969 = vmatpush1.msra.mxu0 %v269
    %2970 = vmatprep.subr.mxu0 %v274
    %2971 = vmatpush1.msra.mxu0 %v273
    %2972 = vmatprep.subr.mxu0 %v278
    %2973 = vmatpush1.msra.mxu0 %v277
    %2974 = vmatprep.subr.mxu0 %v282
    %2975 = vmatpush1.msra.mxu0 %v281
    %2976 = vmatprep.subr.mxu0 %v286
    %2977 = vmatpush1.msra.mxu0 %v285
    %2978 = vmatprep.subr.mxu0 %v290
    %2979 = vmatpush1.msra.mxu0 %v289
    %2980 = vmatprep.subr.mxu0 %v294
    %2981 = vmatpush1.msra.mxu0 %v293
    %2982 = vmatprep.mubr.f32.mxu0 %v2845
    %2983 = vmatmul.mubr.f32.gmra.mrb[0].mxu0 %v2844
    %v2984 = vpop.f32.mrb[0].mxu0
    %v2985 = vadd.f32 %v309, %v2984
    %v2986 = vpop.f32.mrb[0].mxu0
    %v2987 = vadd.f32 %v313, %v2986
    %2988 = vdwg.mxu0
    %v2989 = vxor.u32 %v2914, 2147483648
    %v2990 = vxor.u32 %v2916, 2147483648
    %v2991 = vxor.u32 %v2985, 2147483648
    %v2992 = vmul.f32 %v2989, 1.442695
    %v2993 = vpow.pop %v2992
    %v2994 = vmul.f32 %v2990, 1.442695
    %v2995 = vpow.pop %v2994
    %v2996 = vmul.f32 %v2991, 1.442695
    %v2997 = vpow.pop %v2996
    %v2998 = vadd.f32 %v2993, 1.0
    %v2999 = vadd.f32 %v2995, 1.0
    %v3000 = vadd.f32 %v2997, 1.0
    %v3001 = vrcp.pop %v2998
    %v3002 = vmul.f32 1.0, %v3001
    %v3003 = vrcp.pop %v2999
    %v3004 = vmul.f32 1.0, %v3003
    %v3005 = vrcp.pop %v3000
    %v3006 = vmul.f32 1.0, %v3005
    %v3007 = vtanh.pop %v2987
    %v3008 = vmul.f32 %v3004, %v2846
    %v3009 = vmul.f32 %v3002, %v3007
    %v3010 = vadd.f32 %v3008, %v3009
    %v3011 = vtanh.pop %v3010
    %v3012 = vmul.f32 %v3006, %v3011
    %3013 = vst [vmem:[#allocation2 + $0x8] sm:$0xff] %v3012
    %3014 = vst [vmem:[#allocation3 + $0x8] sm:$0xff] %v3010
    %v3015 = vld [vmem:[#allocation2] sm:$0xff]
    %v3016 = vld [vmem:[#allocation3] sm:$0xff]
    %3017 = vmatprep.subr.mxu0 %v104
    %3018 = vmatpush1.msra.mxu0 %v103
    %3019 = vmatprep.subr.mxu0 %v108
    %3020 = vmatpush1.msra.mxu0 %v107
    %3021 = vmatprep.subr.mxu0 %v112
    %3022 = vmatpush1.msra.mxu0 %v111
    %3023 = vmatprep.subr.mxu0 %v116
    %3024 = vmatpush1.msra.mxu0 %v115
    %3025 = vmatprep.subr.mxu0 %v120
    %3026 = vmatpush1.msra.mxu0 %v119
    %3027 = vmatprep.subr.mxu0 %v124
    %3028 = vmatpush1.msra.mxu0 %v123
    %3029 = vmatprep.subr.mxu0 %v128
    %3030 = vmatpush1.msra.mxu0 %v127
    %3031 = vmatprep.subr.mxu0 %v132
    %3032 = vmatpush1.msra.mxu0 %v131
    %3033 = vmatprep.subr.mxu0 %v136
    %3034 = vmatpush1.msra.mxu0 %v135
    %3035 = vmatprep.subr.mxu0 %v140
    %3036 = vmatpush1.msra.mxu0 %v139
    %3037 = vmatprep.subr.mxu0 %v144
    %3038 = vmatpush1.msra.mxu0 %v143
    %3039 = vmatprep.subr.mxu0 %v148
    %3040 = vmatpush1.msra.mxu0 %v147
    %3041 = vmatprep.subr.mxu0 %v152
    %3042 = vmatpush1.msra.mxu0 %v151
    %3043 = vmatprep.subr.mxu0 %v156
    %3044 = vmatpush1.msra.mxu0 %v155
    %3045 = vmatprep.subr.mxu0 %v160
    %3046 = vmatpush1.msra.mxu0 %v159
    %3047 = vmatprep.subr.mxu0 %v164
    %3048 = vmatpush1.msra.mxu0 %v163
    %3049 = vmatprep.subr.mxu0 0.0
    %3050 = vmatpush1.msra.mxu0 0.0
    %3051 = vmatprep.subr.mxu0 0.0
    %3052 = vmatpush1.msra.mxu0 0.0
    %3053 = vmatprep.subr.mxu0 0.0
    %3054 = vmatpush1.msra.mxu0 0.0
    %3055 = vmatprep.subr.mxu0 0.0
    %3056 = vmatpush1.msra.mxu0 0.0
    %3057 = vmatprep.subr.mxu0 0.0
    %3058 = vmatpush1.msra.mxu0 0.0
    %3059 = vmatprep.subr.mxu0 0.0
    %3060 = vmatpush1.msra.mxu0 0.0
    %3061 = vmatprep.subr.mxu0 0.0
    %3062 = vmatpush1.msra.mxu0 0.0
    %3063 = vmatprep.subr.mxu0 0.0
    %3064 = vmatpush1.msra.mxu0 0.0
    %3065 = vmatprep.subr.mxu0 0.0
    %3066 = vmatpush1.msra.mxu0 0.0
    %3067 = vmatprep.subr.mxu0 0.0
    %3068 = vmatpush1.msra.mxu0 0.0
    %3069 = vmatprep.subr.mxu0 0.0
    %3070 = vmatpush1.msra.mxu0 0.0
    %3071 = vmatprep.subr.mxu0 0.0
    %3072 = vmatpush1.msra.mxu0 0.0
    %3073 = vmatprep.subr.mxu0 0.0
    %3074 = vmatpush1.msra.mxu0 0.0
    %3075 = vmatprep.subr.mxu0 0.0
    %3076 = vmatpush1.msra.mxu0 0.0
    %3077 = vmatprep.subr.mxu0 0.0
    %3078 = vmatpush1.msra.mxu0 0.0
    %3079 = vmatprep.subr.mxu0 0.0
    %3080 = vmatpush1.msra.mxu0 0.0
    %3081 = vmatprep.mubr.f32.mxu0 0.0
    %3082 = vmatmul.mubr.f32.gmra.mrb[0].mxu0 %v3015
    %v3083 = vpop.f32.mrb[0].mxu0
    %v3084 = vadd.f32 0.0, %v3083
    %v3085 = vpop.f32.mrb[0].mxu0
    %v3086 = vadd.f32 0.0, %v3085
    %3087 = vdwg.mxu0
    %3088 = vmatprep.subr.mxu0 %v106
    %3089 = vmatpush1.msra.mxu0 %v105
    %3090 = vmatprep.subr.mxu0 %v110
    %3091 = vmatpush1.msra.mxu0 %v109
    %3092 = vmatprep.subr.mxu0 %v114
    %3093 = vmatpush1.msra.mxu0 %v113
    %3094 = vmatprep.subr.mxu0 %v118
    %3095 = vmatpush1.msra.mxu0 %v117
    %3096 = vmatprep.subr.mxu0 %v122
    %3097 = vmatpush1.msra.mxu0 %v121
    %3098 = vmatprep.subr.mxu0 %v126
    %3099 = vmatpush1.msra.mxu0 %v125
    %3100 = vmatprep.subr.mxu0 %v130
    %3101 = vmatpush1.msra.mxu0 %v129
    %3102 = vmatprep.subr.mxu0 %v134
    %3103 = vmatpush1.msra.mxu0 %v133
    %3104 = vmatprep.subr.mxu0 %v138
    %3105 = vmatpush1.msra.mxu0 %v137
    %3106 = vmatprep.subr.mxu0 %v142
    %3107 = vmatpush1.msra.mxu0 %v141
    %3108 = vmatprep.subr.mxu0 %v146
    %3109 = vmatpush1.msra.mxu0 %v145
    %3110 = vmatprep.subr.mxu0 %v150
    %3111 = vmatpush1.msra.mxu0 %v149
    %3112 = vmatprep.subr.mxu0 %v154
    %3113 = vmatpush1.msra.mxu0 %v153
    %3114 = vmatprep.subr.mxu0 %v158
    %3115 = vmatpush1.msra.mxu0 %v157
    %3116 = vmatprep.subr.mxu0 %v162
    %3117 = vmatpush1.msra.mxu0 %v161
    %3118 = vmatprep.subr.mxu0 %v166
    %3119 = vmatpush1.msra.mxu0 %v165
    %3120 = vmatprep.subr.mxu0 0.0
    %3121 = vmatpush1.msra.mxu0 0.0
    %3122 = vmatprep.subr.mxu0 0.0
    %3123 = vmatpush1.msra.mxu0 0.0
    %3124 = vmatprep.subr.mxu0 0.0
    %3125 = vmatpush1.msra.mxu0 0.0
    %3126 = vmatprep.subr.mxu0 0.0
    %3127 = vmatpush1.msra.mxu0 0.0
    %3128 = vmatprep.subr.mxu0 0.0
    %3129 = vmatpush1.msra.mxu0 0.0
    %3130 = vmatprep.subr.mxu0 0.0
    %3131 = vmatpush1.msra.mxu0 0.0
    %3132 = vmatprep.subr.mxu0 0.0
    %3133 = vmatpush1.msra.mxu0 0.0
    %3134 = vmatprep.subr.mxu0 0.0
    %3135 = vmatpush1.msra.mxu0 0.0
    %3136 = vmatprep.subr.mxu0 0.0
    %3137 = vmatpush1.msra.mxu0 0.0
    %3138 = vmatprep.subr.mxu0 0.0
    %3139 = vmatpush1.msra.mxu0 0.0
    %3140 = vmatprep.subr.mxu0 0.0
    %3141 = vmatpush1.msra.mxu0 0.0
    %3142 = vmatprep.subr.mxu0 0.0
    %3143 = vmatpush1.msra.mxu0 0.0
    %3144 = vmatprep.subr.mxu0 0.0
    %3145 = vmatpush1.msra.mxu0 0.0
    %3146 = vmatprep.subr.mxu0 0.0
    %3147 = vmatpush1.msra.mxu0 0.0
    %3148 = vmatprep.subr.mxu0 0.0
    %3149 = vmatpush1.msra.mxu0 0.0
    %3150 = vmatprep.subr.mxu0 0.0
    %3151 = vmatpush1.msra.mxu0 0.0
    %3152 = vmatprep.mubr.f32.mxu0 0.0
    %3153 = vmatmul.mubr.f32.gmra.mrb[0].mxu0 %v3015
    %v3154 = vpop.f32.mrb[0].mxu0
    %v3155 = vadd.f32 0.0, %v3154
    %v3156 = vpop.f32.mrb[0].mxu0
    %v3157 = vadd.f32 0.0, %v3156
    %3158 = vdwg.mxu0
    %v3159 = vadd.f32 %v483, %v3084
    %v3160 = vadd.f32 %v485, %v3086
    %v3161 = vadd.f32 %v596, %v3155
    %v3162 = vadd.f32 %v598, %v3157
    %v3163 = vxor.u32 %v3159, 2147483648
    %v3164 = vxor.u32 %v3160, 2147483648
    %v3165 = vxor.u32 %v3161, 2147483648
    %v3166 = vmul.f32 %v3163, 1.442695
    %v3167 = vpow.pop %v3166
    %v3168 = vmul.f32 %v3164, 1.442695
    %v3169 = vpow.pop %v3168
    %v3170 = vmul.f32 %v3165, 1.442695
    %v3171 = vpow.pop %v3170
    %v3172 = vadd.f32 %v3167, 1.0
    %v3173 = vadd.f32 %v3169, 1.0
    %v3174 = vadd.f32 %v3171, 1.0
    %v3175 = vrcp.pop %v3172
    %v3176 = vmul.f32 1.0, %v3175
    %v3177 = vrcp.pop %v3173
    %v3178 = vmul.f32 1.0, %v3177
    %v3179 = vrcp.pop %v3174
    %v3180 = vmul.f32 1.0, %v3179
    %v3181 = vtanh.pop %v3162
    %v3182 = vmul.f32 %v3178, %v3016
    %v3183 = vmul.f32 %v3176, %v3181
    %v3184 = vadd.f32 %v3182, %v3183
    %v3185 = vtanh.pop %v3184
    %v3186 = vmul.f32 %v3180, %v3185
    %3187 = vst [vmem:[#allocation2] sm:$0xff] %v3186
    %3188 = vst [vmem:[#allocation3] sm:$0xff] %v3184
    %v3189 = vld [vmem:[#allocation2] sm:$0xff]
    %v3190 = vld [vmem:[#allocation2 + $0x8] sm:$0xff]
    %v3191 = vld [vmem:[#allocation3 + $0x8] sm:$0xff]
    %3192 = vmatprep.subr.mxu0 %v168
    %3193 = vmatpush1.msra.mxu0 %v167
    %3194 = vmatprep.subr.mxu0 %v172
    %3195 = vmatpush1.msra.mxu0 %v171
    %3196 = vmatprep.subr.mxu0 %v176
    %3197 = vmatpush1.msra.mxu0 %v175
    %3198 = vmatprep.subr.mxu0 %v180
    %3199 = vmatpush1.msra.mxu0 %v179
    %3200 = vmatprep.subr.mxu0 %v184
    %3201 = vmatpush1.msra.mxu0 %v183
    %3202 = vmatprep.subr.mxu0 %v188
    %3203 = vmatpush1.msra.mxu0 %v187
    %3204 = vmatprep.subr.mxu0 %v192
    %3205 = vmatpush1.msra.mxu0 %v191
    %3206 = vmatprep.subr.mxu0 %v196
    %3207 = vmatpush1.msra.mxu0 %v195
    %3208 = vmatprep.subr.mxu0 %v200
    %3209 = vmatpush1.msra.mxu0 %v199
    %3210 = vmatprep.subr.mxu0 %v204
    %3211 = vmatpush1.msra.mxu0 %v203
    %3212 = vmatprep.subr.mxu0 %v208
    %3213 = vmatpush1.msra.mxu0 %v207
    %3214 = vmatprep.subr.mxu0 %v212
    %3215 = vmatpush1.msra.mxu0 %v211
    %3216 = vmatprep.subr.mxu0 %v216
    %3217 = vmatpush1.msra.mxu0 %v215
    %3218 = vmatprep.subr.mxu0 %v220
    %3219 = vmatpush1.msra.mxu0 %v219
    %3220 = vmatprep.subr.mxu0 %v224
    %3221 = vmatpush1.msra.mxu0 %v223
    %3222 = vmatprep.subr.mxu0 %v228
    %3223 = vmatpush1.msra.mxu0 %v227
    %3224 = vmatprep.subr.mxu0 %v232
    %3225 = vmatpush1.msra.mxu0 %v231
    %3226 = vmatprep.subr.mxu0 %v236
    %3227 = vmatpush1.msra.mxu0 %v235
    %3228 = vmatprep.subr.mxu0 %v240
    %3229 = vmatpush1.msra.mxu0 %v239
    %3230 = vmatprep.subr.mxu0 %v244
    %3231 = vmatpush1.msra.mxu0 %v243
    %3232 = vmatprep.subr.mxu0 %v248
    %3233 = vmatpush1.msra.mxu0 %v247
    %3234 = vmatprep.subr.mxu0 %v252
    %3235 = vmatpush1.msra.mxu0 %v251
    %3236 = vmatprep.subr.mxu0 %v256
    %3237 = vmatpush1.msra.mxu0 %v255
    %3238 = vmatprep.subr.mxu0 %v260
    %3239 = vmatpush1.msra.mxu0 %v259
    %3240 = vmatprep.subr.mxu0 %v264
    %3241 = vmatpush1.msra.mxu0 %v263
    %3242 = vmatprep.subr.mxu0 %v268
    %3243 = vmatpush1.msra.mxu0 %v267
    %3244 = vmatprep.subr.mxu0 %v272
    %3245 = vmatpush1.msra.mxu0 %v271
    %3246 = vmatprep.subr.mxu0 %v276
    %3247 = vmatpush1.msra.mxu0 %v275
    %3248 = vmatprep.subr.mxu0 %v280
    %3249 = vmatpush1.msra.mxu0 %v279
    %3250 = vmatprep.subr.mxu0 %v284
    %3251 = vmatpush1.msra.mxu0 %v283
    %3252 = vmatprep.subr.mxu0 %v288
    %3253 = vmatpush1.msra.mxu0 %v287
    %3254 = vmatprep.subr.mxu0 %v292
    %3255 = vmatpush1.msra.mxu0 %v291
    %3256 = vmatprep.mubr.f32.mxu0 %v3190
    %3257 = vmatmul.mubr.f32.gmra.mrb[0].mxu0 %v3189
    %v3258 = vpop.f32.mrb[0].mxu0
    %v3259 = vadd.f32 %v301, %v3258
    %v3260 = vpop.f32.mrb[0].mxu0
    %v3261 = vadd.f32 %v305, %v3260
    %3262 = vdwg.mxu0
    %3263 = vmatprep.subr.mxu0 %v170
    %3264 = vmatpush1.msra.mxu0 %v169
    %3265 = vmatprep.subr.mxu0 %v174
    %3266 = vmatpush1.msra.mxu0 %v173
    %3267 = vmatprep.subr.mxu0 %v178
    %3268 = vmatpush1.msra.mxu0 %v177
    %3269 = vmatprep.subr.mxu0 %v182
    %3270 = vmatpush1.msra.mxu0 %v181
    %3271 = vmatprep.subr.mxu0 %v186
    %3272 = vmatpush1.msra.mxu0 %v185
    %3273 = vmatprep.subr.mxu0 %v190
    %3274 = vmatpush1.msra.mxu0 %v189
    %3275 = vmatprep.subr.mxu0 %v194
    %3276 = vmatpush1.msra.mxu0 %v193
    %3277 = vmatprep.subr.mxu0 %v198
    %3278 = vmatpush1.msra.mxu0 %v197
    %3279 = vmatprep.subr.mxu0 %v202
    %3280 = vmatpush1.msra.mxu0 %v201
    %3281 = vmatprep.subr.mxu0 %v206
    %3282 = vmatpush1.msra.mxu0 %v205
    %3283 = vmatprep.subr.mxu0 %v210
    %3284 = vmatpush1.msra.mxu0 %v209
    %3285 = vmatprep.subr.mxu0 %v214
    %3286 = vmatpush1.msra.mxu0 %v213
    %3287 = vmatprep.subr.mxu0 %v218
    %3288 = vmatpush1.msra.mxu0 %v217
    %3289 = vmatprep.subr.mxu0 %v222
    %3290 = vmatpush1.msra.mxu0 %v221
    %3291 = vmatprep.subr.mxu0 %v226
    %3292 = vmatpush1.msra.mxu0 %v225
    %3293 = vmatprep.subr.mxu0 %v230
    %3294 = vmatpush1.msra.mxu0 %v229
    %3295 = vmatprep.subr.mxu0 %v234
    %3296 = vmatpush1.msra.mxu0 %v233
    %3297 = vmatprep.subr.mxu0 %v238
    %3298 = vmatpush1.msra.mxu0 %v237
    %3299 = vmatprep.subr.mxu0 %v242
    %3300 = vmatpush1.msra.mxu0 %v241
    %3301 = vmatprep.subr.mxu0 %v246
    %3302 = vmatpush1.msra.mxu0 %v245
    %3303 = vmatprep.subr.mxu0 %v250
    %3304 = vmatpush1.msra.mxu0 %v249
    %3305 = vmatprep.subr.mxu0 %v254
    %3306 = vmatpush1.msra.mxu0 %v253
    %3307 = vmatprep.subr.mxu0 %v258
    %3308 = vmatpush1.msra.mxu0 %v257
    %3309 = vmatprep.subr.mxu0 %v262
    %3310 = vmatpush1.msra.mxu0 %v261
    %3311 = vmatprep.subr.mxu0 %v266
    %3312 = vmatpush1.msra.mxu0 %v265
    %3313 = vmatprep.subr.mxu0 %v270
    %3314 = vmatpush1.msra.mxu0 %v269
    %3315 = vmatprep.subr.mxu0 %v274
    %3316 = vmatpush1.msra.mxu0 %v273
    %3317 = vmatprep.subr.mxu0 %v278
    %3318 = vmatpush1.msra.mxu0 %v277
    %3319 = vmatprep.subr.mxu0 %v282
    %3320 = vmatpush1.msra.mxu0 %v281
    %3321 = vmatprep.subr.mxu0 %v286
    %3322 = vmatpush1.msra.mxu0 %v285
    %3323 = vmatprep.subr.mxu0 %v290
    %3324 = vmatpush1.msra.mxu0 %v289
    %3325 = vmatprep.subr.mxu0 %v294
    %3326 = vmatpush1.msra.mxu0 %v293
    %3327 = vmatprep.mubr.f32.mxu0 %v3190
    %3328 = vmatmul.mubr.f32.gmra.mrb[0].mxu0 %v3189
    %v3329 = vpop.f32.mrb[0].mxu0
    %v3330 = vadd.f32 %v309, %v3329
    %v3331 = vpop.f32.mrb[0].mxu0
    %v3332 = vadd.f32 %v313, %v3331
    %3333 = vdwg.mxu0
    %v3334 = vxor.u32 %v3259, 2147483648
    %v3335 = vxor.u32 %v3261, 2147483648
    %v3336 = vxor.u32 %v3330, 2147483648
    %v3337 = vmul.f32 %v3334, 1.442695
    %v3338 = vpow.pop %v3337
    %v3339 = vmul.f32 %v3335, 1.442695
    %v3340 = vpow.pop %v3339
    %v3341 = vmul.f32 %v3336, 1.442695
    %v3342 = vpow.pop %v3341
    %v3343 = vadd.f32 %v3338, 1.0
    %v3344 = vadd.f32 %v3340, 1.0
    %v3345 = vadd.f32 %v3342, 1.0
    %v3346 = vrcp.pop %v3343
    %v3347 = vmul.f32 1.0, %v3346
    %v3348 = vrcp.pop %v3344
    %v3349 = vmul.f32 1.0, %v3348
    %v3350 = vrcp.pop %v3345
    %v3351 = vmul.f32 1.0, %v3350
    %v3352 = vtanh.pop %v3332
    %v3353 = vmul.f32 %v3349, %v3191
    %v3354 = vmul.f32 %v3347, %v3352
    %v3355 = vadd.f32 %v3353, %v3354
    %v3356 = vtanh.pop %v3355
    %v3357 = vmul.f32 %v3351, %v3356
    %3358 = vst [vmem:[#allocation2 + $0x8] sm:$0xff] %v3357
    %3359 = vst [vmem:[#allocation3 + $0x8] sm:$0xff] %v3355
    // Predicated region
    $region54: #{tpu_custom_call.1} parent=1 // pred_check
      %p3360 = pneg %p87
    $region55: #{tpu_custom_call.1} parent=1 // pred_check_branch
      %3362 = sbr.rel (%p3360) target = $region57
    $region56: #{tpu_custom_call.1} parent=1 // pred_region
      %v3363 = vld [vmem:[#allocation2 + $0x8] sm:$0xff]
      %v3364 = vld [vmem:[%s6] sm:$0x1]
      %v3366 = vlaneseq
      %v3367 = vshrl.u32 %v3366, 7
      %v3368 = vsub.s32 0, %v3367
      %v3369 = vrot.slane %v3364, %v3368
      %v3371 = vmul.f32 %v3363, %v3369
      %3372 = vadd.xlane.f32.xlu0 %v3371
      %v3373 = vpop.xlane.xlu0 %3372
      %v3374 = vld [vmem:[#allocation4] sm:$0x1]
      %v3376 = vlaneseq
      %v3377 = vshrl.u32 %v3376, 7
      %v3378 = vsub.s32 0, %v3377
      %v3379 = vrot.slane %v3374, %v3378
      %v3381 = vadd.f32 %v3373, %v3379
      %v3382 = vxor.u32 %v3381, 2147483648
      %v3383 = vmul.f32 %v3382, 1.442695
      %v3384 = vpow.pop %v3383
      %v3385 = vadd.f32 %v3384, 1.0
      %v3386 = vrcp.pop %v3385
      %v3387 = vmul.f32 1.0, %v3386
      %3389 = vset.pattern.permute.xlu0 0
      %3390 = vperm.xlu0 %3389, %v3387
      %v3391 = vpop.permute.xlu0 %3390
      %3393 = vst [vmem:[#allocation13] sm:$0xff] %v3391
    $region57: #{tpu_custom_call.1} parent=1 // pred_fallthru
      _
    // Predicated region
    $region58: #{tpu_custom_call.1} parent=1 // pred_check
      _
    $region59: #{tpu_custom_call.1} parent=1 // pred_check_branch
      %3395 = sbr.rel (0) target = $region61
    $region60: #{tpu_custom_call.1} parent=1 // pred_region
      %s3397 = ssub.s32 128, 128
      %3398 = vsyncadd [#allocation7], %s3397
      %s3400 = sshll.u32 [#allocation13], 4
      %s3401 = int_to_ptr.vmem [resolvable:$true] %s3400
      %3403 = dma.vmem_to_hbm [thread:$0]  %s3401, 128, %s8, [#allocation7]
    $region61: #{tpu_custom_call.1} parent=1 // pred_fallthru
      _
    // Predicated region
    $region62: #{tpu_custom_call.1} parent=1 // pred_check
      _
    $region63: #{tpu_custom_call.1} parent=1 // pred_check_branch
      %3405 = sbr.rel (0) target = $region65
    $region64: #{tpu_custom_call.1} parent=1 // pred_region
      %3406 = dma.done [#allocation7], 128
    $region65: #{tpu_custom_call.1} parent=1 // pred_fallthru
      _
    %3407 = vsyncpa [#allocation6], 1
    %3408 = vsyncpa [#allocation9], 1
    %3409 = vsyncpa [#allocation12], 1
    %3410 = vsyncpa [#allocation7], 1

</llo_original>
